<compile_context>
chip_gen: v6e
topology: v6e:2x2x1
jax: 0.10.0
libtpu: 0.0.40
codegen_flags: <defaults>
</compile_context>

<pallas_src>
import functools

import numpy as np
import jax
import jax.numpy as jnp
from jax import lax
from jax.experimental import pallas as pl
from jax.experimental.pallas import tpu as pltpu

KH = KW = 3
IMG = 28
# (Cin, Cout, stride) for the four convs; ReLU after conv2 and conv4.
CONV_CFG = [(1, 8, 1), (8, 8, 2), (8, 16, 1), (16, 16, 2)]
RELU_AFTER = [False, True, False, True]
FC1_OUT, FC1_PAD = 500, 512
FC2_OUT, FC2_PAD = 10, 128


def _conv_spatial():
    hs = [IMG]
    for _, _, s in CONV_CFG:
        hs.append((hs[-1] - KH) // s + 1)
    return hs  # [28, 26, 12, 10, 4]


# ----------------------------------------------------------------------------
# Raw parameters (deterministic synthetic init, PyTorch layouts/shapes).
# ----------------------------------------------------------------------------
def init_params(key):
    keys = jax.random.split(key, 12)

    def w(k, shape, fan_in):
        return jax.random.normal(k, shape, jnp.float32) * (1.0 / jnp.sqrt(fan_in))

    return {
        "conv1_w": w(keys[0], (8, 1, 3, 3), 9),      "conv1_b": w(keys[1], (8,), 9),
        "conv2_w": w(keys[2], (8, 8, 3, 3), 72),     "conv2_b": w(keys[3], (8,), 72),
        "conv3_w": w(keys[4], (16, 8, 3, 3), 72),    "conv3_b": w(keys[5], (16,), 72),
        "conv4_w": w(keys[6], (16, 16, 3, 3), 144),  "conv4_b": w(keys[7], (16,), 144),
        "fc1_w":   w(keys[8], (500, 256), 256),      "fc1_b":   w(keys[9], (500,), 256),
        "fc2_w":   w(keys[10], (10, 500), 500),      "fc2_b":   w(keys[11], (10,), 500),
    }


# ----------------------------------------------------------------------------
# One-time packing: PyTorch weights -> kernel-ready matmul operands.
# ----------------------------------------------------------------------------
def pack_params(params, batch_chunk):
    hs = _conv_spatial()
    packed = {"chunk": int(batch_chunk), "conv": []}

    for l, (cin, cout, s) in enumerate(CONV_CFG):
        H, Ho = hs[l], hs[l + 1]
        w = np.asarray(params[f"conv{l+1}_w"], np.float32)   # (cout, cin, 3, 3)
        b = np.asarray(params[f"conv{l+1}_b"], np.float32)   # (cout,)

        # Row-selection matrices: pick input row s*ho+ki per sample (block-diag).
        A = np.zeros((KH, batch_chunk * Ho, batch_chunk * H), np.float32)
        for ki in range(KH):
            for n in range(batch_chunk):
                for ho in range(Ho):
                    A[ki, n * Ho + ho, n * H + s * ho + ki] = 1.0

        # Block-banded weight matrices: G[ki, w*cin+ci, wo*cout+co] = W[co,ci,ki,w-s*wo].
        G = np.zeros((KH, H * cin, Ho * cout), np.float32)
        for ki in range(KH):
            for kj in range(KW):
                for wo in range(Ho):
                    col = s * wo + kj
                    G[ki, col * cin:(col + 1) * cin,
                      wo * cout:(wo + 1) * cout] = w[:, :, ki, kj].T

        brow = np.tile(b, Ho).reshape(1, Ho * cout)
        packed["conv"].append((jnp.asarray(A), jnp.asarray(G), jnp.asarray(brow)))

    # FC layers: absorb the NCHW .view(-1,256) flatten into fc1's weight rows,
    # split over the Hf=4 spatial rows of the final feature map; pad widths.
    Hf = hs[-1]                      # 4
    Cf = CONV_CFG[-1][1]             # 16
    S = np.zeros((Hf, batch_chunk, batch_chunk * Hf), np.float32)
    for h in range(Hf):
        for n in range(batch_chunk):
            S[h, n, n * Hf + h] = 1.0

    fc1_w = np.asarray(params["fc1_w"], np.float32)            # (500, 256)
    fc1_r = fc1_w.reshape(FC1_OUT, Cf, Hf, Hf)                 # [j, c, h, w]
    W1 = np.zeros((Hf, Hf * Cf, FC1_PAD), np.float32)          # [h, w*Cf+c, j]
    for h in range(Hf):
        W1[h, :, :FC1_OUT] = np.transpose(fc1_r[:, :, h, :], (2, 1, 0)).reshape(Hf * Cf, FC1_OUT)
    b1 = np.zeros((1, FC1_PAD), np.float32)
    b1[0, :FC1_OUT] = np.asarray(params["fc1_b"], np.float32)

    W2 = np.zeros((FC1_PAD, FC2_PAD), np.float32)
    W2[:FC1_OUT, :FC2_OUT] = np.asarray(params["fc2_w"], np.float32).T
    b2 = np.zeros((1, FC2_PAD), np.float32)
    b2[0, :FC2_OUT] = np.asarray(params["fc2_b"], np.float32)

    packed["fc"] = (jnp.asarray(S), jnp.asarray(W1), jnp.asarray(b1),
                    jnp.asarray(W2), jnp.asarray(b2))
    return packed


# ----------------------------------------------------------------------------
# Single fused Pallas kernel: whole forward for one batch chunk.
# ----------------------------------------------------------------------------
def _fused_forward_kernel(x_ref,
                          a1, g1, c1, a2, g2, c2, a3, g3, c3, a4, g4, c4,
                          sfc, w1, fb1, w2, fb2, o_ref):

    def conv(x, a_ref, g_ref, bias_ref, relu):
        acc = jnp.dot(jnp.dot(a_ref[0], x, preferred_element_type=jnp.float32),
                      g_ref[0], preferred_element_type=jnp.float32)
        for ki in range(1, a_ref.shape[0]):
            acc = acc + jnp.dot(
                jnp.dot(a_ref[ki], x, preferred_element_type=jnp.float32),
                g_ref[ki], preferred_element_type=jnp.float32)
        acc = acc + bias_ref[...]                    # (1, Wo*Cout) broadcasts over rows
        if relu:
            acc = jnp.maximum(acc, 0.0)
        return acc

    x = x_ref[...]                                   # (nb*28, 28)
    x = conv(x, a1, g1, c1, relu=False)              # (nb*26, 208)
    x = conv(x, a2, g2, c2, relu=True)               # (nb*12,  96)
    x = conv(x, a3, g3, c3, relu=False)              # (nb*10, 160)
    x = conv(x, a4, g4, c4, relu=True)               # (nb*4,   64)

    # fc1 with the PyTorch NCHW flatten absorbed into the packed W1 rows.
    h = jnp.dot(jnp.dot(sfc[0], x, preferred_element_type=jnp.float32),
                w1[0], preferred_element_type=jnp.float32)
    for hh in range(1, sfc.shape[0]):
        h = h + jnp.dot(jnp.dot(sfc[hh], x, preferred_element_type=jnp.float32),
                        w1[hh], preferred_element_type=jnp.float32)
    h = jnp.maximum(h + fb1[...], 0.0)               # (nb, 512)

    out = jnp.dot(h, w2[...], preferred_element_type=jnp.float32) + fb2[...]
    o_ref[...] = out.astype(o_ref.dtype)             # (nb, 128) lane-dense store


# ----------------------------------------------------------------------------
# Forward wrapper: mirrors Network.forward.
# ----------------------------------------------------------------------------
def network_forward(packed, x):
    B = x.shape[0]
    assert x.shape[1:] == (1, IMG, IMG), x.shape
    nb = packed["chunk"]

    Bp = ((B + nb - 1) // nb) * nb
    if Bp != B:
        x = jnp.pad(x, ((0, Bp - B), (0, 0), (0, 0), (0, 0)))
    # channel-last (n*h, w*cin) matrix layout; cin=1 so this is a pure reshape.
    x0 = x.reshape(Bp * IMG, IMG)

    conv_ops = []
    for A, G, brow in packed["conv"]:
        conv_ops += [A, G, brow]
    S, W1, b1, W2, b2 = packed["fc"]
    operands = [x0] + conv_ops + [S, W1, b1, W2, b2]

    def full_spec(a):
        return pl.BlockSpec(a.shape, lambda i, _nd=a.ndim: (0,) * _nd)

    in_specs = [pl.BlockSpec((nb * IMG, IMG), lambda i: (i, 0))]
    in_specs += [full_spec(a) for a in operands[1:]]
    out_spec = pl.BlockSpec((nb, FC2_PAD), lambda i: (i, 0))

    out = pl.pallas_call(
        _fused_forward_kernel,
        out_shape=jax.ShapeDtypeStruct((Bp, FC2_PAD), jnp.float32),
        grid=(Bp // nb,),
        in_specs=in_specs,
        out_specs=out_spec,
        compiler_params=pltpu.CompilerParams(
            dimension_semantics=("parallel",),
            vmem_limit_bytes=32 * 1024 * 1024),
    )(*operands)

    return out[:B, :FC2_OUT]


# ----------------------------------------------------------------------------
# Pure-JAX reference (PyTorch semantics) for a sanity check.
# ----------------------------------------------------------------------------
def _reference_forward(params, x):
    def conv(x, w, b, s):
        y = lax.conv_general_dilated(x, w, (s, s), "VALID",
                                     dimension_numbers=("NCHW", "OIHW", "NCHW"))
        return y + b.reshape(1, -1, 1, 1)

    x = conv(x, params["conv1_w"], params["conv1_b"], 1)
    x = jnp.maximum(conv(x, params["conv2_w"], params["conv2_b"], 2), 0.0)
    x = conv(x, params["conv3_w"], params["conv3_b"], 1)
    x = jnp.maximum(conv(x, params["conv4_w"], params["conv4_b"], 2), 0.0)
    feat = x.reshape(-1, 256)
    h = jnp.maximum(feat @ params["fc1_w"].T + params["fc1_b"], 0.0)
    return h @ params["fc2_w"].T + params["fc2_b"]


if __name__ == "__main__":
    key = jax.random.PRNGKey(0)
    pkey, xkey = jax.random.split(key)
    params = init_params(pkey)

    # Input must be 28x28 so the conv stack yields 16*4*4 = 256 features.
    x = jax.random.normal(xkey, (2, 1, 28, 28), jnp.float32)

    packed = pack_params(params, batch_chunk=min(x.shape[0], 8))
    fwd = jax.jit(functools.partial(network_forward, packed))

    out = jax.block_until_ready(fwd(x))
    assert out.shape == (2, 10), out.shape

    ref = jax.block_until_ready(jax.jit(_reference_forward)(params, x))
    np.testing.assert_allclose(np.asarray(out), np.asarray(ref), rtol=1e-1, atol=5e-2)

    print("KERNEL_OK")
</pallas_src>

<mosaic_0001>
module attributes {stable_mosaic.version = 11 : i64} {
  func.func @_fused_forward_kernel(%arg0: i32, %arg1: memref<56x28xf32, #tpu.memory_space<vmem>>, %arg2: memref<3x52x56xf32, #tpu.memory_space<vmem>>, %arg3: memref<3x28x208xf32, #tpu.memory_space<vmem>>, %arg4: memref<1x208xf32, #tpu.memory_space<vmem>>, %arg5: memref<3x24x52xf32, #tpu.memory_space<vmem>>, %arg6: memref<3x208x96xf32, #tpu.memory_space<vmem>>, %arg7: memref<1x96xf32, #tpu.memory_space<vmem>>, %arg8: memref<3x20x24xf32, #tpu.memory_space<vmem>>, %arg9: memref<3x96x160xf32, #tpu.memory_space<vmem>>, %arg10: memref<1x160xf32, #tpu.memory_space<vmem>>, %arg11: memref<3x8x20xf32, #tpu.memory_space<vmem>>, %arg12: memref<3x160x64xf32, #tpu.memory_space<vmem>>, %arg13: memref<1x64xf32, #tpu.memory_space<vmem>>, %arg14: memref<4x2x8xf32, #tpu.memory_space<vmem>>, %arg15: memref<4x64x512xf32, #tpu.memory_space<vmem>>, %arg16: memref<1x512xf32, #tpu.memory_space<vmem>>, %arg17: memref<512x128xf32, #tpu.memory_space<vmem>>, %arg18: memref<1x128xf32, #tpu.memory_space<vmem>>, %arg19: memref<2x128xf32, #tpu.memory_space<vmem>>) attributes {dimension_semantics = [#tpu.dimension_semantics<parallel>], iteration_bounds = array<i64: 1>, scalar_prefetch = 0 : i64, scratch_operands = 0 : i64, tpu.core_type = #tpu.core_type<tc>, window_params = [{transform_indices = @transform_0, window_bounds = array<i64: 56, 28>}, {pipeline_mode = #tpu.pipeline_mode<synchronous>, transform_indices = @transform_1, window_bounds = array<i64: 3, 52, 56>}, {pipeline_mode = #tpu.pipeline_mode<synchronous>, transform_indices = @transform_2, window_bounds = array<i64: 3, 28, 208>}, {pipeline_mode = #tpu.pipeline_mode<synchronous>, transform_indices = @transform_3, window_bounds = array<i64: 1, 208>}, {pipeline_mode = #tpu.pipeline_mode<synchronous>, transform_indices = @transform_4, window_bounds = array<i64: 3, 24, 52>}, {pipeline_mode = #tpu.pipeline_mode<synchronous>, transform_indices = @transform_5, window_bounds = array<i64: 3, 208, 96>}, {pipeline_mode = #tpu.pipeline_mode<synchronous>, transform_indices = @transform_6, window_bounds = array<i64: 1, 96>}, {pipeline_mode = #tpu.pipeline_mode<synchronous>, transform_indices = @transform_7, window_bounds = array<i64: 3, 20, 24>}, {pipeline_mode = #tpu.pipeline_mode<synchronous>, transform_indices = @transform_8, window_bounds = array<i64: 3, 96, 160>}, {pipeline_mode = #tpu.pipeline_mode<synchronous>, transform_indices = @transform_9, window_bounds = array<i64: 1, 160>}, {pipeline_mode = #tpu.pipeline_mode<synchronous>, transform_indices = @transform_10, window_bounds = array<i64: 3, 8, 20>}, {pipeline_mode = #tpu.pipeline_mode<synchronous>, transform_indices = @transform_11, window_bounds = array<i64: 3, 160, 64>}, {pipeline_mode = #tpu.pipeline_mode<synchronous>, transform_indices = @transform_12, window_bounds = array<i64: 1, 64>}, {pipeline_mode = #tpu.pipeline_mode<synchronous>, transform_indices = @transform_13, window_bounds = array<i64: 4, 2, 8>}, {pipeline_mode = #tpu.pipeline_mode<synchronous>, transform_indices = @transform_14, window_bounds = array<i64: 4, 64, 512>}, {pipeline_mode = #tpu.pipeline_mode<synchronous>, transform_indices = @transform_15, window_bounds = array<i64: 1, 512>}, {pipeline_mode = #tpu.pipeline_mode<synchronous>, transform_indices = @transform_16, window_bounds = array<i64: 512, 128>}, {pipeline_mode = #tpu.pipeline_mode<synchronous>, transform_indices = @transform_17, window_bounds = array<i64: 1, 128>}, {transform_indices = @transform_18, window_bounds = array<i64: 2, 128>}]} {
    %c0 = arith.constant 0 : index
    %c0_0 = arith.constant 0 : index
    %0 = vector.load %arg1[%c0, %c0_0] : memref<56x28xf32, #tpu.memory_space<vmem>>, vector<56x28xf32>
    %c0_1 = arith.constant 0 : index
    %c0_2 = arith.constant 0 : index
    %c0_3 = arith.constant 0 : index
    %1 = vector.load %arg2[%c0_1, %c0_2, %c0_3] : memref<3x52x56xf32, #tpu.memory_space<vmem>>, vector<1x52x56xf32>
    %2 = vector.shape_cast %1 : vector<1x52x56xf32> to vector<52x56xf32>
    %cst = arith.constant dense<0.000000e+00> : vector<52x28xf32>
    %3 = tpu.matmul %2, %0, %cst {dimension_numbers = #tpu.dot_dimension_numbers<[1], [0], [0], [1], [0, 0, 1, 1], [], []>} : vector<52x56xf32>, vector<56x28xf32>, vector<52x28xf32> -> vector<52x28xf32>
    %c0_4 = arith.constant 0 : index
    %c0_5 = arith.constant 0 : index
    %c0_6 = arith.constant 0 : index
    %4 = vector.load %arg3[%c0_4, %c0_5, %c0_6] : memref<3x28x208xf32, #tpu.memory_space<vmem>>, vector<1x28x208xf32>
    %5 = vector.shape_cast %4 : vector<1x28x208xf32> to vector<28x208xf32>
    %cst_7 = arith.constant dense<0.000000e+00> : vector<52x208xf32>
    %6 = tpu.matmul %3, %5, %cst_7 {dimension_numbers = #tpu.dot_dimension_numbers<[1], [0], [0], [1], [0, 0, 1, 1], [], []>} : vector<52x28xf32>, vector<28x208xf32>, vector<52x208xf32> -> vector<52x208xf32>
    %c1 = arith.constant 1 : index
    %c0_8 = arith.constant 0 : index
    %c0_9 = arith.constant 0 : index
    %7 = vector.load %arg2[%c1, %c0_8, %c0_9] : memref<3x52x56xf32, #tpu.memory_space<vmem>>, vector<1x52x56xf32>
    %8 = vector.shape_cast %7 : vector<1x52x56xf32> to vector<52x56xf32>
    %cst_10 = arith.constant dense<0.000000e+00> : vector<52x28xf32>
    %9 = tpu.matmul %8, %0, %cst_10 {dimension_numbers = #tpu.dot_dimension_numbers<[1], [0], [0], [1], [0, 0, 1, 1], [], []>} : vector<52x56xf32>, vector<56x28xf32>, vector<52x28xf32> -> vector<52x28xf32>
    %c1_11 = arith.constant 1 : index
    %c0_12 = arith.constant 0 : index
    %c0_13 = arith.constant 0 : index
    %10 = vector.load %arg3[%c1_11, %c0_12, %c0_13] : memref<3x28x208xf32, #tpu.memory_space<vmem>>, vector<1x28x208xf32>
    %11 = vector.shape_cast %10 : vector<1x28x208xf32> to vector<28x208xf32>
    %cst_14 = arith.constant dense<0.000000e+00> : vector<52x208xf32>
    %12 = tpu.matmul %9, %11, %cst_14 {dimension_numbers = #tpu.dot_dimension_numbers<[1], [0], [0], [1], [0, 0, 1, 1], [], []>} : vector<52x28xf32>, vector<28x208xf32>, vector<52x208xf32> -> vector<52x208xf32>
    %13 = arith.addf %6, %12 : vector<52x208xf32>
    %c2 = arith.constant 2 : index
    %c0_15 = arith.constant 0 : index
    %c0_16 = arith.constant 0 : index
    %14 = vector.load %arg2[%c2, %c0_15, %c0_16] : memref<3x52x56xf32, #tpu.memory_space<vmem>>, vector<1x52x56xf32>
    %15 = vector.shape_cast %14 : vector<1x52x56xf32> to vector<52x56xf32>
    %cst_17 = arith.constant dense<0.000000e+00> : vector<52x28xf32>
    %16 = tpu.matmul %15, %0, %cst_17 {dimension_numbers = #tpu.dot_dimension_numbers<[1], [0], [0], [1], [0, 0, 1, 1], [], []>} : vector<52x56xf32>, vector<56x28xf32>, vector<52x28xf32> -> vector<52x28xf32>
    %c2_18 = arith.constant 2 : index
    %c0_19 = arith.constant 0 : index
    %c0_20 = arith.constant 0 : index
    %17 = vector.load %arg3[%c2_18, %c0_19, %c0_20] : memref<3x28x208xf32, #tpu.memory_space<vmem>>, vector<1x28x208xf32>
    %18 = vector.shape_cast %17 : vector<1x28x208xf32> to vector<28x208xf32>
    %cst_21 = arith.constant dense<0.000000e+00> : vector<52x208xf32>
    %19 = tpu.matmul %16, %18, %cst_21 {dimension_numbers = #tpu.dot_dimension_numbers<[1], [0], [0], [1], [0, 0, 1, 1], [], []>} : vector<52x28xf32>, vector<28x208xf32>, vector<52x208xf32> -> vector<52x208xf32>
    %20 = arith.addf %13, %19 : vector<52x208xf32>
    %c0_22 = arith.constant 0 : index
    %c0_23 = arith.constant 0 : index
    %21 = vector.load %arg4[%c0_22, %c0_23] : memref<1x208xf32, #tpu.memory_space<vmem>>, vector<1x208xf32>
    %22 = vector.broadcast %21 : vector<1x208xf32> to vector<52x208xf32>
    %23 = arith.addf %20, %22 : vector<52x208xf32>
    %c0_24 = arith.constant 0 : index
    %c0_25 = arith.constant 0 : index
    %c0_26 = arith.constant 0 : index
    %24 = vector.load %arg5[%c0_24, %c0_25, %c0_26] : memref<3x24x52xf32, #tpu.memory_space<vmem>>, vector<1x24x52xf32>
    %25 = vector.shape_cast %24 : vector<1x24x52xf32> to vector<24x52xf32>
    %cst_27 = arith.constant dense<0.000000e+00> : vector<24x208xf32>
    %26 = tpu.matmul %25, %23, %cst_27 {dimension_numbers = #tpu.dot_dimension_numbers<[1], [0], [0], [1], [0, 0, 1, 1], [], []>} : vector<24x52xf32>, vector<52x208xf32>, vector<24x208xf32> -> vector<24x208xf32>
    %c0_28 = arith.constant 0 : index
    %c0_29 = arith.constant 0 : index
    %c0_30 = arith.constant 0 : index
    %27 = vector.load %arg6[%c0_28, %c0_29, %c0_30] : memref<3x208x96xf32, #tpu.memory_space<vmem>>, vector<1x208x96xf32>
    %28 = vector.shape_cast %27 : vector<1x208x96xf32> to vector<208x96xf32>
    %cst_31 = arith.constant dense<0.000000e+00> : vector<24x96xf32>
    %29 = tpu.matmul %26, %28, %cst_31 {dimension_numbers = #tpu.dot_dimension_numbers<[1], [0], [0], [1], [0, 0, 1, 1], [], []>} : vector<24x208xf32>, vector<208x96xf32>, vector<24x96xf32> -> vector<24x96xf32>
    %c1_32 = arith.constant 1 : index
    %c0_33 = arith.constant 0 : index
    %c0_34 = arith.constant 0 : index
    %30 = vector.load %arg5[%c1_32, %c0_33, %c0_34] : memref<3x24x52xf32, #tpu.memory_space<vmem>>, vector<1x24x52xf32>
    %31 = vector.shape_cast %30 : vector<1x24x52xf32> to vector<24x52xf32>
    %cst_35 = arith.constant dense<0.000000e+00> : vector<24x208xf32>
    %32 = tpu.matmul %31, %23, %cst_35 {dimension_numbers = #tpu.dot_dimension_numbers<[1], [0], [0], [1], [0, 0, 1, 1], [], []>} : vector<24x52xf32>, vector<52x208xf32>, vector<24x208xf32> -> vector<24x208xf32>
    %c1_36 = arith.constant 1 : index
    %c0_37 = arith.constant 0 : index
    %c0_38 = arith.constant 0 : index
    %33 = vector.load %arg6[%c1_36, %c0_37, %c0_38] : memref<3x208x96xf32, #tpu.memory_space<vmem>>, vector<1x208x96xf32>
    %34 = vector.shape_cast %33 : vector<1x208x96xf32> to vector<208x96xf32>
    %cst_39 = arith.constant dense<0.000000e+00> : vector<24x96xf32>
    %35 = tpu.matmul %32, %34, %cst_39 {dimension_numbers = #tpu.dot_dimension_numbers<[1], [0], [0], [1], [0, 0, 1, 1], [], []>} : vector<24x208xf32>, vector<208x96xf32>, vector<24x96xf32> -> vector<24x96xf32>
    %36 = arith.addf %29, %35 : vector<24x96xf32>
    %c2_40 = arith.constant 2 : index
    %c0_41 = arith.constant 0 : index
    %c0_42 = arith.constant 0 : index
    %37 = vector.load %arg5[%c2_40, %c0_41, %c0_42] : memref<3x24x52xf32, #tpu.memory_space<vmem>>, vector<1x24x52xf32>
    %38 = vector.shape_cast %37 : vector<1x24x52xf32> to vector<24x52xf32>
    %cst_43 = arith.constant dense<0.000000e+00> : vector<24x208xf32>
    %39 = tpu.matmul %38, %23, %cst_43 {dimension_numbers = #tpu.dot_dimension_numbers<[1], [0], [0], [1], [0, 0, 1, 1], [], []>} : vector<24x52xf32>, vector<52x208xf32>, vector<24x208xf32> -> vector<24x208xf32>
    %c2_44 = arith.constant 2 : index
    %c0_45 = arith.constant 0 : index
    %c0_46 = arith.constant 0 : index
    %40 = vector.load %arg6[%c2_44, %c0_45, %c0_46] : memref<3x208x96xf32, #tpu.memory_space<vmem>>, vector<1x208x96xf32>
    %41 = vector.shape_cast %40 : vector<1x208x96xf32> to vector<208x96xf32>
    %cst_47 = arith.constant dense<0.000000e+00> : vector<24x96xf32>
    %42 = tpu.matmul %39, %41, %cst_47 {dimension_numbers = #tpu.dot_dimension_numbers<[1], [0], [0], [1], [0, 0, 1, 1], [], []>} : vector<24x208xf32>, vector<208x96xf32>, vector<24x96xf32> -> vector<24x96xf32>
    %43 = arith.addf %36, %42 : vector<24x96xf32>
    %c0_48 = arith.constant 0 : index
    %c0_49 = arith.constant 0 : index
    %44 = vector.load %arg7[%c0_48, %c0_49] : memref<1x96xf32, #tpu.memory_space<vmem>>, vector<1x96xf32>
    %45 = vector.broadcast %44 : vector<1x96xf32> to vector<24x96xf32>
    %46 = arith.addf %43, %45 : vector<24x96xf32>
    %cst_50 = arith.constant 0.000000e+00 : f32
    %47 = vector.broadcast %cst_50 : f32 to vector<24x96xf32>
    %48 = arith.maximumf %46, %47 : vector<24x96xf32>
    %c0_51 = arith.constant 0 : index
    %c0_52 = arith.constant 0 : index
    %c0_53 = arith.constant 0 : index
    %49 = vector.load %arg8[%c0_51, %c0_52, %c0_53] : memref<3x20x24xf32, #tpu.memory_space<vmem>>, vector<1x20x24xf32>
    %50 = vector.shape_cast %49 : vector<1x20x24xf32> to vector<20x24xf32>
    %cst_54 = arith.constant dense<0.000000e+00> : vector<20x96xf32>
    %51 = tpu.matmul %50, %48, %cst_54 {dimension_numbers = #tpu.dot_dimension_numbers<[1], [0], [0], [1], [0, 0, 1, 1], [], []>} : vector<20x24xf32>, vector<24x96xf32>, vector<20x96xf32> -> vector<20x96xf32>
    %c0_55 = arith.constant 0 : index
    %c0_56 = arith.constant 0 : index
    %c0_57 = arith.constant 0 : index
    %52 = vector.load %arg9[%c0_55, %c0_56, %c0_57] : memref<3x96x160xf32, #tpu.memory_space<vmem>>, vector<1x96x160xf32>
    %53 = vector.shape_cast %52 : vector<1x96x160xf32> to vector<96x160xf32>
    %cst_58 = arith.constant dense<0.000000e+00> : vector<20x160xf32>
    %54 = tpu.matmul %51, %53, %cst_58 {dimension_numbers = #tpu.dot_dimension_numbers<[1], [0], [0], [1], [0, 0, 1, 1], [], []>} : vector<20x96xf32>, vector<96x160xf32>, vector<20x160xf32> -> vector<20x160xf32>
    %c1_59 = arith.constant 1 : index
    %c0_60 = arith.constant 0 : index
    %c0_61 = arith.constant 0 : index
    %55 = vector.load %arg8[%c1_59, %c0_60, %c0_61] : memref<3x20x24xf32, #tpu.memory_space<vmem>>, vector<1x20x24xf32>
    %56 = vector.shape_cast %55 : vector<1x20x24xf32> to vector<20x24xf32>
    %cst_62 = arith.constant dense<0.000000e+00> : vector<20x96xf32>
    %57 = tpu.matmul %56, %48, %cst_62 {dimension_numbers = #tpu.dot_dimension_numbers<[1], [0], [0], [1], [0, 0, 1, 1], [], []>} : vector<20x24xf32>, vector<24x96xf32>, vector<20x96xf32> -> vector<20x96xf32>
    %c1_63 = arith.constant 1 : index
    %c0_64 = arith.constant 0 : index
    %c0_65 = arith.constant 0 : index
    %58 = vector.load %arg9[%c1_63, %c0_64, %c0_65] : memref<3x96x160xf32, #tpu.memory_space<vmem>>, vector<1x96x160xf32>
    %59 = vector.shape_cast %58 : vector<1x96x160xf32> to vector<96x160xf32>
    %cst_66 = arith.constant dense<0.000000e+00> : vector<20x160xf32>
    %60 = tpu.matmul %57, %59, %cst_66 {dimension_numbers = #tpu.dot_dimension_numbers<[1], [0], [0], [1], [0, 0, 1, 1], [], []>} : vector<20x96xf32>, vector<96x160xf32>, vector<20x160xf32> -> vector<20x160xf32>
    %61 = arith.addf %54, %60 : vector<20x160xf32>
    %c2_67 = arith.constant 2 : index
    %c0_68 = arith.constant 0 : index
    %c0_69 = arith.constant 0 : index
    %62 = vector.load %arg8[%c2_67, %c0_68, %c0_69] : memref<3x20x24xf32, #tpu.memory_space<vmem>>, vector<1x20x24xf32>
    %63 = vector.shape_cast %62 : vector<1x20x24xf32> to vector<20x24xf32>
    %cst_70 = arith.constant dense<0.000000e+00> : vector<20x96xf32>
    %64 = tpu.matmul %63, %48, %cst_70 {dimension_numbers = #tpu.dot_dimension_numbers<[1], [0], [0], [1], [0, 0, 1, 1], [], []>} : vector<20x24xf32>, vector<24x96xf32>, vector<20x96xf32> -> vector<20x96xf32>
    %c2_71 = arith.constant 2 : index
    %c0_72 = arith.constant 0 : index
    %c0_73 = arith.constant 0 : index
    %65 = vector.load %arg9[%c2_71, %c0_72, %c0_73] : memref<3x96x160xf32, #tpu.memory_space<vmem>>, vector<1x96x160xf32>
    %66 = vector.shape_cast %65 : vector<1x96x160xf32> to vector<96x160xf32>
    %cst_74 = arith.constant dense<0.000000e+00> : vector<20x160xf32>
    %67 = tpu.matmul %64, %66, %cst_74 {dimension_numbers = #tpu.dot_dimension_numbers<[1], [0], [0], [1], [0, 0, 1, 1], [], []>} : vector<20x96xf32>, vector<96x160xf32>, vector<20x160xf32> -> vector<20x160xf32>
    %68 = arith.addf %61, %67 : vector<20x160xf32>
    %c0_75 = arith.constant 0 : index
    %c0_76 = arith.constant 0 : index
    %69 = vector.load %arg10[%c0_75, %c0_76] : memref<1x160xf32, #tpu.memory_space<vmem>>, vector<1x160xf32>
    %70 = vector.broadcast %69 : vector<1x160xf32> to vector<20x160xf32>
    %71 = arith.addf %68, %70 : vector<20x160xf32>
    %c0_77 = arith.constant 0 : index
    %c0_78 = arith.constant 0 : index
    %c0_79 = arith.constant 0 : index
    %72 = vector.load %arg11[%c0_77, %c0_78, %c0_79] : memref<3x8x20xf32, #tpu.memory_space<vmem>>, vector<1x8x20xf32>
    %73 = vector.shape_cast %72 : vector<1x8x20xf32> to vector<8x20xf32>
    %cst_80 = arith.constant dense<0.000000e+00> : vector<8x160xf32>
    %74 = tpu.matmul %73, %71, %cst_80 {dimension_numbers = #tpu.dot_dimension_numbers<[1], [0], [0], [1], [0, 0, 1, 1], [], []>} : vector<8x20xf32>, vector<20x160xf32>, vector<8x160xf32> -> vector<8x160xf32>
    %c0_81 = arith.constant 0 : index
    %c0_82 = arith.constant 0 : index
    %c0_83 = arith.constant 0 : index
    %75 = vector.load %arg12[%c0_81, %c0_82, %c0_83] : memref<3x160x64xf32, #tpu.memory_space<vmem>>, vector<1x160x64xf32>
    %76 = vector.shape_cast %75 : vector<1x160x64xf32> to vector<160x64xf32>
    %cst_84 = arith.constant dense<0.000000e+00> : vector<8x64xf32>
    %77 = tpu.matmul %74, %76, %cst_84 {dimension_numbers = #tpu.dot_dimension_numbers<[1], [0], [0], [1], [0, 0, 1, 1], [], []>} : vector<8x160xf32>, vector<160x64xf32>, vector<8x64xf32> -> vector<8x64xf32>
    %c1_85 = arith.constant 1 : index
    %c0_86 = arith.constant 0 : index
    %c0_87 = arith.constant 0 : index
    %78 = vector.load %arg11[%c1_85, %c0_86, %c0_87] : memref<3x8x20xf32, #tpu.memory_space<vmem>>, vector<1x8x20xf32>
    %79 = vector.shape_cast %78 : vector<1x8x20xf32> to vector<8x20xf32>
    %cst_88 = arith.constant dense<0.000000e+00> : vector<8x160xf32>
    %80 = tpu.matmul %79, %71, %cst_88 {dimension_numbers = #tpu.dot_dimension_numbers<[1], [0], [0], [1], [0, 0, 1, 1], [], []>} : vector<8x20xf32>, vector<20x160xf32>, vector<8x160xf32> -> vector<8x160xf32>
    %c1_89 = arith.constant 1 : index
    %c0_90 = arith.constant 0 : index
    %c0_91 = arith.constant 0 : index
    %81 = vector.load %arg12[%c1_89, %c0_90, %c0_91] : memref<3x160x64xf32, #tpu.memory_space<vmem>>, vector<1x160x64xf32>
    %82 = vector.shape_cast %81 : vector<1x160x64xf32> to vector<160x64xf32>
    %cst_92 = arith.constant dense<0.000000e+00> : vector<8x64xf32>
    %83 = tpu.matmul %80, %82, %cst_92 {dimension_numbers = #tpu.dot_dimension_numbers<[1], [0], [0], [1], [0, 0, 1, 1], [], []>} : vector<8x160xf32>, vector<160x64xf32>, vector<8x64xf32> -> vector<8x64xf32>
    %84 = arith.addf %77, %83 : vector<8x64xf32>
    %c2_93 = arith.constant 2 : index
    %c0_94 = arith.constant 0 : index
    %c0_95 = arith.constant 0 : index
    %85 = vector.load %arg11[%c2_93, %c0_94, %c0_95] : memref<3x8x20xf32, #tpu.memory_space<vmem>>, vector<1x8x20xf32>
    %86 = vector.shape_cast %85 : vector<1x8x20xf32> to vector<8x20xf32>
    %cst_96 = arith.constant dense<0.000000e+00> : vector<8x160xf32>
    %87 = tpu.matmul %86, %71, %cst_96 {dimension_numbers = #tpu.dot_dimension_numbers<[1], [0], [0], [1], [0, 0, 1, 1], [], []>} : vector<8x20xf32>, vector<20x160xf32>, vector<8x160xf32> -> vector<8x160xf32>
    %c2_97 = arith.constant 2 : index
    %c0_98 = arith.constant 0 : index
    %c0_99 = arith.constant 0 : index
    %88 = vector.load %arg12[%c2_97, %c0_98, %c0_99] : memref<3x160x64xf32, #tpu.memory_space<vmem>>, vector<1x160x64xf32>
    %89 = vector.shape_cast %88 : vector<1x160x64xf32> to vector<160x64xf32>
    %cst_100 = arith.constant dense<0.000000e+00> : vector<8x64xf32>
    %90 = tpu.matmul %87, %89, %cst_100 {dimension_numbers = #tpu.dot_dimension_numbers<[1], [0], [0], [1], [0, 0, 1, 1], [], []>} : vector<8x160xf32>, vector<160x64xf32>, vector<8x64xf32> -> vector<8x64xf32>
    %91 = arith.addf %84, %90 : vector<8x64xf32>
    %c0_101 = arith.constant 0 : index
    %c0_102 = arith.constant 0 : index
    %92 = vector.load %arg13[%c0_101, %c0_102] : memref<1x64xf32, #tpu.memory_space<vmem>>, vector<1x64xf32>
    %93 = vector.broadcast %92 : vector<1x64xf32> to vector<8x64xf32>
    %94 = arith.addf %91, %93 : vector<8x64xf32>
    %cst_103 = arith.constant 0.000000e+00 : f32
    %95 = vector.broadcast %cst_103 : f32 to vector<8x64xf32>
    %96 = arith.maximumf %94, %95 : vector<8x64xf32>
    %c0_104 = arith.constant 0 : index
    %c0_105 = arith.constant 0 : index
    %c0_106 = arith.constant 0 : index
    %97 = vector.load %arg14[%c0_104, %c0_105, %c0_106] : memref<4x2x8xf32, #tpu.memory_space<vmem>>, vector<1x2x8xf32>
    %98 = vector.shape_cast %97 : vector<1x2x8xf32> to vector<2x8xf32>
    %cst_107 = arith.constant dense<0.000000e+00> : vector<2x64xf32>
    %99 = tpu.matmul %98, %96, %cst_107 {dimension_numbers = #tpu.dot_dimension_numbers<[1], [0], [0], [1], [0, 0, 1, 1], [], []>} : vector<2x8xf32>, vector<8x64xf32>, vector<2x64xf32> -> vector<2x64xf32>
    %c0_108 = arith.constant 0 : index
    %c0_109 = arith.constant 0 : index
    %c0_110 = arith.constant 0 : index
    %100 = vector.load %arg15[%c0_108, %c0_109, %c0_110] : memref<4x64x512xf32, #tpu.memory_space<vmem>>, vector<1x64x512xf32>
    %101 = vector.shape_cast %100 : vector<1x64x512xf32> to vector<64x512xf32>
    %cst_111 = arith.constant dense<0.000000e+00> : vector<2x512xf32>
    %102 = tpu.matmul %99, %101, %cst_111 {dimension_numbers = #tpu.dot_dimension_numbers<[1], [0], [0], [1], [0, 0, 1, 1], [], []>} : vector<2x64xf32>, vector<64x512xf32>, vector<2x512xf32> -> vector<2x512xf32>
    %c1_112 = arith.constant 1 : index
    %c0_113 = arith.constant 0 : index
    %c0_114 = arith.constant 0 : index
    %103 = vector.load %arg14[%c1_112, %c0_113, %c0_114] : memref<4x2x8xf32, #tpu.memory_space<vmem>>, vector<1x2x8xf32>
    %104 = vector.shape_cast %103 : vector<1x2x8xf32> to vector<2x8xf32>
    %cst_115 = arith.constant dense<0.000000e+00> : vector<2x64xf32>
    %105 = tpu.matmul %104, %96, %cst_115 {dimension_numbers = #tpu.dot_dimension_numbers<[1], [0], [0], [1], [0, 0, 1, 1], [], []>} : vector<2x8xf32>, vector<8x64xf32>, vector<2x64xf32> -> vector<2x64xf32>
    %c1_116 = arith.constant 1 : index
    %c0_117 = arith.constant 0 : index
    %c0_118 = arith.constant 0 : index
    %106 = vector.load %arg15[%c1_116, %c0_117, %c0_118] : memref<4x64x512xf32, #tpu.memory_space<vmem>>, vector<1x64x512xf32>
    %107 = vector.shape_cast %106 : vector<1x64x512xf32> to vector<64x512xf32>
    %cst_119 = arith.constant dense<0.000000e+00> : vector<2x512xf32>
    %108 = tpu.matmul %105, %107, %cst_119 {dimension_numbers = #tpu.dot_dimension_numbers<[1], [0], [0], [1], [0, 0, 1, 1], [], []>} : vector<2x64xf32>, vector<64x512xf32>, vector<2x512xf32> -> vector<2x512xf32>
    %109 = arith.addf %102, %108 : vector<2x512xf32>
    %c2_120 = arith.constant 2 : index
    %c0_121 = arith.constant 0 : index
    %c0_122 = arith.constant 0 : index
    %110 = vector.load %arg14[%c2_120, %c0_121, %c0_122] : memref<4x2x8xf32, #tpu.memory_space<vmem>>, vector<1x2x8xf32>
    %111 = vector.shape_cast %110 : vector<1x2x8xf32> to vector<2x8xf32>
    %cst_123 = arith.constant dense<0.000000e+00> : vector<2x64xf32>
    %112 = tpu.matmul %111, %96, %cst_123 {dimension_numbers = #tpu.dot_dimension_numbers<[1], [0], [0], [1], [0, 0, 1, 1], [], []>} : vector<2x8xf32>, vector<8x64xf32>, vector<2x64xf32> -> vector<2x64xf32>
    %c2_124 = arith.constant 2 : index
    %c0_125 = arith.constant 0 : index
    %c0_126 = arith.constant 0 : index
    %113 = vector.load %arg15[%c2_124, %c0_125, %c0_126] : memref<4x64x512xf32, #tpu.memory_space<vmem>>, vector<1x64x512xf32>
    %114 = vector.shape_cast %113 : vector<1x64x512xf32> to vector<64x512xf32>
    %cst_127 = arith.constant dense<0.000000e+00> : vector<2x512xf32>
    %115 = tpu.matmul %112, %114, %cst_127 {dimension_numbers = #tpu.dot_dimension_numbers<[1], [0], [0], [1], [0, 0, 1, 1], [], []>} : vector<2x64xf32>, vector<64x512xf32>, vector<2x512xf32> -> vector<2x512xf32>
    %116 = arith.addf %109, %115 : vector<2x512xf32>
    %c3 = arith.constant 3 : index
    %c0_128 = arith.constant 0 : index
    %c0_129 = arith.constant 0 : index
    %117 = vector.load %arg14[%c3, %c0_128, %c0_129] : memref<4x2x8xf32, #tpu.memory_space<vmem>>, vector<1x2x8xf32>
    %118 = vector.shape_cast %117 : vector<1x2x8xf32> to vector<2x8xf32>
    %cst_130 = arith.constant dense<0.000000e+00> : vector<2x64xf32>
    %119 = tpu.matmul %118, %96, %cst_130 {dimension_numbers = #tpu.dot_dimension_numbers<[1], [0], [0], [1], [0, 0, 1, 1], [], []>} : vector<2x8xf32>, vector<8x64xf32>, vector<2x64xf32> -> vector<2x64xf32>
    %c3_131 = arith.constant 3 : index
    %c0_132 = arith.constant 0 : index
    %c0_133 = arith.constant 0 : index
    %120 = vector.load %arg15[%c3_131, %c0_132, %c0_133] : memref<4x64x512xf32, #tpu.memory_space<vmem>>, vector<1x64x512xf32>
    %121 = vector.shape_cast %120 : vector<1x64x512xf32> to vector<64x512xf32>
    %cst_134 = arith.constant dense<0.000000e+00> : vector<2x512xf32>
    %122 = tpu.matmul %119, %121, %cst_134 {dimension_numbers = #tpu.dot_dimension_numbers<[1], [0], [0], [1], [0, 0, 1, 1], [], []>} : vector<2x64xf32>, vector<64x512xf32>, vector<2x512xf32> -> vector<2x512xf32>
    %123 = arith.addf %116, %122 : vector<2x512xf32>
    %c0_135 = arith.constant 0 : index
    %c0_136 = arith.constant 0 : index
    %124 = vector.load %arg16[%c0_135, %c0_136] : memref<1x512xf32, #tpu.memory_space<vmem>>, vector<1x512xf32>
    %125 = vector.broadcast %124 : vector<1x512xf32> to vector<2x512xf32>
    %126 = arith.addf %123, %125 : vector<2x512xf32>
    %cst_137 = arith.constant 0.000000e+00 : f32
    %127 = vector.broadcast %cst_137 : f32 to vector<2x512xf32>
    %128 = arith.maximumf %126, %127 : vector<2x512xf32>
    %c0_138 = arith.constant 0 : index
    %c0_139 = arith.constant 0 : index
    %129 = vector.load %arg17[%c0_138, %c0_139] : memref<512x128xf32, #tpu.memory_space<vmem>>, vector<512x128xf32>
    %cst_140 = arith.constant dense<0.000000e+00> : vector<2x128xf32>
    %130 = tpu.matmul %128, %129, %cst_140 {dimension_numbers = #tpu.dot_dimension_numbers<[1], [0], [0], [1], [0, 0, 1, 1], [], []>} : vector<2x512xf32>, vector<512x128xf32>, vector<2x128xf32> -> vector<2x128xf32>
    %c0_141 = arith.constant 0 : index
    %c0_142 = arith.constant 0 : index
    %131 = vector.load %arg18[%c0_141, %c0_142] : memref<1x128xf32, #tpu.memory_space<vmem>>, vector<1x128xf32>
    %132 = vector.broadcast %131 : vector<1x128xf32> to vector<2x128xf32>
    %133 = arith.addf %130, %132 : vector<2x128xf32>
    %c0_143 = arith.constant 0 : index
    %c0_144 = arith.constant 0 : index
    %134 = vector.load %arg19[%c0_143, %c0_144] : memref<2x128xf32, #tpu.memory_space<vmem>>, vector<2x128xf32>
    tpu.vector_store %arg19[%c0_143, %c0_144], %133 {strides = array<i32>} : memref<2x128xf32, #tpu.memory_space<vmem>>, vector<2x128xf32>,
    return
  }
  func.func @transform_0(%arg0: i32) -> (i32, i32) {
    %c0_i32 = arith.constant 0 : i32
    %c0_i32_0 = arith.constant 0 : i32
    return %arg0, %c0_i32 : i32, i32
  }
  func.func @transform_1(%arg0: i32) -> (i32, i32, i32) {
    %c0_i32 = arith.constant 0 : i32
    %c0_i32_0 = arith.constant 0 : i32
    %c0_i32_1 = arith.constant 0 : i32
    %c0_i32_2 = arith.constant 0 : i32
    return %c0_i32, %c0_i32_0, %c0_i32_1 : i32, i32, i32
  }
  func.func @transform_2(%arg0: i32) -> (i32, i32, i32) {
    %c0_i32 = arith.constant 0 : i32
    %c0_i32_0 = arith.constant 0 : i32
    %c0_i32_1 = arith.constant 0 : i32
    %c0_i32_2 = arith.constant 0 : i32
    return %c0_i32, %c0_i32_0, %c0_i32_1 : i32, i32, i32
  }
  func.func @transform_3(%arg0: i32) -> (i32, i32) {
    %c0_i32 = arith.constant 0 : i32
    %c0_i32_0 = arith.constant 0 : i32
    %c0_i32_1 = arith.constant 0 : i32
    return %c0_i32, %c0_i32_0 : i32, i32
  }
  func.func @transform_4(%arg0: i32) -> (i32, i32, i32) {
    %c0_i32 = arith.constant 0 : i32
    %c0_i32_0 = arith.constant 0 : i32
    %c0_i32_1 = arith.constant 0 : i32
    %c0_i32_2 = arith.constant 0 : i32
    return %c0_i32, %c0_i32_0, %c0_i32_1 : i32, i32, i32
  }
  func.func @transform_5(%arg0: i32) -> (i32, i32, i32) {
    %c0_i32 = arith.constant 0 : i32
    %c0_i32_0 = arith.constant 0 : i32
    %c0_i32_1 = arith.constant 0 : i32
    %c0_i32_2 = arith.constant 0 : i32
    return %c0_i32, %c0_i32_0, %c0_i32_1 : i32, i32, i32
  }
  func.func @transform_6(%arg0: i32) -> (i32, i32) {
    %c0_i32 = arith.constant 0 : i32
    %c0_i32_0 = arith.constant 0 : i32
    %c0_i32_1 = arith.constant 0 : i32
    return %c0_i32, %c0_i32_0 : i32, i32
  }
  func.func @transform_7(%arg0: i32) -> (i32, i32, i32) {
    %c0_i32 = arith.constant 0 : i32
    %c0_i32_0 = arith.constant 0 : i32
    %c0_i32_1 = arith.constant 0 : i32
    %c0_i32_2 = arith.constant 0 : i32
    return %c0_i32, %c0_i32_0, %c0_i32_1 : i32, i32, i32
  }
  func.func @transform_8(%arg0: i32) -> (i32, i32, i32) {
    %c0_i32 = arith.constant 0 : i32
    %c0_i32_0 = arith.constant 0 : i32
    %c0_i32_1 = arith.constant 0 : i32
    %c0_i32_2 = arith.constant 0 : i32
    return %c0_i32, %c0_i32_0, %c0_i32_1 : i32, i32, i32
  }
  func.func @transform_9(%arg0: i32) -> (i32, i32) {
    %c0_i32 = arith.constant 0 : i32
    %c0_i32_0 = arith.constant 0 : i32
    %c0_i32_1 = arith.constant 0 : i32
    return %c0_i32, %c0_i32_0 : i32, i32
  }
  func.func @transform_10(%arg0: i32) -> (i32, i32, i32) {
    %c0_i32 = arith.constant 0 : i32
    %c0_i32_0 = arith.constant 0 : i32
    %c0_i32_1 = arith.constant 0 : i32
    %c0_i32_2 = arith.constant 0 : i32
    return %c0_i32, %c0_i32_0, %c0_i32_1 : i32, i32, i32
  }
  func.func @transform_11(%arg0: i32) -> (i32, i32, i32) {
    %c0_i32 = arith.constant 0 : i32
    %c0_i32_0 = arith.constant 0 : i32
    %c0_i32_1 = arith.constant 0 : i32
    %c0_i32_2 = arith.constant 0 : i32
    return %c0_i32, %c0_i32_0, %c0_i32_1 : i32, i32, i32
  }
  func.func @transform_12(%arg0: i32) -> (i32, i32) {
    %c0_i32 = arith.constant 0 : i32
    %c0_i32_0 = arith.constant 0 : i32
    %c0_i32_1 = arith.constant 0 : i32
    return %c0_i32, %c0_i32_0 : i32, i32
  }
  func.func @transform_13(%arg0: i32) -> (i32, i32, i32) {
    %c0_i32 = arith.constant 0 : i32
    %c0_i32_0 = arith.constant 0 : i32
    %c0_i32_1 = arith.constant 0 : i32
    %c0_i32_2 = arith.constant 0 : i32
    return %c0_i32, %c0_i32_0, %c0_i32_1 : i32, i32, i32
  }
  func.func @transform_14(%arg0: i32) -> (i32, i32, i32) {
    %c0_i32 = arith.constant 0 : i32
    %c0_i32_0 = arith.constant 0 : i32
    %c0_i32_1 = arith.constant 0 : i32
    %c0_i32_2 = arith.constant 0 : i32
    return %c0_i32, %c0_i32_0, %c0_i32_1 : i32, i32, i32
  }
  func.func @transform_15(%arg0: i32) -> (i32, i32) {
    %c0_i32 = arith.constant 0 : i32
    %c0_i32_0 = arith.constant 0 : i32
    %c0_i32_1 = arith.constant 0 : i32
    return %c0_i32, %c0_i32_0 : i32, i32
  }
  func.func @transform_16(%arg0: i32) -> (i32, i32) {
    %c0_i32 = arith.constant 0 : i32
    %c0_i32_0 = arith.constant 0 : i32
    %c0_i32_1 = arith.constant 0 : i32
    return %c0_i32, %c0_i32_0 : i32, i32
  }
  func.func @transform_17(%arg0: i32) -> (i32, i32) {
    %c0_i32 = arith.constant 0 : i32
    %c0_i32_0 = arith.constant 0 : i32
    %c0_i32_1 = arith.constant 0 : i32
    return %c0_i32, %c0_i32_0 : i32, i32
  }
  func.func @transform_18(%arg0: i32) -> (i32, i32) {
    %c0_i32 = arith.constant 0 : i32
    %c0_i32_0 = arith.constant 0 : i32
    return %arg0, %c0_i32 : i32, i32
  }
}

</mosaic_0001>

<llo_original>
// kernel: network_forward.1
$region0: #{network_forward.1}
  #allocation0 [shape = 'u32[]', space=smem, size = 0x4, offset = 0x4, fixed_abs, tag = 'smem constant byte address 0x4 - core index']
  #allocation1 [shape = 'u32[144,128]{1,0:T(1,128)}', space=vmem, size = 0x12000, scoped, tag = 'internal scratch']
  %s0 = inlined_call_operand.hbm [shape: f32[56,28], index: 0, kind: input, shape index: {}]
  %s1 = inlined_call_operand.hbm [shape: f32[3,52,56], index: 1, kind: input, shape index: {}]
  %s2 = inlined_call_operand.hbm [shape: f32[3,28,208], index: 2, kind: input, shape index: {}]
  %s3 = inlined_call_operand.hbm [shape: f32[1,208], index: 3, kind: input, shape index: {}]
  %s4 = inlined_call_operand.hbm [shape: f32[3,24,52], index: 4, kind: input, shape index: {}]
  %s5 = inlined_call_operand.hbm [shape: f32[3,208,96], index: 5, kind: input, shape index: {}]
  %s6 = inlined_call_operand.hbm [shape: f32[1,96], index: 6, kind: input, shape index: {}]
  %s7 = inlined_call_operand.hbm [shape: f32[3,20,24], index: 7, kind: input, shape index: {}]
  %s8 = inlined_call_operand.hbm [shape: f32[3,96,160], index: 8, kind: input, shape index: {}]
  %s9 = inlined_call_operand.vmem [shape: f32[1,160], index: 9, kind: input, shape index: {}]
  %s10 = inlined_call_operand.hbm [shape: f32[3,8,20], index: 10, kind: input, shape index: {}]
  %s11 = inlined_call_operand.hbm [shape: f32[3,160,64], index: 11, kind: input, shape index: {}]
  %s12 = inlined_call_operand.vmem [shape: f32[1,64], index: 12, kind: input, shape index: {}]
  %s13 = inlined_call_operand.vmem [shape: f32[4,2,8], index: 13, kind: input, shape index: {}]
  %s14 = inlined_call_operand.hbm [shape: f32[4,64,512], index: 14, kind: input, shape index: {}]
  %s15 = inlined_call_operand.vmem [shape: f32[1,512], index: 15, kind: input, shape index: {}]
  %s16 = inlined_call_operand.hbm [shape: f32[512,128], index: 16, kind: input, shape index: {}]
  %s17 = inlined_call_operand.vmem [shape: f32[1,128], index: 17, kind: input, shape index: {}]
  %s18 = inlined_call_operand.hbm [shape: f32[2,128], index: 18, kind: output, shape index: {}]
  %s19 = sld [smem:[#allocation0]]
  $region134: #{network_forward.1} parent=0
    _
  %s21 = ssub.s32 1, %s19
  %s22 = scalar_select 0, %s21, %s19
  $region1: #{network_forward.1} parent=0
    #allocation2 [shape = 'u8[28672]{0}', space=vmem, size = 0x7000, scoped, tag = 'input window, operand 0, single buffered']
    #allocation3 [shape = 's32[1]{0}', space=sflag, size = 0x4, scoped, tag = 'scoped memory for network_forward.1']
    #allocation4 [shape = 's32[1]{0}', space=sflag, size = 0x4, scoped, tag = 'scoped memory for network_forward.1']
    #allocation5 [shape = 'u8[86016]{0}', space=vmem, size = 0x15000, scoped, tag = 'input window, operand 1, single buffered']
    #allocation6 [shape = 's32[1]{0}', space=sflag, size = 0x4, scoped, tag = 'scoped memory for network_forward.1']
    #allocation7 [shape = 'u8[98304]{0}', space=vmem, size = 0x18000, scoped, tag = 'input window, operand 2, single buffered']
    #allocation8 [shape = 'u8[1024]{0}', space=vmem, size = 0x400, scoped, tag = 'input window, operand 3, single buffered']
    #allocation9 [shape = 's32[1]{0}', space=sflag, size = 0x4, scoped, tag = 'scoped memory for network_forward.1']
    #allocation10 [shape = 'u8[36864]{0}', space=vmem, size = 0x9000, scoped, tag = 'input window, operand 4, single buffered']
    #allocation11 [shape = 'u8[319488]{0}', space=vmem, size = 0x4e000, scoped, tag = 'input window, operand 5, single buffered']
    #allocation12 [shape = 's32[1]{0}', space=sflag, size = 0x4, scoped, tag = 'scoped memory for network_forward.1']
    #allocation13 [shape = 'u8[512]{0}', space=vmem, size = 0x400, scoped, tag = 'input window, operand 6, single buffered']
    #allocation14 [shape = 'u8[36864]{0}', space=vmem, size = 0x9000, scoped, tag = 'input window, operand 7, single buffered']
    #allocation15 [shape = 's32[1]{0}', space=sflag, size = 0x4, scoped, tag = 'scoped memory for network_forward.1']
    #allocation16 [shape = 'u8[294912]{0}', space=vmem, size = 0x48000, scoped, tag = 'input window, operand 8, single buffered']
    #allocation17 [shape = 'u8[12288]{0}', space=vmem, size = 0x3000, scoped, tag = 'input window, operand 10, single buffered']
    #allocation18 [shape = 's32[1]{0}', space=sflag, size = 0x4, scoped, tag = 'scoped memory for network_forward.1']
    #allocation19 [shape = 'u8[245760]{0}', space=vmem, size = 0x3c000, scoped, tag = 'input window, operand 11, single buffered']
    #allocation20 [shape = 'u8[524288]{0}', space=vmem, size = 0x80000, scoped, tag = 'input window, operand 14, single buffered']
    #allocation21 [shape = 's32[1]{0}', space=sflag, size = 0x4, scoped, tag = 'scoped memory for network_forward.1']
    #allocation22 [shape = 'u8[262144]{0}', space=vmem, size = 0x40000, scoped, tag = 'input window, operand 16, single buffered']
    #allocation23 [shape = 'u8[1024]{0}', space=vmem, size = 0x400, scoped, tag = 'output window, operand 0, single buffered']
    %23 = vsyncpa [#allocation3], 0
    %24 = vsyncpa [#allocation6], 0
    %25 = vsyncpa [#allocation9], 0
    %26 = vsyncpa [#allocation12], 0
    %27 = vsyncpa [#allocation15], 0
    %28 = vsyncpa [#allocation18], 0
    %29 = vsyncpa [#allocation21], 0
    %30 = vsyncpa [#allocation4], 0
    // Predicated region
    $region2: #{network_forward.1} parent=1 // pred_check
      _
    $region3: #{network_forward.1} parent=1 // pred_check_branch
      %32 = sbr.rel (0) target = $region5
    $region4: #{network_forward.1} parent=1 // pred_region
      %s34 = ssub.s32 896, 896
      %35 = vsyncadd [#allocation3], %s34
      %s36 = sshll.u32 [#allocation2], 4
      %s37 = int_to_ptr.vmem [resolvable:$true] %s36
      %42 = dma.hbm_to_vmem [thread:$0]  %s0, 896, %s37, [#allocation3], 128, 128, 8
    $region5: #{network_forward.1} parent=1 // pred_fallthru
      _
    // Predicated region
    $region6: #{network_forward.1} parent=1 // pred_check
      _
    $region7: #{network_forward.1} parent=1 // pred_check_branch
      %44 = sbr.rel (0) target = $region9
    $region8: #{network_forward.1} parent=1 // pred_region
      %s46 = ssub.s32 2688, 2688
      %47 = vsyncadd [#allocation6], %s46
      %s48 = sshll.u32 [#allocation5], 4
      %s49 = int_to_ptr.vmem [resolvable:$true] %s48
      %54 = dma.hbm_to_vmem [thread:$0]  %s1, 2688, %s49, [#allocation6], 128, 128, 8
    $region9: #{network_forward.1} parent=1 // pred_fallthru
      _
    // Predicated region
    $region10: #{network_forward.1} parent=1 // pred_check
      _
    $region11: #{network_forward.1} parent=1 // pred_check_branch
      %56 = sbr.rel (0) target = $region13
    $region12: #{network_forward.1} parent=1 // pred_region
      %s58 = ssub.s32 3072, 3072
      %59 = vsyncadd [#allocation6], %s58
      %s60 = sshll.u32 [#allocation7], 4
      %s61 = int_to_ptr.vmem [resolvable:$true] %s60
      %66 = dma.hbm_to_vmem [thread:$0]  %s2, 3072, %s61, [#allocation6], 256, 256, 16
    $region13: #{network_forward.1} parent=1 // pred_fallthru
      _
    // Predicated region
    $region14: #{network_forward.1} parent=1 // pred_check
      _
    $region15: #{network_forward.1} parent=1 // pred_check_branch
      %68 = sbr.rel (0) target = $region17
    $region16: #{network_forward.1} parent=1 // pred_region
      %s70 = ssub.s32 32, 32
      %71 = vsyncadd [#allocation9], %s70
      %s73 = sshll.u32 [#allocation8], 4
      %s74 = int_to_ptr.vmem [resolvable:$true] %s73
      %76 = dma.hbm_to_vmem [thread:$0]  %s3, 32, %s74, [#allocation9]
    $region17: #{network_forward.1} parent=1 // pred_fallthru
      _
    // Predicated region
    $region18: #{network_forward.1} parent=1 // pred_check
      _
    $region19: #{network_forward.1} parent=1 // pred_check_branch
      %78 = sbr.rel (0) target = $region21
    $region20: #{network_forward.1} parent=1 // pred_region
      %s80 = ssub.s32 1152, 1152
      %81 = vsyncadd [#allocation9], %s80
      %s82 = sshll.u32 [#allocation10], 4
      %s83 = int_to_ptr.vmem [resolvable:$true] %s82
      %88 = dma.hbm_to_vmem [thread:$0]  %s4, 1152, %s83, [#allocation9], 128, 128, 8
    $region21: #{network_forward.1} parent=1 // pred_fallthru
      _
    // Predicated region
    $region22: #{network_forward.1} parent=1 // pred_check
      _
    $region23: #{network_forward.1} parent=1 // pred_check_branch
      %90 = sbr.rel (0) target = $region25
    $region24: #{network_forward.1} parent=1 // pred_region
      %s92 = ssub.s32 9984, 9984
      %93 = vsyncadd [#allocation12], %s92
      %s94 = sshll.u32 [#allocation11], 4
      %s95 = int_to_ptr.vmem [resolvable:$true] %s94
      %100 = dma.hbm_to_vmem [thread:$0]  %s5, 9984, %s95, [#allocation12], 128, 128, 8
    $region25: #{network_forward.1} parent=1 // pred_fallthru
      _
    // Predicated region
    $region26: #{network_forward.1} parent=1 // pred_check
      _
    $region27: #{network_forward.1} parent=1 // pred_check_branch
      %102 = sbr.rel (0) target = $region29
    $region28: #{network_forward.1} parent=1 // pred_region
      %s104 = ssub.s32 16, 16
      %105 = vsyncadd [#allocation12], %s104
      %s107 = sshll.u32 [#allocation13], 4
      %s108 = int_to_ptr.vmem [resolvable:$true] %s107
      %110 = dma.hbm_to_vmem [thread:$0]  %s6, 16, %s108, [#allocation12]
    $region29: #{network_forward.1} parent=1 // pred_fallthru
      _
    // Predicated region
    $region30: #{network_forward.1} parent=1 // pred_check
      _
    $region31: #{network_forward.1} parent=1 // pred_check_branch
      %112 = sbr.rel (0) target = $region33
    $region32: #{network_forward.1} parent=1 // pred_region
      %s114 = ssub.s32 1152, 1152
      %115 = vsyncadd [#allocation15], %s114
      %s116 = sshll.u32 [#allocation14], 4
      %s117 = int_to_ptr.vmem [resolvable:$true] %s116
      %122 = dma.hbm_to_vmem [thread:$0]  %s7, 1152, %s117, [#allocation15], 128, 128, 8
    $region33: #{network_forward.1} parent=1 // pred_fallthru
      _
    // Predicated region
    $region34: #{network_forward.1} parent=1 // pred_check
      _
    $region35: #{network_forward.1} parent=1 // pred_check_branch
      %124 = sbr.rel (0) target = $region37
    $region36: #{network_forward.1} parent=1 // pred_region
      %s126 = ssub.s32 9216, 9216
      %127 = vsyncadd [#allocation15], %s126
      %s128 = sshll.u32 [#allocation16], 4
      %s129 = int_to_ptr.vmem [resolvable:$true] %s128
      %134 = dma.hbm_to_vmem [thread:$0]  %s8, 9216, %s129, [#allocation15], 256, 256, 16
    $region37: #{network_forward.1} parent=1 // pred_fallthru
      _
    // Predicated region
    $region38: #{network_forward.1} parent=1 // pred_check
      _
    $region39: #{network_forward.1} parent=1 // pred_check_branch
      %136 = sbr.rel (0) target = $region41
    $region40: #{network_forward.1} parent=1 // pred_region
      _
    $region41: #{network_forward.1} parent=1 // pred_fallthru
      _
    // Predicated region
    $region42: #{network_forward.1} parent=1 // pred_check
      _
    $region43: #{network_forward.1} parent=1 // pred_check_branch
      %138 = sbr.rel (0) target = $region45
    $region44: #{network_forward.1} parent=1 // pred_region
      %s140 = ssub.s32 384, 384
      %141 = vsyncadd [#allocation18], %s140
      %s142 = sshll.u32 [#allocation17], 4
      %s143 = int_to_ptr.vmem [resolvable:$true] %s142
      %148 = dma.hbm_to_vmem [thread:$0]  %s10, 384, %s143, [#allocation18], 128, 128, 8
    $region45: #{network_forward.1} parent=1 // pred_fallthru
      _
    // Predicated region
    $region46: #{network_forward.1} parent=1 // pred_check
      _
    $region47: #{network_forward.1} parent=1 // pred_check_branch
      %150 = sbr.rel (0) target = $region49
    $region48: #{network_forward.1} parent=1 // pred_region
      %s152 = ssub.s32 7680, 7680
      %153 = vsyncadd [#allocation18], %s152
      %s154 = sshll.u32 [#allocation19], 4
      %s155 = int_to_ptr.vmem [resolvable:$true] %s154
      %160 = dma.hbm_to_vmem [thread:$0]  %s11, 7680, %s155, [#allocation18], 128, 128, 8
    $region49: #{network_forward.1} parent=1 // pred_fallthru
      _
    // Predicated region
    $region50: #{network_forward.1} parent=1 // pred_check
      _
    $region51: #{network_forward.1} parent=1 // pred_check_branch
      %162 = sbr.rel (0) target = $region53
    $region52: #{network_forward.1} parent=1 // pred_region
      _
    $region53: #{network_forward.1} parent=1 // pred_fallthru
      _
    // Predicated region
    $region54: #{network_forward.1} parent=1 // pred_check
      _
    $region55: #{network_forward.1} parent=1 // pred_check_branch
      %164 = sbr.rel (0) target = $region57
    $region56: #{network_forward.1} parent=1 // pred_region
      _
    $region57: #{network_forward.1} parent=1 // pred_fallthru
      _
    // Predicated region
    $region58: #{network_forward.1} parent=1 // pred_check
      _
    $region59: #{network_forward.1} parent=1 // pred_check_branch
      %166 = sbr.rel (0) target = $region61
    $region60: #{network_forward.1} parent=1 // pred_region
      %s168 = ssub.s32 16384, 16384
      %169 = vsyncadd [#allocation21], %s168
      %s170 = sshll.u32 [#allocation20], 4
      %s171 = int_to_ptr.vmem [resolvable:$true] %s170
      %176 = dma.hbm_to_vmem [thread:$0]  %s14, 16384, %s171, [#allocation21], 512, 512, 32
    $region61: #{network_forward.1} parent=1 // pred_fallthru
      _
    // Predicated region
    $region62: #{network_forward.1} parent=1 // pred_check
      _
    $region63: #{network_forward.1} parent=1 // pred_check_branch
      %178 = sbr.rel (0) target = $region65
    $region64: #{network_forward.1} parent=1 // pred_region
      _
    $region65: #{network_forward.1} parent=1 // pred_fallthru
      _
    // Predicated region
    $region66: #{network_forward.1} parent=1 // pred_check
      _
    $region67: #{network_forward.1} parent=1 // pred_check_branch
      %180 = sbr.rel (0) target = $region69
    $region68: #{network_forward.1} parent=1 // pred_region
      %s182 = ssub.s32 8192, 8192
      %183 = vsyncadd [#allocation21], %s182
      %s184 = sshll.u32 [#allocation22], 4
      %s185 = int_to_ptr.vmem [resolvable:$true] %s184
      %190 = dma.hbm_to_vmem [thread:$0]  %s16, 8192, %s185, [#allocation21], 128, 128, 8
    $region69: #{network_forward.1} parent=1 // pred_fallthru
      _
    // Predicated region
    $region70: #{network_forward.1} parent=1 // pred_check
      _
    $region71: #{network_forward.1} parent=1 // pred_check_branch
      %192 = sbr.rel (0) target = $region73
    $region72: #{network_forward.1} parent=1 // pred_region
      _
    $region73: #{network_forward.1} parent=1 // pred_fallthru
      _
    // Predicated region
    $region74: #{network_forward.1} parent=1 // pred_check
      _
    $region75: #{network_forward.1} parent=1 // pred_check_branch
      %194 = sbr.rel (0) target = $region77
    $region76: #{network_forward.1} parent=1 // pred_region
      %195 = dma.done [#allocation3], 896
    $region77: #{network_forward.1} parent=1 // pred_fallthru
      _
    // Predicated region
    $region78: #{network_forward.1} parent=1 // pred_check
      _
    $region79: #{network_forward.1} parent=1 // pred_check_branch
      %197 = sbr.rel (0) target = $region81
    $region80: #{network_forward.1} parent=1 // pred_region
      %198 = dma.done [#allocation6], 2688
    $region81: #{network_forward.1} parent=1 // pred_fallthru
      _
    // Predicated region
    $region82: #{network_forward.1} parent=1 // pred_check
      _
    $region83: #{network_forward.1} parent=1 // pred_check_branch
      %200 = sbr.rel (0) target = $region85
    $region84: #{network_forward.1} parent=1 // pred_region
      %201 = dma.done [#allocation6], 3072
    $region85: #{network_forward.1} parent=1 // pred_fallthru
      _
    // Predicated region
    $region86: #{network_forward.1} parent=1 // pred_check
      _
    $region87: #{network_forward.1} parent=1 // pred_check_branch
      %203 = sbr.rel (0) target = $region89
    $region88: #{network_forward.1} parent=1 // pred_region
      %204 = dma.done [#allocation9], 32
    $region89: #{network_forward.1} parent=1 // pred_fallthru
      _
    // Predicated region
    $region90: #{network_forward.1} parent=1 // pred_check
      _
    $region91: #{network_forward.1} parent=1 // pred_check_branch
      %206 = sbr.rel (0) target = $region93
    $region92: #{network_forward.1} parent=1 // pred_region
      %207 = dma.done [#allocation9], 1152
    $region93: #{network_forward.1} parent=1 // pred_fallthru
      _
    // Predicated region
    $region94: #{network_forward.1} parent=1 // pred_check
      _
    $region95: #{network_forward.1} parent=1 // pred_check_branch
      %209 = sbr.rel (0) target = $region97
    $region96: #{network_forward.1} parent=1 // pred_region
      %210 = dma.done [#allocation12], 9984
    $region97: #{network_forward.1} parent=1 // pred_fallthru
      _
    // Predicated region
    $region98: #{network_forward.1} parent=1 // pred_check
      _
    $region99: #{network_forward.1} parent=1 // pred_check_branch
      %212 = sbr.rel (0) target = $region101
    $region100: #{network_forward.1} parent=1 // pred_region
      %213 = dma.done [#allocation12], 16
    $region101: #{network_forward.1} parent=1 // pred_fallthru
      _
    // Predicated region
    $region102: #{network_forward.1} parent=1 // pred_check
      _
    $region103: #{network_forward.1} parent=1 // pred_check_branch
      %215 = sbr.rel (0) target = $region105
    $region104: #{network_forward.1} parent=1 // pred_region
      %216 = dma.done [#allocation15], 1152
    $region105: #{network_forward.1} parent=1 // pred_fallthru
      _
    // Predicated region
    $region106: #{network_forward.1} parent=1 // pred_check
      _
    $region107: #{network_forward.1} parent=1 // pred_check_branch
      %218 = sbr.rel (0) target = $region109
    $region108: #{network_forward.1} parent=1 // pred_region
      %219 = dma.done [#allocation15], 9216
    $region109: #{network_forward.1} parent=1 // pred_fallthru
      _
    // Predicated region
    $region110: #{network_forward.1} parent=1 // pred_check
      _
    $region111: #{network_forward.1} parent=1 // pred_check_branch
      %221 = sbr.rel (0) target = $region113
    $region112: #{network_forward.1} parent=1 // pred_region
      %222 = dma.done [#allocation18], 384
    $region113: #{network_forward.1} parent=1 // pred_fallthru
      _
    // Predicated region
    $region114: #{network_forward.1} parent=1 // pred_check
      _
    $region115: #{network_forward.1} parent=1 // pred_check_branch
      %224 = sbr.rel (0) target = $region117
    $region116: #{network_forward.1} parent=1 // pred_region
      %225 = dma.done [#allocation18], 7680
    $region117: #{network_forward.1} parent=1 // pred_fallthru
      _
    // Predicated region
    $region118: #{network_forward.1} parent=1 // pred_check
      _
    $region119: #{network_forward.1} parent=1 // pred_check_branch
      %227 = sbr.rel (0) target = $region121
    $region120: #{network_forward.1} parent=1 // pred_region
      %228 = dma.done [#allocation21], 16384
    $region121: #{network_forward.1} parent=1 // pred_fallthru
      _
    // Predicated region
    $region122: #{network_forward.1} parent=1 // pred_check
      _
    $region123: #{network_forward.1} parent=1 // pred_check_branch
      %230 = sbr.rel (0) target = $region125
    $region124: #{network_forward.1} parent=1 // pred_region
      %231 = dma.done [#allocation21], 8192
    $region125: #{network_forward.1} parent=1 // pred_fallthru
      _
    %v232 = vld [vmem:[#allocation2] sm:$0xff]
    %v233 = vld [vmem:[#allocation2 + $0x8] sm:$0xff]
    %v234 = vld [vmem:[#allocation2 + $0x10] sm:$0xff]
    %v235 = vld [vmem:[#allocation2 + $0x18] sm:$0xff]
    %v236 = vld [vmem:[#allocation2 + $0x20] sm:$0xff]
    %v237 = vld [vmem:[#allocation2 + $0x28] sm:$0xff]
    %v238 = vld [vmem:[#allocation2 + $0x30] sm:$0xff]
    %v239 = vld [vmem:[#allocation5] sm:$0xff]
    %v240 = vld [vmem:[#allocation5 + $0x8] sm:$0xff]
    %v241 = vld [vmem:[#allocation5 + $0x10] sm:$0xff]
    %v242 = vld [vmem:[#allocation5 + $0x18] sm:$0xff]
    %v243 = vld [vmem:[#allocation5 + $0x20] sm:$0xff]
    %v244 = vld [vmem:[#allocation5 + $0x28] sm:$0xff]
    %v245 = vld [vmem:[#allocation5 + $0x30] sm:$0xf]
    %vm246 = vcmask 457728
    %v248 = vsel %vm246, %v239, 0
    %v251 = vsel %vm246, %v240, 0
    %v254 = vsel %vm246, %v241, 0
    %v257 = vsel %vm246, %v242, 0
    %v260 = vsel %vm246, %v243, 0
    %v263 = vsel %vm246, %v244, 0
    %v266 = vsel %vm246, %v245, 0
    %268 = vmatprep.subr.mxu0 0.0
    %269 = vmatpush1.msra.mxu0 0.0
    %270 = vmatprep.subr.mxu0 0.0
    %271 = vmatpush1.msra.mxu0 0.0
    %272 = vmatprep.subr.mxu0 0.0
    %273 = vmatpush1.msra.mxu0 0.0
    %274 = vmatprep.subr.mxu0 0.0
    %275 = vmatpush1.msra.mxu0 0.0
    %276 = vmatprep.subr.mxu0 0.0
    %277 = vmatpush1.msra.mxu0 0.0
    %278 = vmatprep.subr.mxu0 0.0
    %279 = vmatpush1.msra.mxu0 0.0
    %280 = vmatprep.subr.mxu0 0.0
    %281 = vmatpush1.msra.mxu0 0.0
    %282 = vmatprep.subr.mxu0 0.0
    %283 = vmatpush1.msra.mxu0 0.0
    %284 = vmatprep.subr.mxu0 0.0
    %285 = vmatpush1.msra.mxu0 0.0
    %286 = vmatprep.subr.mxu0 0.0
    %287 = vmatpush1.msra.mxu0 %v238
    %288 = vmatprep.subr.mxu0 0.0
    %289 = vmatpush1.msra.mxu0 %v237
    %290 = vmatprep.subr.mxu0 0.0
    %291 = vmatpush1.msra.mxu0 %v236
    %292 = vmatprep.subr.mxu0 0.0
    %293 = vmatpush1.msra.mxu0 %v235
    %294 = vmatprep.subr.mxu0 0.0
    %295 = vmatpush1.msra.mxu0 %v234
    %296 = vmatprep.subr.mxu0 0.0
    %297 = vmatpush1.msra.mxu0 %v233
    %298 = vmatprep.subr.mxu0 0.0
    %299 = vmatpush1.msra.mxu0 %v232
    %300 = vmatprep.subr.mxu0 0.0
    %301 = vmatpush2.msra.mxu0 0.0
    %302 = vmatprep.subr.mxu0 0.0
    %303 = vmatpush2.msra.mxu0 0.0
    %304 = vmatprep.subr.mxu0 0.0
    %305 = vmatpush2.msra.mxu0 0.0
    %306 = vmatprep.subr.mxu0 0.0
    %307 = vmatpush2.msra.mxu0 0.0
    %308 = vmatprep.subr.mxu0 0.0
    %309 = vmatpush2.msra.mxu0 0.0
    %310 = vmatprep.subr.mxu0 0.0
    %311 = vmatpush2.msra.mxu0 0.0
    %312 = vmatprep.subr.mxu0 0.0
    %313 = vmatpush2.msra.mxu0 0.0
    %314 = vmatprep.subr.mxu0 0.0
    %315 = vmatpush2.msra.mxu0 0.0
    %316 = vmatprep.subr.mxu0 0.0
    %317 = vmatpush2.msra.mxu0 0.0
    %318 = vmatprep.subr.mxu0 0.0
    %319 = vmatpush2.msra.mxu0 0.0
    %320 = vmatprep.subr.mxu0 0.0
    %321 = vmatpush2.msra.mxu0 0.0
    %322 = vmatprep.subr.mxu0 0.0
    %323 = vmatpush2.msra.mxu0 0.0
    %324 = vmatprep.subr.mxu0 0.0
    %325 = vmatpush2.msra.mxu0 0.0
    %326 = vmatprep.subr.mxu0 0.0
    %327 = vmatpush2.msra.mxu0 0.0
    %328 = vmatprep.subr.mxu0 0.0
    %329 = vmatpush2.msra.mxu0 0.0
    %330 = vmatprep.subr.mxu0 0.0
    %331 = vmatpush2.msra.mxu0 0.0
    %332 = vmatprep.mubr.f32.mxu0 0.0
    %333 = vmatmul.mubr.f32.gmra.mxu0 %v248
    %v334 = vpop.f32.mrf.mxu0
    %v335 = vadd.f32 0.0, %v334
    %v336 = vpop.f32.mrf.mxu0
    %337 = vmatprep.mubr.f32.mxu0 0.0
    %338 = vmatmul.mubr.f32.gmra.mxu0 %v251
    %v339 = vpop.f32.mrf.mxu0
    %v340 = vadd.f32 0.0, %v339
    %v341 = vpop.f32.mrf.mxu0
    %342 = vmatprep.mubr.f32.mxu0 0.0
    %343 = vmatmul.mubr.f32.gmra.mxu0 %v254
    %v344 = vpop.f32.mrf.mxu0
    %v345 = vadd.f32 0.0, %v344
    %v346 = vpop.f32.mrf.mxu0
    %347 = vmatprep.mubr.f32.mxu0 0.0
    %348 = vmatmul.mubr.f32.gmra.mxu0 %v257
    %v349 = vpop.f32.mrf.mxu0
    %v350 = vadd.f32 0.0, %v349
    %v351 = vpop.f32.mrf.mxu0
    %352 = vmatprep.mubr.f32.mxu0 0.0
    %353 = vmatmul.mubr.f32.gmra.mxu0 %v260
    %v354 = vpop.f32.mrf.mxu0
    %v355 = vadd.f32 0.0, %v354
    %v356 = vpop.f32.mrf.mxu0
    %357 = vmatprep.mubr.f32.mxu0 0.0
    %358 = vmatmul.mubr.f32.gmra.mxu0 %v263
    %v359 = vpop.f32.mrf.mxu0
    %v360 = vadd.f32 0.0, %v359
    %v361 = vpop.f32.mrf.mxu0
    %362 = vmatprep.mubr.f32.mxu0 0.0
    %363 = vmatmul.mubr.f32.gmra.mxu0 %v266
    %v364 = vpop.f32.mrf.mxu0
    %v365 = vadd.f32 0.0, %v364
    %v366 = vpop.f32.mrf.mxu0
    %367 = vdwg.mxu0
    %v368 = vld [vmem:[#allocation7] sm:$0xff]
    %v369 = vld [vmem:[#allocation7 + $0x8] sm:$0xff]
    %v370 = vld [vmem:[#allocation7 + $0x10] sm:$0xff]
    %v371 = vld [vmem:[#allocation7 + $0x18] sm:$0xff]
    %v372 = vld [vmem:[#allocation7 + $0x20] sm:$0xff]
    %v373 = vld [vmem:[#allocation7 + $0x28] sm:$0xff]
    %v374 = vld [vmem:[#allocation7 + $0x30] sm:$0xf]
    %v375 = vld [vmem:[#allocation7 + $0x38] sm:$0xf]
    %s376 = scalar_lea.vmem [#allocation5], 56
    %v377 = vld [vmem:[%s376] sm:$0xff]
    %v378 = vld [vmem:[%s376 + $0x8] sm:$0xff]
    %v379 = vld [vmem:[%s376 + $0x10] sm:$0xff]
    %v380 = vld [vmem:[%s376 + $0x18] sm:$0xff]
    %v381 = vld [vmem:[%s376 + $0x20] sm:$0xff]
    %v382 = vld [vmem:[%s376 + $0x28] sm:$0xff]
    %v383 = vld [vmem:[%s376 + $0x30] sm:$0xf]
    %v385 = vsel %vm246, %v377, 0
    %v388 = vsel %vm246, %v378, 0
    %v391 = vsel %vm246, %v379, 0
    %v394 = vsel %vm246, %v380, 0
    %v397 = vsel %vm246, %v381, 0
    %v400 = vsel %vm246, %v382, 0
    %v403 = vsel %vm246, %v383, 0
    %405 = vmatprep.subr.mxu0 0.0
    %406 = vmatpush1.msra.mxu0 0.0
    %407 = vmatprep.subr.mxu0 0.0
    %408 = vmatpush1.msra.mxu0 0.0
    %409 = vmatprep.subr.mxu0 0.0
    %410 = vmatpush1.msra.mxu0 0.0
    %411 = vmatprep.subr.mxu0 0.0
    %412 = vmatpush1.msra.mxu0 0.0
    %413 = vmatprep.subr.mxu0 0.0
    %414 = vmatpush1.msra.mxu0 0.0
    %415 = vmatprep.subr.mxu0 0.0
    %416 = vmatpush1.msra.mxu0 0.0
    %417 = vmatprep.subr.mxu0 0.0
    %418 = vmatpush1.msra.mxu0 0.0
    %419 = vmatprep.subr.mxu0 0.0
    %420 = vmatpush1.msra.mxu0 0.0
    %421 = vmatprep.subr.mxu0 0.0
    %422 = vmatpush1.msra.mxu0 0.0
    %423 = vmatprep.subr.mxu0 0.0
    %424 = vmatpush1.msra.mxu0 %v238
    %425 = vmatprep.subr.mxu0 0.0
    %426 = vmatpush1.msra.mxu0 %v237
    %427 = vmatprep.subr.mxu0 0.0
    %428 = vmatpush1.msra.mxu0 %v236
    %429 = vmatprep.subr.mxu0 0.0
    %430 = vmatpush1.msra.mxu0 %v235
    %431 = vmatprep.subr.mxu0 0.0
    %432 = vmatpush1.msra.mxu0 %v234
    %433 = vmatprep.subr.mxu0 0.0
    %434 = vmatpush1.msra.mxu0 %v233
    %435 = vmatprep.subr.mxu0 0.0
    %436 = vmatpush1.msra.mxu0 %v232
    %437 = vmatprep.subr.mxu0 0.0
    %438 = vmatpush2.msra.mxu0 0.0
    %439 = vmatprep.subr.mxu0 0.0
    %440 = vmatpush2.msra.mxu0 0.0
    %441 = vmatprep.subr.mxu0 0.0
    %442 = vmatpush2.msra.mxu0 0.0
    %443 = vmatprep.subr.mxu0 0.0
    %444 = vmatpush2.msra.mxu0 0.0
    %445 = vmatprep.subr.mxu0 0.0
    %446 = vmatpush2.msra.mxu0 0.0
    %447 = vmatprep.subr.mxu0 0.0
    %448 = vmatpush2.msra.mxu0 0.0
    %449 = vmatprep.subr.mxu0 0.0
    %450 = vmatpush2.msra.mxu0 0.0
    %451 = vmatprep.subr.mxu0 0.0
    %452 = vmatpush2.msra.mxu0 0.0
    %453 = vmatprep.subr.mxu0 0.0
    %454 = vmatpush2.msra.mxu0 0.0
    %455 = vmatprep.subr.mxu0 0.0
    %456 = vmatpush2.msra.mxu0 0.0
    %457 = vmatprep.subr.mxu0 0.0
    %458 = vmatpush2.msra.mxu0 0.0
    %459 = vmatprep.subr.mxu0 0.0
    %460 = vmatpush2.msra.mxu0 0.0
    %461 = vmatprep.subr.mxu0 0.0
    %462 = vmatpush2.msra.mxu0 0.0
    %463 = vmatprep.subr.mxu0 0.0
    %464 = vmatpush2.msra.mxu0 0.0
    %465 = vmatprep.subr.mxu0 0.0
    %466 = vmatpush2.msra.mxu0 0.0
    %467 = vmatprep.subr.mxu0 0.0
    %468 = vmatpush2.msra.mxu0 0.0
    %469 = vmatprep.mubr.f32.mxu0 0.0
    %470 = vmatmul.mubr.f32.gmra.mxu0 %v385
    %v471 = vpop.f32.mrf.mxu0
    %v472 = vadd.f32 0.0, %v471
    %v473 = vpop.f32.mrf.mxu0
    %474 = vmatprep.mubr.f32.mxu0 0.0
    %475 = vmatmul.mubr.f32.gmra.mxu0 %v388
    %v476 = vpop.f32.mrf.mxu0
    %v477 = vadd.f32 0.0, %v476
    %v478 = vpop.f32.mrf.mxu0
    %479 = vmatprep.mubr.f32.mxu0 0.0
    %480 = vmatmul.mubr.f32.gmra.mxu0 %v391
    %v481 = vpop.f32.mrf.mxu0
    %v482 = vadd.f32 0.0, %v481
    %v483 = vpop.f32.mrf.mxu0
    %484 = vmatprep.mubr.f32.mxu0 0.0
    %485 = vmatmul.mubr.f32.gmra.mxu0 %v394
    %v486 = vpop.f32.mrf.mxu0
    %v487 = vadd.f32 0.0, %v486
    %v488 = vpop.f32.mrf.mxu0
    %489 = vmatprep.mubr.f32.mxu0 0.0
    %490 = vmatmul.mubr.f32.gmra.mxu0 %v397
    %v491 = vpop.f32.mrf.mxu0
    %v492 = vadd.f32 0.0, %v491
    %v493 = vpop.f32.mrf.mxu0
    %494 = vmatprep.mubr.f32.mxu0 0.0
    %495 = vmatmul.mubr.f32.gmra.mxu0 %v400
    %v496 = vpop.f32.mrf.mxu0
    %v497 = vadd.f32 0.0, %v496
    %v498 = vpop.f32.mrf.mxu0
    %499 = vmatprep.mubr.f32.mxu0 0.0
    %500 = vmatmul.mubr.f32.gmra.mxu0 %v403
    %v501 = vpop.f32.mrf.mxu0
    %v502 = vadd.f32 0.0, %v501
    %v503 = vpop.f32.mrf.mxu0
    %504 = vdwg.mxu0
    %s505 = scalar_lea.vmem [#allocation7], 64
    %v506 = vld [vmem:[%s505] sm:$0xff]
    %v507 = vld [vmem:[%s505 + $0x8] sm:$0xff]
    %v508 = vld [vmem:[%s505 + $0x10] sm:$0xff]
    %v509 = vld [vmem:[%s505 + $0x18] sm:$0xff]
    %v510 = vld [vmem:[%s505 + $0x20] sm:$0xff]
    %v511 = vld [vmem:[%s505 + $0x28] sm:$0xff]
    %v512 = vld [vmem:[%s505 + $0x30] sm:$0xf]
    %v513 = vld [vmem:[%s505 + $0x38] sm:$0xf]
    %vm514 = vcmask 228352
    %v516 = vsel %vm514, %v472, 0
    %v519 = vsel %vm514, %v477, 0
    %v522 = vsel %vm514, %v482, 0
    %v525 = vsel %vm514, %v487, 0
    %v528 = vsel %vm514, %v492, 0
    %v531 = vsel %vm514, %v497, 0
    %v534 = vsel %vm514, %v502, 0
    %vm536 = vcmask 1043456
    %v538 = vsel %vm536, %v512, 0
    %v541 = vsel %vm536, %v513, 0
    %543 = vmatprep.subr.mxu0 0.0
    %544 = vmatpush1.msra.mxu0 0.0
    %545 = vmatprep.subr.mxu0 0.0
    %546 = vmatpush1.msra.mxu0 0.0
    %547 = vmatprep.subr.mxu0 0.0
    %548 = vmatpush1.msra.mxu0 0.0
    %549 = vmatprep.subr.mxu0 0.0
    %550 = vmatpush1.msra.mxu0 0.0
    %551 = vmatprep.subr.mxu0 0.0
    %552 = vmatpush1.msra.mxu0 0.0
    %553 = vmatprep.subr.mxu0 0.0
    %554 = vmatpush1.msra.mxu0 0.0
    %555 = vmatprep.subr.mxu0 0.0
    %556 = vmatpush1.msra.mxu0 0.0
    %557 = vmatprep.subr.mxu0 0.0
    %558 = vmatpush1.msra.mxu0 0.0
    %559 = vmatprep.subr.mxu0 0.0
    %560 = vmatpush1.msra.mxu0 0.0
    %561 = vmatprep.subr.mxu0 0.0
    %562 = vmatpush1.msra.mxu0 0.0
    %563 = vmatprep.subr.mxu0 0.0
    %564 = vmatpush1.msra.mxu0 0.0
    %565 = vmatprep.subr.mxu0 0.0
    %566 = vmatpush1.msra.mxu0 0.0
    %567 = vmatprep.subr.mxu0 %v541
    %568 = vmatpush1.msra.mxu0 %v538
    %569 = vmatprep.subr.mxu0 %v511
    %570 = vmatpush1.msra.mxu0 %v510
    %571 = vmatprep.subr.mxu0 %v509
    %572 = vmatpush1.msra.mxu0 %v508
    %573 = vmatprep.subr.mxu0 %v507
    %574 = vmatpush1.msra.mxu0 %v506
    %575 = vmatprep.subr.mxu0 0.0
    %576 = vmatpush2.msra.mxu0 0.0
    %577 = vmatprep.subr.mxu0 0.0
    %578 = vmatpush2.msra.mxu0 0.0
    %579 = vmatprep.subr.mxu0 0.0
    %580 = vmatpush2.msra.mxu0 0.0
    %581 = vmatprep.subr.mxu0 0.0
    %582 = vmatpush2.msra.mxu0 0.0
    %583 = vmatprep.subr.mxu0 0.0
    %584 = vmatpush2.msra.mxu0 0.0
    %585 = vmatprep.subr.mxu0 0.0
    %586 = vmatpush2.msra.mxu0 0.0
    %587 = vmatprep.subr.mxu0 0.0
    %588 = vmatpush2.msra.mxu0 0.0
    %589 = vmatprep.subr.mxu0 0.0
    %590 = vmatpush2.msra.mxu0 0.0
    %591 = vmatprep.subr.mxu0 0.0
    %592 = vmatpush2.msra.mxu0 0.0
    %593 = vmatprep.subr.mxu0 0.0
    %594 = vmatpush2.msra.mxu0 0.0
    %595 = vmatprep.subr.mxu0 0.0
    %596 = vmatpush2.msra.mxu0 0.0
    %597 = vmatprep.subr.mxu0 0.0
    %598 = vmatpush2.msra.mxu0 0.0
    %599 = vmatprep.subr.mxu0 0.0
    %600 = vmatpush2.msra.mxu0 0.0
    %601 = vmatprep.subr.mxu0 0.0
    %602 = vmatpush2.msra.mxu0 0.0
    %603 = vmatprep.subr.mxu0 0.0
    %604 = vmatpush2.msra.mxu0 0.0
    %605 = vmatprep.subr.mxu0 0.0
    %606 = vmatpush2.msra.mxu0 0.0
    %607 = vmatprep.mubr.f32.mxu0 0.0
    %608 = vmatmul.mubr.f32.gmra.mxu0 %v516
    %v609 = vpop.f32.mrf.mxu0
    %v610 = vadd.f32 0.0, %v609
    %v611 = vpop.f32.mrf.mxu0
    %v612 = vadd.f32 0.0, %v611
    %613 = vmatprep.mubr.f32.mxu0 0.0
    %614 = vmatmul.mubr.f32.gmra.mxu0 %v519
    %v615 = vpop.f32.mrf.mxu0
    %v616 = vadd.f32 0.0, %v615
    %v617 = vpop.f32.mrf.mxu0
    %v618 = vadd.f32 0.0, %v617
    %619 = vmatprep.mubr.f32.mxu0 0.0
    %620 = vmatmul.mubr.f32.gmra.mxu0 %v522
    %v621 = vpop.f32.mrf.mxu0
    %v622 = vadd.f32 0.0, %v621
    %v623 = vpop.f32.mrf.mxu0
    %v624 = vadd.f32 0.0, %v623
    %625 = vmatprep.mubr.f32.mxu0 0.0
    %626 = vmatmul.mubr.f32.gmra.mxu0 %v525
    %v627 = vpop.f32.mrf.mxu0
    %v628 = vadd.f32 0.0, %v627
    %v629 = vpop.f32.mrf.mxu0
    %v630 = vadd.f32 0.0, %v629
    %631 = vmatprep.mubr.f32.mxu0 0.0
    %632 = vmatmul.mubr.f32.gmra.mxu0 %v528
    %v633 = vpop.f32.mrf.mxu0
    %v634 = vadd.f32 0.0, %v633
    %v635 = vpop.f32.mrf.mxu0
    %v636 = vadd.f32 0.0, %v635
    %637 = vmatprep.mubr.f32.mxu0 0.0
    %638 = vmatmul.mubr.f32.gmra.mxu0 %v531
    %v639 = vpop.f32.mrf.mxu0
    %v640 = vadd.f32 0.0, %v639
    %v641 = vpop.f32.mrf.mxu0
    %v642 = vadd.f32 0.0, %v641
    %643 = vmatprep.mubr.f32.mxu0 0.0
    %644 = vmatmul.mubr.f32.gmra.mxu0 %v534
    %v645 = vpop.f32.mrf.mxu0
    %v646 = vadd.f32 0.0, %v645
    %v647 = vpop.f32.mrf.mxu0
    %v648 = vadd.f32 0.0, %v647
    %649 = vdwg.mxu0
    %v651 = vsel %vm514, %v335, 0
    %v654 = vsel %vm514, %v340, 0
    %v657 = vsel %vm514, %v345, 0
    %v660 = vsel %vm514, %v350, 0
    %v663 = vsel %vm514, %v355, 0
    %v666 = vsel %vm514, %v360, 0
    %v669 = vsel %vm514, %v365, 0
    %v672 = vsel %vm536, %v374, 0
    %v675 = vsel %vm536, %v375, 0
    %677 = vmatprep.subr.mxu0 0.0
    %678 = vmatpush1.msra.mxu0 0.0
    %679 = vmatprep.subr.mxu0 0.0
    %680 = vmatpush1.msra.mxu0 0.0
    %681 = vmatprep.subr.mxu0 0.0
    %682 = vmatpush1.msra.mxu0 0.0
    %683 = vmatprep.subr.mxu0 0.0
    %684 = vmatpush1.msra.mxu0 0.0
    %685 = vmatprep.subr.mxu0 0.0
    %686 = vmatpush1.msra.mxu0 0.0
    %687 = vmatprep.subr.mxu0 0.0
    %688 = vmatpush1.msra.mxu0 0.0
    %689 = vmatprep.subr.mxu0 0.0
    %690 = vmatpush1.msra.mxu0 0.0
    %691 = vmatprep.subr.mxu0 0.0
    %692 = vmatpush1.msra.mxu0 0.0
    %693 = vmatprep.subr.mxu0 0.0
    %694 = vmatpush1.msra.mxu0 0.0
    %695 = vmatprep.subr.mxu0 0.0
    %696 = vmatpush1.msra.mxu0 0.0
    %697 = vmatprep.subr.mxu0 0.0
    %698 = vmatpush1.msra.mxu0 0.0
    %699 = vmatprep.subr.mxu0 0.0
    %700 = vmatpush1.msra.mxu0 0.0
    %701 = vmatprep.subr.mxu0 %v675
    %702 = vmatpush1.msra.mxu0 %v672
    %703 = vmatprep.subr.mxu0 %v373
    %704 = vmatpush1.msra.mxu0 %v372
    %705 = vmatprep.subr.mxu0 %v371
    %706 = vmatpush1.msra.mxu0 %v370
    %707 = vmatprep.subr.mxu0 %v369
    %708 = vmatpush1.msra.mxu0 %v368
    %709 = vmatprep.subr.mxu0 0.0
    %710 = vmatpush2.msra.mxu0 0.0
    %711 = vmatprep.subr.mxu0 0.0
    %712 = vmatpush2.msra.mxu0 0.0
    %713 = vmatprep.subr.mxu0 0.0
    %714 = vmatpush2.msra.mxu0 0.0
    %715 = vmatprep.subr.mxu0 0.0
    %716 = vmatpush2.msra.mxu0 0.0
    %717 = vmatprep.subr.mxu0 0.0
    %718 = vmatpush2.msra.mxu0 0.0
    %719 = vmatprep.subr.mxu0 0.0
    %720 = vmatpush2.msra.mxu0 0.0
    %721 = vmatprep.subr.mxu0 0.0
    %722 = vmatpush2.msra.mxu0 0.0
    %723 = vmatprep.subr.mxu0 0.0
    %724 = vmatpush2.msra.mxu0 0.0
    %725 = vmatprep.subr.mxu0 0.0
    %726 = vmatpush2.msra.mxu0 0.0
    %727 = vmatprep.subr.mxu0 0.0
    %728 = vmatpush2.msra.mxu0 0.0
    %729 = vmatprep.subr.mxu0 0.0
    %730 = vmatpush2.msra.mxu0 0.0
    %731 = vmatprep.subr.mxu0 0.0
    %732 = vmatpush2.msra.mxu0 0.0
    %733 = vmatprep.subr.mxu0 0.0
    %734 = vmatpush2.msra.mxu0 0.0
    %735 = vmatprep.subr.mxu0 0.0
    %736 = vmatpush2.msra.mxu0 0.0
    %737 = vmatprep.subr.mxu0 0.0
    %738 = vmatpush2.msra.mxu0 0.0
    %739 = vmatprep.subr.mxu0 0.0
    %740 = vmatpush2.msra.mxu0 0.0
    %741 = vmatprep.mubr.f32.mxu0 0.0
    %742 = vmatmul.mubr.f32.gmra.mxu0 %v651
    %v743 = vpop.f32.mrf.mxu0
    %v744 = vadd.f32 %v610, %v743
    %v745 = vpop.f32.mrf.mxu0
    %v746 = vadd.f32 %v612, %v745
    %747 = vmatprep.mubr.f32.mxu0 0.0
    %748 = vmatmul.mubr.f32.gmra.mxu0 %v654
    %v749 = vpop.f32.mrf.mxu0
    %v750 = vadd.f32 %v616, %v749
    %v751 = vpop.f32.mrf.mxu0
    %v752 = vadd.f32 %v618, %v751
    %753 = vmatprep.mubr.f32.mxu0 0.0
    %754 = vmatmul.mubr.f32.gmra.mxu0 %v657
    %v755 = vpop.f32.mrf.mxu0
    %v756 = vadd.f32 %v622, %v755
    %v757 = vpop.f32.mrf.mxu0
    %v758 = vadd.f32 %v624, %v757
    %759 = vmatprep.mubr.f32.mxu0 0.0
    %760 = vmatmul.mubr.f32.gmra.mxu0 %v660
    %v761 = vpop.f32.mrf.mxu0
    %v762 = vadd.f32 %v628, %v761
    %v763 = vpop.f32.mrf.mxu0
    %v764 = vadd.f32 %v630, %v763
    %765 = vmatprep.mubr.f32.mxu0 0.0
    %766 = vmatmul.mubr.f32.gmra.mxu0 %v663
    %v767 = vpop.f32.mrf.mxu0
    %v768 = vadd.f32 %v634, %v767
    %v769 = vpop.f32.mrf.mxu0
    %v770 = vadd.f32 %v636, %v769
    %771 = vmatprep.mubr.f32.mxu0 0.0
    %772 = vmatmul.mubr.f32.gmra.mxu0 %v666
    %v773 = vpop.f32.mrf.mxu0
    %v774 = vadd.f32 %v640, %v773
    %v775 = vpop.f32.mrf.mxu0
    %v776 = vadd.f32 %v642, %v775
    %777 = vmatprep.mubr.f32.mxu0 0.0
    %778 = vmatmul.mubr.f32.gmra.mxu0 %v669
    %v779 = vpop.f32.mrf.mxu0
    %v780 = vadd.f32 %v646, %v779
    %v781 = vpop.f32.mrf.mxu0
    %v782 = vadd.f32 %v648, %v781
    %783 = vdwg.mxu0
    %s784 = scalar_lea.vmem [#allocation5], 112
    %v785 = vld [vmem:[%s784] sm:$0xff]
    %v786 = vld [vmem:[%s784 + $0x8] sm:$0xff]
    %v787 = vld [vmem:[%s784 + $0x10] sm:$0xff]
    %v788 = vld [vmem:[%s784 + $0x18] sm:$0xff]
    %v789 = vld [vmem:[%s784 + $0x20] sm:$0xff]
    %v790 = vld [vmem:[%s784 + $0x28] sm:$0xff]
    %v791 = vld [vmem:[%s784 + $0x30] sm:$0xf]
    %v793 = vsel %vm246, %v785, 0
    %v796 = vsel %vm246, %v786, 0
    %v799 = vsel %vm246, %v787, 0
    %v802 = vsel %vm246, %v788, 0
    %v805 = vsel %vm246, %v789, 0
    %v808 = vsel %vm246, %v790, 0
    %v811 = vsel %vm246, %v791, 0
    %813 = vmatprep.subr.mxu0 0.0
    %814 = vmatpush1.msra.mxu0 0.0
    %815 = vmatprep.subr.mxu0 0.0
    %816 = vmatpush1.msra.mxu0 0.0
    %817 = vmatprep.subr.mxu0 0.0
    %818 = vmatpush1.msra.mxu0 0.0
    %819 = vmatprep.subr.mxu0 0.0
    %820 = vmatpush1.msra.mxu0 0.0
    %821 = vmatprep.subr.mxu0 0.0
    %822 = vmatpush1.msra.mxu0 0.0
    %823 = vmatprep.subr.mxu0 0.0
    %824 = vmatpush1.msra.mxu0 0.0
    %825 = vmatprep.subr.mxu0 0.0
    %826 = vmatpush1.msra.mxu0 0.0
    %827 = vmatprep.subr.mxu0 0.0
    %828 = vmatpush1.msra.mxu0 0.0
    %829 = vmatprep.subr.mxu0 0.0
    %830 = vmatpush1.msra.mxu0 0.0
    %831 = vmatprep.subr.mxu0 0.0
    %832 = vmatpush1.msra.mxu0 %v238
    %833 = vmatprep.subr.mxu0 0.0
    %834 = vmatpush1.msra.mxu0 %v237
    %835 = vmatprep.subr.mxu0 0.0
    %836 = vmatpush1.msra.mxu0 %v236
    %837 = vmatprep.subr.mxu0 0.0
    %838 = vmatpush1.msra.mxu0 %v235
    %839 = vmatprep.subr.mxu0 0.0
    %840 = vmatpush1.msra.mxu0 %v234
    %841 = vmatprep.subr.mxu0 0.0
    %842 = vmatpush1.msra.mxu0 %v233
    %843 = vmatprep.subr.mxu0 0.0
    %844 = vmatpush1.msra.mxu0 %v232
    %845 = vmatprep.subr.mxu0 0.0
    %846 = vmatpush2.msra.mxu0 0.0
    %847 = vmatprep.subr.mxu0 0.0
    %848 = vmatpush2.msra.mxu0 0.0
    %849 = vmatprep.subr.mxu0 0.0
    %850 = vmatpush2.msra.mxu0 0.0
    %851 = vmatprep.subr.mxu0 0.0
    %852 = vmatpush2.msra.mxu0 0.0
    %853 = vmatprep.subr.mxu0 0.0
    %854 = vmatpush2.msra.mxu0 0.0
    %855 = vmatprep.subr.mxu0 0.0
    %856 = vmatpush2.msra.mxu0 0.0
    %857 = vmatprep.subr.mxu0 0.0
    %858 = vmatpush2.msra.mxu0 0.0
    %859 = vmatprep.subr.mxu0 0.0
    %860 = vmatpush2.msra.mxu0 0.0
    %861 = vmatprep.subr.mxu0 0.0
    %862 = vmatpush2.msra.mxu0 0.0
    %863 = vmatprep.subr.mxu0 0.0
    %864 = vmatpush2.msra.mxu0 0.0
    %865 = vmatprep.subr.mxu0 0.0
    %866 = vmatpush2.msra.mxu0 0.0
    %867 = vmatprep.subr.mxu0 0.0
    %868 = vmatpush2.msra.mxu0 0.0
    %869 = vmatprep.subr.mxu0 0.0
    %870 = vmatpush2.msra.mxu0 0.0
    %871 = vmatprep.subr.mxu0 0.0
    %872 = vmatpush2.msra.mxu0 0.0
    %873 = vmatprep.subr.mxu0 0.0
    %874 = vmatpush2.msra.mxu0 0.0
    %875 = vmatprep.subr.mxu0 0.0
    %876 = vmatpush2.msra.mxu0 0.0
    %877 = vmatprep.mubr.f32.mxu0 0.0
    %878 = vmatmul.mubr.f32.gmra.mxu0 %v793
    %v879 = vpop.f32.mrf.mxu0
    %v880 = vadd.f32 0.0, %v879
    %v881 = vpop.f32.mrf.mxu0
    %882 = vmatprep.mubr.f32.mxu0 0.0
    %883 = vmatmul.mubr.f32.gmra.mxu0 %v796
    %v884 = vpop.f32.mrf.mxu0
    %v885 = vadd.f32 0.0, %v884
    %v886 = vpop.f32.mrf.mxu0
    %887 = vmatprep.mubr.f32.mxu0 0.0
    %888 = vmatmul.mubr.f32.gmra.mxu0 %v799
    %v889 = vpop.f32.mrf.mxu0
    %v890 = vadd.f32 0.0, %v889
    %v891 = vpop.f32.mrf.mxu0
    %892 = vmatprep.mubr.f32.mxu0 0.0
    %893 = vmatmul.mubr.f32.gmra.mxu0 %v802
    %v894 = vpop.f32.mrf.mxu0
    %v895 = vadd.f32 0.0, %v894
    %v896 = vpop.f32.mrf.mxu0
    %897 = vmatprep.mubr.f32.mxu0 0.0
    %898 = vmatmul.mubr.f32.gmra.mxu0 %v805
    %v899 = vpop.f32.mrf.mxu0
    %v900 = vadd.f32 0.0, %v899
    %v901 = vpop.f32.mrf.mxu0
    %902 = vmatprep.mubr.f32.mxu0 0.0
    %903 = vmatmul.mubr.f32.gmra.mxu0 %v808
    %v904 = vpop.f32.mrf.mxu0
    %v905 = vadd.f32 0.0, %v904
    %v906 = vpop.f32.mrf.mxu0
    %907 = vmatprep.mubr.f32.mxu0 0.0
    %908 = vmatmul.mubr.f32.gmra.mxu0 %v811
    %v909 = vpop.f32.mrf.mxu0
    %v910 = vadd.f32 0.0, %v909
    %v911 = vpop.f32.mrf.mxu0
    %912 = vdwg.mxu0
    %s913 = scalar_lea.vmem [#allocation7], 128
    %v914 = vld [vmem:[%s913] sm:$0xff]
    %v915 = vld [vmem:[%s913 + $0x8] sm:$0xff]
    %v916 = vld [vmem:[%s913 + $0x10] sm:$0xff]
    %v917 = vld [vmem:[%s913 + $0x18] sm:$0xff]
    %v918 = vld [vmem:[%s913 + $0x20] sm:$0xff]
    %v919 = vld [vmem:[%s913 + $0x28] sm:$0xff]
    %v920 = vld [vmem:[%s913 + $0x30] sm:$0xf]
    %v921 = vld [vmem:[%s913 + $0x38] sm:$0xf]
    %v923 = vsel %vm514, %v880, 0
    %v926 = vsel %vm514, %v885, 0
    %v929 = vsel %vm514, %v890, 0
    %v932 = vsel %vm514, %v895, 0
    %v935 = vsel %vm514, %v900, 0
    %v938 = vsel %vm514, %v905, 0
    %v941 = vsel %vm514, %v910, 0
    %v944 = vsel %vm536, %v920, 0
    %v947 = vsel %vm536, %v921, 0
    %949 = vmatprep.subr.mxu0 0.0
    %950 = vmatpush1.msra.mxu0 0.0
    %951 = vmatprep.subr.mxu0 0.0
    %952 = vmatpush1.msra.mxu0 0.0
    %953 = vmatprep.subr.mxu0 0.0
    %954 = vmatpush1.msra.mxu0 0.0
    %955 = vmatprep.subr.mxu0 0.0
    %956 = vmatpush1.msra.mxu0 0.0
    %957 = vmatprep.subr.mxu0 0.0
    %958 = vmatpush1.msra.mxu0 0.0
    %959 = vmatprep.subr.mxu0 0.0
    %960 = vmatpush1.msra.mxu0 0.0
    %961 = vmatprep.subr.mxu0 0.0
    %962 = vmatpush1.msra.mxu0 0.0
    %963 = vmatprep.subr.mxu0 0.0
    %964 = vmatpush1.msra.mxu0 0.0
    %965 = vmatprep.subr.mxu0 0.0
    %966 = vmatpush1.msra.mxu0 0.0
    %967 = vmatprep.subr.mxu0 0.0
    %968 = vmatpush1.msra.mxu0 0.0
    %969 = vmatprep.subr.mxu0 0.0
    %970 = vmatpush1.msra.mxu0 0.0
    %971 = vmatprep.subr.mxu0 0.0
    %972 = vmatpush1.msra.mxu0 0.0
    %973 = vmatprep.subr.mxu0 %v947
    %974 = vmatpush1.msra.mxu0 %v944
    %975 = vmatprep.subr.mxu0 %v919
    %976 = vmatpush1.msra.mxu0 %v918
    %977 = vmatprep.subr.mxu0 %v917
    %978 = vmatpush1.msra.mxu0 %v916
    %979 = vmatprep.subr.mxu0 %v915
    %980 = vmatpush1.msra.mxu0 %v914
    %981 = vmatprep.subr.mxu0 0.0
    %982 = vmatpush2.msra.mxu0 0.0
    %983 = vmatprep.subr.mxu0 0.0
    %984 = vmatpush2.msra.mxu0 0.0
    %985 = vmatprep.subr.mxu0 0.0
    %986 = vmatpush2.msra.mxu0 0.0
    %987 = vmatprep.subr.mxu0 0.0
    %988 = vmatpush2.msra.mxu0 0.0
    %989 = vmatprep.subr.mxu0 0.0
    %990 = vmatpush2.msra.mxu0 0.0
    %991 = vmatprep.subr.mxu0 0.0
    %992 = vmatpush2.msra.mxu0 0.0
    %993 = vmatprep.subr.mxu0 0.0
    %994 = vmatpush2.msra.mxu0 0.0
    %995 = vmatprep.subr.mxu0 0.0
    %996 = vmatpush2.msra.mxu0 0.0
    %997 = vmatprep.subr.mxu0 0.0
    %998 = vmatpush2.msra.mxu0 0.0
    %999 = vmatprep.subr.mxu0 0.0
    %1000 = vmatpush2.msra.mxu0 0.0
    %1001 = vmatprep.subr.mxu0 0.0
    %1002 = vmatpush2.msra.mxu0 0.0
    %1003 = vmatprep.subr.mxu0 0.0
    %1004 = vmatpush2.msra.mxu0 0.0
    %1005 = vmatprep.subr.mxu0 0.0
    %1006 = vmatpush2.msra.mxu0 0.0
    %1007 = vmatprep.subr.mxu0 0.0
    %1008 = vmatpush2.msra.mxu0 0.0
    %1009 = vmatprep.subr.mxu0 0.0
    %1010 = vmatpush2.msra.mxu0 0.0
    %1011 = vmatprep.subr.mxu0 0.0
    %1012 = vmatpush2.msra.mxu0 0.0
    %1013 = vmatprep.mubr.f32.mxu0 0.0
    %1014 = vmatmul.mubr.f32.gmra.mxu0 %v923
    %v1015 = vpop.f32.mrf.mxu0
    %v1016 = vadd.f32 0.0, %v1015
    %v1017 = vpop.f32.mrf.mxu0
    %v1018 = vadd.f32 0.0, %v1017
    %1019 = vmatprep.mubr.f32.mxu0 0.0
    %1020 = vmatmul.mubr.f32.gmra.mxu0 %v926
    %v1021 = vpop.f32.mrf.mxu0
    %v1022 = vadd.f32 0.0, %v1021
    %v1023 = vpop.f32.mrf.mxu0
    %v1024 = vadd.f32 0.0, %v1023
    %1025 = vmatprep.mubr.f32.mxu0 0.0
    %1026 = vmatmul.mubr.f32.gmra.mxu0 %v929
    %v1027 = vpop.f32.mrf.mxu0
    %v1028 = vadd.f32 0.0, %v1027
    %v1029 = vpop.f32.mrf.mxu0
    %v1030 = vadd.f32 0.0, %v1029
    %1031 = vmatprep.mubr.f32.mxu0 0.0
    %1032 = vmatmul.mubr.f32.gmra.mxu0 %v932
    %v1033 = vpop.f32.mrf.mxu0
    %v1034 = vadd.f32 0.0, %v1033
    %v1035 = vpop.f32.mrf.mxu0
    %v1036 = vadd.f32 0.0, %v1035
    %1037 = vmatprep.mubr.f32.mxu0 0.0
    %1038 = vmatmul.mubr.f32.gmra.mxu0 %v935
    %v1039 = vpop.f32.mrf.mxu0
    %v1040 = vadd.f32 0.0, %v1039
    %v1041 = vpop.f32.mrf.mxu0
    %v1042 = vadd.f32 0.0, %v1041
    %1043 = vmatprep.mubr.f32.mxu0 0.0
    %1044 = vmatmul.mubr.f32.gmra.mxu0 %v938
    %v1045 = vpop.f32.mrf.mxu0
    %v1046 = vadd.f32 0.0, %v1045
    %v1047 = vpop.f32.mrf.mxu0
    %v1048 = vadd.f32 0.0, %v1047
    %1049 = vmatprep.mubr.f32.mxu0 0.0
    %1050 = vmatmul.mubr.f32.gmra.mxu0 %v941
    %v1051 = vpop.f32.mrf.mxu0
    %v1052 = vadd.f32 0.0, %v1051
    %v1053 = vpop.f32.mrf.mxu0
    %v1054 = vadd.f32 0.0, %v1053
    %1055 = vdwg.mxu0
    %v1056 = vadd.f32 %v744, %v1016
    %v1057 = vadd.f32 %v746, %v1018
    %v1058 = vadd.f32 %v750, %v1022
    %v1059 = vadd.f32 %v752, %v1024
    %v1060 = vadd.f32 %v756, %v1028
    %v1061 = vadd.f32 %v758, %v1030
    %v1062 = vadd.f32 %v762, %v1034
    %v1063 = vadd.f32 %v764, %v1036
    %v1064 = vadd.f32 %v768, %v1040
    %v1065 = vadd.f32 %v770, %v1042
    %v1066 = vadd.f32 %v774, %v1046
    %v1067 = vadd.f32 %v776, %v1048
    %v1068 = vadd.f32 %v780, %v1052
    %v1069 = vadd.f32 %v782, %v1054
    %v1070 = vld [vmem:[#allocation8] sm:$0x3]
    %v1072 = vlaneseq
    %v1073 = vshrl.u32 %v1072, 7
    %v1074 = vsub.s32 0, %v1073
    %v1075 = vrot.slane %v1070, %v1074
    %v1076 = vlaneseq
    %v1077 = vshrl.u32 %v1076, 7
    %v1078 = vsub.s32 1, %v1077
    %v1079 = vrot.slane %v1070, %v1078
    %v1082 = vadd.f32 %v1056, %v1075
    %v1083 = vadd.f32 %v1057, %v1079
    %v1084 = vadd.f32 %v1058, %v1075
    %v1085 = vadd.f32 %v1059, %v1079
    %v1086 = vadd.f32 %v1060, %v1075
    %v1087 = vadd.f32 %v1061, %v1079
    %v1088 = vadd.f32 %v1062, %v1075
    %v1089 = vadd.f32 %v1063, %v1079
    %v1090 = vadd.f32 %v1064, %v1075
    %v1091 = vadd.f32 %v1065, %v1079
    %v1092 = vadd.f32 %v1066, %v1075
    %v1093 = vadd.f32 %v1067, %v1079
    %v1094 = vadd.f32 %v1068, %v1075
    %v1095 = vadd.f32 %v1069, %v1079
    %v1096 = vld [vmem:[#allocation10] sm:$0xff]
    %v1097 = vld [vmem:[#allocation10 + $0x8] sm:$0xff]
    %v1098 = vld [vmem:[#allocation10 + $0x10] sm:$0xff]
    %vm1099 = vcmask 424960
    %v1101 = vsel %vm1099, %v1096, 0
    %v1104 = vsel %vm1099, %v1097, 0
    %v1107 = vsel %vm1099, %v1098, 0
    %v1110 = vsel %vm536, %v1094, 0
    %v1113 = vsel %vm536, %v1095, 0
    %1115 = vmatprep.subr.mxu0 0.0
    %1116 = vmatpush1.msra.mxu0 0.0
    %1117 = vmatprep.subr.mxu0 0.0
    %1118 = vmatpush1.msra.mxu0 0.0
    %1119 = vmatprep.subr.mxu0 0.0
    %1120 = vmatpush1.msra.mxu0 0.0
    %1121 = vmatprep.subr.mxu0 0.0
    %1122 = vmatpush1.msra.mxu0 0.0
    %1123 = vmatprep.subr.mxu0 0.0
    %1124 = vmatpush1.msra.mxu0 0.0
    %1125 = vmatprep.subr.mxu0 0.0
    %1126 = vmatpush1.msra.mxu0 0.0
    %1127 = vmatprep.subr.mxu0 0.0
    %1128 = vmatpush1.msra.mxu0 0.0
    %1129 = vmatprep.subr.mxu0 0.0
    %1130 = vmatpush1.msra.mxu0 0.0
    %1131 = vmatprep.subr.mxu0 0.0
    %1132 = vmatpush1.msra.mxu0 0.0
    %1133 = vmatprep.subr.mxu0 %v1113
    %1134 = vmatpush1.msra.mxu0 %v1110
    %1135 = vmatprep.subr.mxu0 %v1093
    %1136 = vmatpush1.msra.mxu0 %v1092
    %1137 = vmatprep.subr.mxu0 %v1091
    %1138 = vmatpush1.msra.mxu0 %v1090
    %1139 = vmatprep.subr.mxu0 %v1089
    %1140 = vmatpush1.msra.mxu0 %v1088
    %1141 = vmatprep.subr.mxu0 %v1087
    %1142 = vmatpush1.msra.mxu0 %v1086
    %1143 = vmatprep.subr.mxu0 %v1085
    %1144 = vmatpush1.msra.mxu0 %v1084
    %1145 = vmatprep.subr.mxu0 %v1083
    %1146 = vmatpush1.msra.mxu0 %v1082
    %1147 = vmatprep.subr.mxu0 0.0
    %1148 = vmatpush2.msra.mxu0 0.0
    %1149 = vmatprep.subr.mxu0 0.0
    %1150 = vmatpush2.msra.mxu0 0.0
    %1151 = vmatprep.subr.mxu0 0.0
    %1152 = vmatpush2.msra.mxu0 0.0
    %1153 = vmatprep.subr.mxu0 0.0
    %1154 = vmatpush2.msra.mxu0 0.0
    %1155 = vmatprep.subr.mxu0 0.0
    %1156 = vmatpush2.msra.mxu0 0.0
    %1157 = vmatprep.subr.mxu0 0.0
    %1158 = vmatpush2.msra.mxu0 0.0
    %1159 = vmatprep.subr.mxu0 0.0
    %1160 = vmatpush2.msra.mxu0 0.0
    %1161 = vmatprep.subr.mxu0 0.0
    %1162 = vmatpush2.msra.mxu0 0.0
    %1163 = vmatprep.subr.mxu0 0.0
    %1164 = vmatpush2.msra.mxu0 0.0
    %1165 = vmatprep.subr.mxu0 0.0
    %1166 = vmatpush2.msra.mxu0 0.0
    %1167 = vmatprep.subr.mxu0 0.0
    %1168 = vmatpush2.msra.mxu0 0.0
    %1169 = vmatprep.subr.mxu0 0.0
    %1170 = vmatpush2.msra.mxu0 0.0
    %1171 = vmatprep.subr.mxu0 0.0
    %1172 = vmatpush2.msra.mxu0 0.0
    %1173 = vmatprep.subr.mxu0 0.0
    %1174 = vmatpush2.msra.mxu0 0.0
    %1175 = vmatprep.subr.mxu0 0.0
    %1176 = vmatpush2.msra.mxu0 0.0
    %1177 = vmatprep.subr.mxu0 0.0
    %1178 = vmatpush2.msra.mxu0 0.0
    %1179 = vmatprep.mubr.f32.mxu0 0.0
    %1180 = vmatmul.mubr.f32.gmra.mxu0 %v1101
    %v1181 = vpop.f32.mrf.mxu0
    %v1182 = vadd.f32 0.0, %v1181
    %v1183 = vpop.f32.mrf.mxu0
    %v1184 = vadd.f32 0.0, %v1183
    %1185 = vmatprep.mubr.f32.mxu0 0.0
    %1186 = vmatmul.mubr.f32.gmra.mxu0 %v1104
    %v1187 = vpop.f32.mrf.mxu0
    %v1188 = vadd.f32 0.0, %v1187
    %v1189 = vpop.f32.mrf.mxu0
    %v1190 = vadd.f32 0.0, %v1189
    %1191 = vmatprep.mubr.f32.mxu0 0.0
    %1192 = vmatmul.mubr.f32.gmra.mxu0 %v1107
    %v1193 = vpop.f32.mrf.mxu0
    %v1194 = vadd.f32 0.0, %v1193
    %v1195 = vpop.f32.mrf.mxu0
    %v1196 = vadd.f32 0.0, %v1195
    %1197 = vdwg.mxu0
    %v1198 = vld [vmem:[#allocation11] sm:$0xff]
    %v1199 = vld [vmem:[#allocation11 + $0x8] sm:$0xff]
    %v1200 = vld [vmem:[#allocation11 + $0x10] sm:$0xff]
    %v1201 = vld [vmem:[#allocation11 + $0x18] sm:$0xff]
    %v1202 = vld [vmem:[#allocation11 + $0x20] sm:$0xff]
    %v1203 = vld [vmem:[#allocation11 + $0x28] sm:$0xff]
    %v1204 = vld [vmem:[#allocation11 + $0x30] sm:$0xff]
    %v1205 = vld [vmem:[#allocation11 + $0x38] sm:$0xff]
    %v1206 = vld [vmem:[#allocation11 + $0x40] sm:$0xff]
    %v1207 = vld [vmem:[#allocation11 + $0x48] sm:$0xff]
    %v1208 = vld [vmem:[#allocation11 + $0x50] sm:$0xff]
    %v1209 = vld [vmem:[#allocation11 + $0x58] sm:$0xff]
    %v1210 = vld [vmem:[#allocation11 + $0x60] sm:$0xff]
    %v1211 = vld [vmem:[#allocation11 + $0x68] sm:$0xff]
    %v1212 = vld [vmem:[#allocation11 + $0x70] sm:$0xff]
    %v1213 = vld [vmem:[#allocation11 + $0x78] sm:$0xff]
    %v1214 = vld [vmem:[#allocation11 + $0x80] sm:$0xff]
    %v1215 = vld [vmem:[#allocation11 + $0x88] sm:$0xff]
    %v1216 = vld [vmem:[#allocation11 + $0x90] sm:$0xff]
    %v1217 = vld [vmem:[#allocation11 + $0x98] sm:$0xff]
    %v1218 = vld [vmem:[#allocation11 + $0xa0] sm:$0xff]
    %v1219 = vld [vmem:[#allocation11 + $0xa8] sm:$0xff]
    %v1220 = vld [vmem:[#allocation11 + $0xb0] sm:$0xff]
    %v1221 = vld [vmem:[#allocation11 + $0xb8] sm:$0xff]
    %v1222 = vld [vmem:[#allocation11 + $0xc0] sm:$0xff]
    %v1223 = vld [vmem:[#allocation11 + $0xc8] sm:$0xff]
    %s1224 = scalar_lea.vmem [#allocation10], 24
    %v1225 = vld [vmem:[%s1224] sm:$0xff]
    %v1226 = vld [vmem:[%s1224 + $0x8] sm:$0xff]
    %v1227 = vld [vmem:[%s1224 + $0x10] sm:$0xff]
    %v1229 = vsel %vm1099, %v1225, 0
    %v1232 = vsel %vm1099, %v1226, 0
    %v1235 = vsel %vm1099, %v1227, 0
    %1237 = vmatprep.subr.mxu0 0.0
    %1238 = vmatpush1.msra.mxu0 0.0
    %1239 = vmatprep.subr.mxu0 0.0
    %1240 = vmatpush1.msra.mxu0 0.0
    %1241 = vmatprep.subr.mxu0 0.0
    %1242 = vmatpush1.msra.mxu0 0.0
    %1243 = vmatprep.subr.mxu0 0.0
    %1244 = vmatpush1.msra.mxu0 0.0
    %1245 = vmatprep.subr.mxu0 0.0
    %1246 = vmatpush1.msra.mxu0 0.0
    %1247 = vmatprep.subr.mxu0 0.0
    %1248 = vmatpush1.msra.mxu0 0.0
    %1249 = vmatprep.subr.mxu0 0.0
    %1250 = vmatpush1.msra.mxu0 0.0
    %1251 = vmatprep.subr.mxu0 0.0
    %1252 = vmatpush1.msra.mxu0 0.0
    %1253 = vmatprep.subr.mxu0 0.0
    %1254 = vmatpush1.msra.mxu0 0.0
    %1255 = vmatprep.subr.mxu0 %v1113
    %1256 = vmatpush1.msra.mxu0 %v1110
    %1257 = vmatprep.subr.mxu0 %v1093
    %1258 = vmatpush1.msra.mxu0 %v1092
    %1259 = vmatprep.subr.mxu0 %v1091
    %1260 = vmatpush1.msra.mxu0 %v1090
    %1261 = vmatprep.subr.mxu0 %v1089
    %1262 = vmatpush1.msra.mxu0 %v1088
    %1263 = vmatprep.subr.mxu0 %v1087
    %1264 = vmatpush1.msra.mxu0 %v1086
    %1265 = vmatprep.subr.mxu0 %v1085
    %1266 = vmatpush1.msra.mxu0 %v1084
    %1267 = vmatprep.subr.mxu0 %v1083
    %1268 = vmatpush1.msra.mxu0 %v1082
    %1269 = vmatprep.subr.mxu0 0.0
    %1270 = vmatpush2.msra.mxu0 0.0
    %1271 = vmatprep.subr.mxu0 0.0
    %1272 = vmatpush2.msra.mxu0 0.0
    %1273 = vmatprep.subr.mxu0 0.0
    %1274 = vmatpush2.msra.mxu0 0.0
    %1275 = vmatprep.subr.mxu0 0.0
    %1276 = vmatpush2.msra.mxu0 0.0
    %1277 = vmatprep.subr.mxu0 0.0
    %1278 = vmatpush2.msra.mxu0 0.0
    %1279 = vmatprep.subr.mxu0 0.0
    %1280 = vmatpush2.msra.mxu0 0.0
    %1281 = vmatprep.subr.mxu0 0.0
    %1282 = vmatpush2.msra.mxu0 0.0
    %1283 = vmatprep.subr.mxu0 0.0
    %1284 = vmatpush2.msra.mxu0 0.0
    %1285 = vmatprep.subr.mxu0 0.0
    %1286 = vmatpush2.msra.mxu0 0.0
    %1287 = vmatprep.subr.mxu0 0.0
    %1288 = vmatpush2.msra.mxu0 0.0
    %1289 = vmatprep.subr.mxu0 0.0
    %1290 = vmatpush2.msra.mxu0 0.0
    %1291 = vmatprep.subr.mxu0 0.0
    %1292 = vmatpush2.msra.mxu0 0.0
    %1293 = vmatprep.subr.mxu0 0.0
    %1294 = vmatpush2.msra.mxu0 0.0
    %1295 = vmatprep.subr.mxu0 0.0
    %1296 = vmatpush2.msra.mxu0 0.0
    %1297 = vmatprep.subr.mxu0 0.0
    %1298 = vmatpush2.msra.mxu0 0.0
    %1299 = vmatprep.subr.mxu0 0.0
    %1300 = vmatpush2.msra.mxu0 0.0
    %1301 = vmatprep.mubr.f32.mxu0 0.0
    %1302 = vmatmul.mubr.f32.gmra.mxu0 %v1229
    %v1303 = vpop.f32.mrf.mxu0
    %v1304 = vadd.f32 0.0, %v1303
    %v1305 = vpop.f32.mrf.mxu0
    %v1306 = vadd.f32 0.0, %v1305
    %1307 = vmatprep.mubr.f32.mxu0 0.0
    %1308 = vmatmul.mubr.f32.gmra.mxu0 %v1232
    %v1309 = vpop.f32.mrf.mxu0
    %v1310 = vadd.f32 0.0, %v1309
    %v1311 = vpop.f32.mrf.mxu0
    %v1312 = vadd.f32 0.0, %v1311
    %1313 = vmatprep.mubr.f32.mxu0 0.0
    %1314 = vmatmul.mubr.f32.gmra.mxu0 %v1235
    %v1315 = vpop.f32.mrf.mxu0
    %v1316 = vadd.f32 0.0, %v1315
    %v1317 = vpop.f32.mrf.mxu0
    %v1318 = vadd.f32 0.0, %v1317
    %1319 = vdwg.mxu0
    %s1320 = scalar_lea.vmem [#allocation11], 208
    %v1321 = vld [vmem:[%s1320] sm:$0xff]
    %v1322 = vld [vmem:[%s1320 + $0x8] sm:$0xff]
    %v1323 = vld [vmem:[%s1320 + $0x10] sm:$0xff]
    %v1324 = vld [vmem:[%s1320 + $0x18] sm:$0xff]
    %v1325 = vld [vmem:[%s1320 + $0x20] sm:$0xff]
    %v1326 = vld [vmem:[%s1320 + $0x28] sm:$0xff]
    %v1327 = vld [vmem:[%s1320 + $0x30] sm:$0xff]
    %v1328 = vld [vmem:[%s1320 + $0x38] sm:$0xff]
    %v1329 = vld [vmem:[%s1320 + $0x40] sm:$0xff]
    %v1330 = vld [vmem:[%s1320 + $0x48] sm:$0xff]
    %v1331 = vld [vmem:[%s1320 + $0x50] sm:$0xff]
    %v1332 = vld [vmem:[%s1320 + $0x58] sm:$0xff]
    %v1333 = vld [vmem:[%s1320 + $0x60] sm:$0xff]
    %v1334 = vld [vmem:[%s1320 + $0x68] sm:$0xff]
    %v1335 = vld [vmem:[%s1320 + $0x70] sm:$0xff]
    %v1336 = vld [vmem:[%s1320 + $0x78] sm:$0xff]
    %v1337 = vld [vmem:[%s1320 + $0x80] sm:$0xff]
    %v1338 = vld [vmem:[%s1320 + $0x88] sm:$0xff]
    %v1339 = vld [vmem:[%s1320 + $0x90] sm:$0xff]
    %v1340 = vld [vmem:[%s1320 + $0x98] sm:$0xff]
    %v1341 = vld [vmem:[%s1320 + $0xa0] sm:$0xff]
    %v1342 = vld [vmem:[%s1320 + $0xa8] sm:$0xff]
    %v1343 = vld [vmem:[%s1320 + $0xb0] sm:$0xff]
    %v1344 = vld [vmem:[%s1320 + $0xb8] sm:$0xff]
    %v1345 = vld [vmem:[%s1320 + $0xc0] sm:$0xff]
    %v1346 = vld [vmem:[%s1320 + $0xc8] sm:$0xff]
    %vm1347 = vcmask 654336
    %v1349 = vsel %vm1347, %v1306, 0
    %v1352 = vsel %vm1347, %v1312, 0
    %v1355 = vsel %vm1347, %v1318, 0
    %1357 = vmatprep.subr.mxu0 0.0
    %1358 = vmatpush1.msra.mxu0 %v1336
    %1359 = vmatprep.subr.mxu0 0.0
    %1360 = vmatpush1.msra.mxu0 %v1335
    %1361 = vmatprep.subr.mxu0 0.0
    %1362 = vmatpush1.msra.mxu0 %v1334
    %1363 = vmatprep.subr.mxu0 0.0
    %1364 = vmatpush1.msra.mxu0 %v1333
    %1365 = vmatprep.subr.mxu0 0.0
    %1366 = vmatpush1.msra.mxu0 %v1332
    %1367 = vmatprep.subr.mxu0 0.0
    %1368 = vmatpush1.msra.mxu0 %v1331
    %1369 = vmatprep.subr.mxu0 0.0
    %1370 = vmatpush1.msra.mxu0 %v1330
    %1371 = vmatprep.subr.mxu0 0.0
    %1372 = vmatpush1.msra.mxu0 %v1329
    %1373 = vmatprep.subr.mxu0 0.0
    %1374 = vmatpush1.msra.mxu0 %v1328
    %1375 = vmatprep.subr.mxu0 0.0
    %1376 = vmatpush1.msra.mxu0 %v1327
    %1377 = vmatprep.subr.mxu0 0.0
    %1378 = vmatpush1.msra.mxu0 %v1326
    %1379 = vmatprep.subr.mxu0 0.0
    %1380 = vmatpush1.msra.mxu0 %v1325
    %1381 = vmatprep.subr.mxu0 0.0
    %1382 = vmatpush1.msra.mxu0 %v1324
    %1383 = vmatprep.subr.mxu0 0.0
    %1384 = vmatpush1.msra.mxu0 %v1323
    %1385 = vmatprep.subr.mxu0 0.0
    %1386 = vmatpush1.msra.mxu0 %v1322
    %1387 = vmatprep.subr.mxu0 0.0
    %1388 = vmatpush1.msra.mxu0 %v1321
    %1389 = vmatprep.subr.mxu0 0.0
    %1390 = vmatpush2.msra.mxu0 0.0
    %1391 = vmatprep.subr.mxu0 0.0
    %1392 = vmatpush2.msra.mxu0 0.0
    %1393 = vmatprep.subr.mxu0 0.0
    %1394 = vmatpush2.msra.mxu0 0.0
    %1395 = vmatprep.subr.mxu0 0.0
    %1396 = vmatpush2.msra.mxu0 0.0
    %1397 = vmatprep.subr.mxu0 0.0
    %1398 = vmatpush2.msra.mxu0 0.0
    %1399 = vmatprep.subr.mxu0 0.0
    %1400 = vmatpush2.msra.mxu0 0.0
    %1401 = vmatprep.subr.mxu0 0.0
    %1402 = vmatpush2.msra.mxu0 %v1346
    %1403 = vmatprep.subr.mxu0 0.0
    %1404 = vmatpush2.msra.mxu0 %v1345
    %1405 = vmatprep.subr.mxu0 0.0
    %1406 = vmatpush2.msra.mxu0 %v1344
    %1407 = vmatprep.subr.mxu0 0.0
    %1408 = vmatpush2.msra.mxu0 %v1343
    %1409 = vmatprep.subr.mxu0 0.0
    %1410 = vmatpush2.msra.mxu0 %v1342
    %1411 = vmatprep.subr.mxu0 0.0
    %1412 = vmatpush2.msra.mxu0 %v1341
    %1413 = vmatprep.subr.mxu0 0.0
    %1414 = vmatpush2.msra.mxu0 %v1340
    %1415 = vmatprep.subr.mxu0 0.0
    %1416 = vmatpush2.msra.mxu0 %v1339
    %1417 = vmatprep.subr.mxu0 0.0
    %1418 = vmatpush2.msra.mxu0 %v1338
    %1419 = vmatprep.subr.mxu0 0.0
    %1420 = vmatpush2.msra.mxu0 %v1337
    %1421 = vmatprep.mubr.f32.mxu0 %v1349
    %1422 = vmatmul.mubr.f32.gmra.mxu0 %v1304
    %v1423 = vpop.f32.mrf.mxu0
    %v1424 = vadd.f32 0.0, %v1423
    %v1425 = vpop.f32.mrf.mxu0
    %1426 = vmatprep.mubr.f32.mxu0 %v1352
    %1427 = vmatmul.mubr.f32.gmra.mxu0 %v1310
    %v1428 = vpop.f32.mrf.mxu0
    %v1429 = vadd.f32 0.0, %v1428
    %v1430 = vpop.f32.mrf.mxu0
    %1431 = vmatprep.mubr.f32.mxu0 %v1355
    %1432 = vmatmul.mubr.f32.gmra.mxu0 %v1316
    %v1433 = vpop.f32.mrf.mxu0
    %v1434 = vadd.f32 0.0, %v1433
    %v1435 = vpop.f32.mrf.mxu0
    %1436 = vdwg.mxu0
    %v1438 = vsel %vm1347, %v1184, 0
    %v1441 = vsel %vm1347, %v1190, 0
    %v1444 = vsel %vm1347, %v1196, 0
    %1446 = vmatprep.subr.mxu0 0.0
    %1447 = vmatpush1.msra.mxu0 %v1213
    %1448 = vmatprep.subr.mxu0 0.0
    %1449 = vmatpush1.msra.mxu0 %v1212
    %1450 = vmatprep.subr.mxu0 0.0
    %1451 = vmatpush1.msra.mxu0 %v1211
    %1452 = vmatprep.subr.mxu0 0.0
    %1453 = vmatpush1.msra.mxu0 %v1210
    %1454 = vmatprep.subr.mxu0 0.0
    %1455 = vmatpush1.msra.mxu0 %v1209
    %1456 = vmatprep.subr.mxu0 0.0
    %1457 = vmatpush1.msra.mxu0 %v1208
    %1458 = vmatprep.subr.mxu0 0.0
    %1459 = vmatpush1.msra.mxu0 %v1207
    %1460 = vmatprep.subr.mxu0 0.0
    %1461 = vmatpush1.msra.mxu0 %v1206
    %1462 = vmatprep.subr.mxu0 0.0
    %1463 = vmatpush1.msra.mxu0 %v1205
    %1464 = vmatprep.subr.mxu0 0.0
    %1465 = vmatpush1.msra.mxu0 %v1204
    %1466 = vmatprep.subr.mxu0 0.0
    %1467 = vmatpush1.msra.mxu0 %v1203
    %1468 = vmatprep.subr.mxu0 0.0
    %1469 = vmatpush1.msra.mxu0 %v1202
    %1470 = vmatprep.subr.mxu0 0.0
    %1471 = vmatpush1.msra.mxu0 %v1201
    %1472 = vmatprep.subr.mxu0 0.0
    %1473 = vmatpush1.msra.mxu0 %v1200
    %1474 = vmatprep.subr.mxu0 0.0
    %1475 = vmatpush1.msra.mxu0 %v1199
    %1476 = vmatprep.subr.mxu0 0.0
    %1477 = vmatpush1.msra.mxu0 %v1198
    %1478 = vmatprep.subr.mxu0 0.0
    %1479 = vmatpush2.msra.mxu0 0.0
    %1480 = vmatprep.subr.mxu0 0.0
    %1481 = vmatpush2.msra.mxu0 0.0
    %1482 = vmatprep.subr.mxu0 0.0
    %1483 = vmatpush2.msra.mxu0 0.0
    %1484 = vmatprep.subr.mxu0 0.0
    %1485 = vmatpush2.msra.mxu0 0.0
    %1486 = vmatprep.subr.mxu0 0.0
    %1487 = vmatpush2.msra.mxu0 0.0
    %1488 = vmatprep.subr.mxu0 0.0
    %1489 = vmatpush2.msra.mxu0 0.0
    %1490 = vmatprep.subr.mxu0 0.0
    %1491 = vmatpush2.msra.mxu0 %v1223
    %1492 = vmatprep.subr.mxu0 0.0
    %1493 = vmatpush2.msra.mxu0 %v1222
    %1494 = vmatprep.subr.mxu0 0.0
    %1495 = vmatpush2.msra.mxu0 %v1221
    %1496 = vmatprep.subr.mxu0 0.0
    %1497 = vmatpush2.msra.mxu0 %v1220
    %1498 = vmatprep.subr.mxu0 0.0
    %1499 = vmatpush2.msra.mxu0 %v1219
    %1500 = vmatprep.subr.mxu0 0.0
    %1501 = vmatpush2.msra.mxu0 %v1218
    %1502 = vmatprep.subr.mxu0 0.0
    %1503 = vmatpush2.msra.mxu0 %v1217
    %1504 = vmatprep.subr.mxu0 0.0
    %1505 = vmatpush2.msra.mxu0 %v1216
    %1506 = vmatprep.subr.mxu0 0.0
    %1507 = vmatpush2.msra.mxu0 %v1215
    %1508 = vmatprep.subr.mxu0 0.0
    %1509 = vmatpush2.msra.mxu0 %v1214
    %1510 = vmatprep.mubr.f32.mxu0 %v1438
    %1511 = vmatmul.mubr.f32.gmra.mxu0 %v1182
    %v1512 = vpop.f32.mrf.mxu0
    %v1513 = vadd.f32 %v1424, %v1512
    %v1514 = vpop.f32.mrf.mxu0
    %1515 = vmatprep.mubr.f32.mxu0 %v1441
    %1516 = vmatmul.mubr.f32.gmra.mxu0 %v1188
    %v1517 = vpop.f32.mrf.mxu0
    %v1518 = vadd.f32 %v1429, %v1517
    %v1519 = vpop.f32.mrf.mxu0
    %1520 = vmatprep.mubr.f32.mxu0 %v1444
    %1521 = vmatmul.mubr.f32.gmra.mxu0 %v1194
    %v1522 = vpop.f32.mrf.mxu0
    %v1523 = vadd.f32 %v1434, %v1522
    %v1524 = vpop.f32.mrf.mxu0
    %1525 = vdwg.mxu0
    %s1526 = scalar_lea.vmem [#allocation10], 48
    %v1527 = vld [vmem:[%s1526] sm:$0xff]
    %v1528 = vld [vmem:[%s1526 + $0x8] sm:$0xff]
    %v1529 = vld [vmem:[%s1526 + $0x10] sm:$0xff]
    %v1531 = vsel %vm1099, %v1527, 0
    %v1534 = vsel %vm1099, %v1528, 0
    %v1537 = vsel %vm1099, %v1529, 0
    %1539 = vmatprep.subr.mxu0 0.0
    %1540 = vmatpush1.msra.mxu0 0.0
    %1541 = vmatprep.subr.mxu0 0.0
    %1542 = vmatpush1.msra.mxu0 0.0
    %1543 = vmatprep.subr.mxu0 0.0
    %1544 = vmatpush1.msra.mxu0 0.0
    %1545 = vmatprep.subr.mxu0 0.0
    %1546 = vmatpush1.msra.mxu0 0.0
    %1547 = vmatprep.subr.mxu0 0.0
    %1548 = vmatpush1.msra.mxu0 0.0
    %1549 = vmatprep.subr.mxu0 0.0
    %1550 = vmatpush1.msra.mxu0 0.0
    %1551 = vmatprep.subr.mxu0 0.0
    %1552 = vmatpush1.msra.mxu0 0.0
    %1553 = vmatprep.subr.mxu0 0.0
    %1554 = vmatpush1.msra.mxu0 0.0
    %1555 = vmatprep.subr.mxu0 0.0
    %1556 = vmatpush1.msra.mxu0 0.0
    %1557 = vmatprep.subr.mxu0 %v1113
    %1558 = vmatpush1.msra.mxu0 %v1110
    %1559 = vmatprep.subr.mxu0 %v1093
    %1560 = vmatpush1.msra.mxu0 %v1092
    %1561 = vmatprep.subr.mxu0 %v1091
    %1562 = vmatpush1.msra.mxu0 %v1090
    %1563 = vmatprep.subr.mxu0 %v1089
    %1564 = vmatpush1.msra.mxu0 %v1088
    %1565 = vmatprep.subr.mxu0 %v1087
    %1566 = vmatpush1.msra.mxu0 %v1086
    %1567 = vmatprep.subr.mxu0 %v1085
    %1568 = vmatpush1.msra.mxu0 %v1084
    %1569 = vmatprep.subr.mxu0 %v1083
    %1570 = vmatpush1.msra.mxu0 %v1082
    %1571 = vmatprep.subr.mxu0 0.0
    %1572 = vmatpush2.msra.mxu0 0.0
    %1573 = vmatprep.subr.mxu0 0.0
    %1574 = vmatpush2.msra.mxu0 0.0
    %1575 = vmatprep.subr.mxu0 0.0
    %1576 = vmatpush2.msra.mxu0 0.0
    %1577 = vmatprep.subr.mxu0 0.0
    %1578 = vmatpush2.msra.mxu0 0.0
    %1579 = vmatprep.subr.mxu0 0.0
    %1580 = vmatpush2.msra.mxu0 0.0
    %1581 = vmatprep.subr.mxu0 0.0
    %1582 = vmatpush2.msra.mxu0 0.0
    %1583 = vmatprep.subr.mxu0 0.0
    %1584 = vmatpush2.msra.mxu0 0.0
    %1585 = vmatprep.subr.mxu0 0.0
    %1586 = vmatpush2.msra.mxu0 0.0
    %1587 = vmatprep.subr.mxu0 0.0
    %1588 = vmatpush2.msra.mxu0 0.0
    %1589 = vmatprep.subr.mxu0 0.0
    %1590 = vmatpush2.msra.mxu0 0.0
    %1591 = vmatprep.subr.mxu0 0.0
    %1592 = vmatpush2.msra.mxu0 0.0
    %1593 = vmatprep.subr.mxu0 0.0
    %1594 = vmatpush2.msra.mxu0 0.0
    %1595 = vmatprep.subr.mxu0 0.0
    %1596 = vmatpush2.msra.mxu0 0.0
    %1597 = vmatprep.subr.mxu0 0.0
    %1598 = vmatpush2.msra.mxu0 0.0
    %1599 = vmatprep.subr.mxu0 0.0
    %1600 = vmatpush2.msra.mxu0 0.0
    %1601 = vmatprep.subr.mxu0 0.0
    %1602 = vmatpush2.msra.mxu0 0.0
    %1603 = vmatprep.mubr.f32.mxu0 0.0
    %1604 = vmatmul.mubr.f32.gmra.mxu0 %v1531
    %v1605 = vpop.f32.mrf.mxu0
    %v1606 = vadd.f32 0.0, %v1605
    %v1607 = vpop.f32.mrf.mxu0
    %v1608 = vadd.f32 0.0, %v1607
    %1609 = vmatprep.mubr.f32.mxu0 0.0
    %1610 = vmatmul.mubr.f32.gmra.mxu0 %v1534
    %v1611 = vpop.f32.mrf.mxu0
    %v1612 = vadd.f32 0.0, %v1611
    %v1613 = vpop.f32.mrf.mxu0
    %v1614 = vadd.f32 0.0, %v1613
    %1615 = vmatprep.mubr.f32.mxu0 0.0
    %1616 = vmatmul.mubr.f32.gmra.mxu0 %v1537
    %v1617 = vpop.f32.mrf.mxu0
    %v1618 = vadd.f32 0.0, %v1617
    %v1619 = vpop.f32.mrf.mxu0
    %v1620 = vadd.f32 0.0, %v1619
    %1621 = vdwg.mxu0
    %s1622 = scalar_lea.vmem [#allocation11], 416
    %v1623 = vld [vmem:[%s1622] sm:$0xff]
    %v1624 = vld [vmem:[%s1622 + $0x8] sm:$0xff]
    %v1625 = vld [vmem:[%s1622 + $0x10] sm:$0xff]
    %v1626 = vld [vmem:[%s1622 + $0x18] sm:$0xff]
    %v1627 = vld [vmem:[%s1622 + $0x20] sm:$0xff]
    %v1628 = vld [vmem:[%s1622 + $0x28] sm:$0xff]
    %v1629 = vld [vmem:[%s1622 + $0x30] sm:$0xff]
    %v1630 = vld [vmem:[%s1622 + $0x38] sm:$0xff]
    %v1631 = vld [vmem:[%s1622 + $0x40] sm:$0xff]
    %v1632 = vld [vmem:[%s1622 + $0x48] sm:$0xff]
    %v1633 = vld [vmem:[%s1622 + $0x50] sm:$0xff]
    %v1634 = vld [vmem:[%s1622 + $0x58] sm:$0xff]
    %v1635 = vld [vmem:[%s1622 + $0x60] sm:$0xff]
    %v1636 = vld [vmem:[%s1622 + $0x68] sm:$0xff]
    %v1637 = vld [vmem:[%s1622 + $0x70] sm:$0xff]
    %v1638 = vld [vmem:[%s1622 + $0x78] sm:$0xff]
    %v1639 = vld [vmem:[%s1622 + $0x80] sm:$0xff]
    %v1640 = vld [vmem:[%s1622 + $0x88] sm:$0xff]
    %v1641 = vld [vmem:[%s1622 + $0x90] sm:$0xff]
    %v1642 = vld [vmem:[%s1622 + $0x98] sm:$0xff]
    %v1643 = vld [vmem:[%s1622 + $0xa0] sm:$0xff]
    %v1644 = vld [vmem:[%s1622 + $0xa8] sm:$0xff]
    %v1645 = vld [vmem:[%s1622 + $0xb0] sm:$0xff]
    %v1646 = vld [vmem:[%s1622 + $0xb8] sm:$0xff]
    %v1647 = vld [vmem:[%s1622 + $0xc0] sm:$0xff]
    %v1648 = vld [vmem:[%s1622 + $0xc8] sm:$0xff]
    %v1650 = vsel %vm1347, %v1608, 0
    %v1653 = vsel %vm1347, %v1614, 0
    %v1656 = vsel %vm1347, %v1620, 0
    %1658 = vmatprep.subr.mxu0 0.0
    %1659 = vmatpush1.msra.mxu0 %v1638
    %1660 = vmatprep.subr.mxu0 0.0
    %1661 = vmatpush1.msra.mxu0 %v1637
    %1662 = vmatprep.subr.mxu0 0.0
    %1663 = vmatpush1.msra.mxu0 %v1636
    %1664 = vmatprep.subr.mxu0 0.0
    %1665 = vmatpush1.msra.mxu0 %v1635
    %1666 = vmatprep.subr.mxu0 0.0
    %1667 = vmatpush1.msra.mxu0 %v1634
    %1668 = vmatprep.subr.mxu0 0.0
    %1669 = vmatpush1.msra.mxu0 %v1633
    %1670 = vmatprep.subr.mxu0 0.0
    %1671 = vmatpush1.msra.mxu0 %v1632
    %1672 = vmatprep.subr.mxu0 0.0
    %1673 = vmatpush1.msra.mxu0 %v1631
    %1674 = vmatprep.subr.mxu0 0.0
    %1675 = vmatpush1.msra.mxu0 %v1630
    %1676 = vmatprep.subr.mxu0 0.0
    %1677 = vmatpush1.msra.mxu0 %v1629
    %1678 = vmatprep.subr.mxu0 0.0
    %1679 = vmatpush1.msra.mxu0 %v1628
    %1680 = vmatprep.subr.mxu0 0.0
    %1681 = vmatpush1.msra.mxu0 %v1627
    %1682 = vmatprep.subr.mxu0 0.0
    %1683 = vmatpush1.msra.mxu0 %v1626
    %1684 = vmatprep.subr.mxu0 0.0
    %1685 = vmatpush1.msra.mxu0 %v1625
    %1686 = vmatprep.subr.mxu0 0.0
    %1687 = vmatpush1.msra.mxu0 %v1624
    %1688 = vmatprep.subr.mxu0 0.0
    %1689 = vmatpush1.msra.mxu0 %v1623
    %1690 = vmatprep.subr.mxu0 0.0
    %1691 = vmatpush2.msra.mxu0 0.0
    %1692 = vmatprep.subr.mxu0 0.0
    %1693 = vmatpush2.msra.mxu0 0.0
    %1694 = vmatprep.subr.mxu0 0.0
    %1695 = vmatpush2.msra.mxu0 0.0
    %1696 = vmatprep.subr.mxu0 0.0
    %1697 = vmatpush2.msra.mxu0 0.0
    %1698 = vmatprep.subr.mxu0 0.0
    %1699 = vmatpush2.msra.mxu0 0.0
    %1700 = vmatprep.subr.mxu0 0.0
    %1701 = vmatpush2.msra.mxu0 0.0
    %1702 = vmatprep.subr.mxu0 0.0
    %1703 = vmatpush2.msra.mxu0 %v1648
    %1704 = vmatprep.subr.mxu0 0.0
    %1705 = vmatpush2.msra.mxu0 %v1647
    %1706 = vmatprep.subr.mxu0 0.0
    %1707 = vmatpush2.msra.mxu0 %v1646
    %1708 = vmatprep.subr.mxu0 0.0
    %1709 = vmatpush2.msra.mxu0 %v1645
    %1710 = vmatprep.subr.mxu0 0.0
    %1711 = vmatpush2.msra.mxu0 %v1644
    %1712 = vmatprep.subr.mxu0 0.0
    %1713 = vmatpush2.msra.mxu0 %v1643
    %1714 = vmatprep.subr.mxu0 0.0
    %1715 = vmatpush2.msra.mxu0 %v1642
    %1716 = vmatprep.subr.mxu0 0.0
    %1717 = vmatpush2.msra.mxu0 %v1641
    %1718 = vmatprep.subr.mxu0 0.0
    %1719 = vmatpush2.msra.mxu0 %v1640
    %1720 = vmatprep.subr.mxu0 0.0
    %1721 = vmatpush2.msra.mxu0 %v1639
    %1722 = vmatprep.mubr.f32.mxu0 %v1650
    %1723 = vmatmul.mubr.f32.gmra.mxu0 %v1606
    %v1724 = vpop.f32.mrf.mxu0
    %v1725 = vadd.f32 0.0, %v1724
    %v1726 = vpop.f32.mrf.mxu0
    %1727 = vmatprep.mubr.f32.mxu0 %v1653
    %1728 = vmatmul.mubr.f32.gmra.mxu0 %v1612
    %v1729 = vpop.f32.mrf.mxu0
    %v1730 = vadd.f32 0.0, %v1729
    %v1731 = vpop.f32.mrf.mxu0
    %1732 = vmatprep.mubr.f32.mxu0 %v1656
    %1733 = vmatmul.mubr.f32.gmra.mxu0 %v1618
    %v1734 = vpop.f32.mrf.mxu0
    %v1735 = vadd.f32 0.0, %v1734
    %v1736 = vpop.f32.mrf.mxu0
    %1737 = vdwg.mxu0
    %v1738 = vadd.f32 %v1513, %v1725
    %v1739 = vadd.f32 %v1518, %v1730
    %v1740 = vadd.f32 %v1523, %v1735
    %v1741 = vld [vmem:[#allocation13] sm:$0x1]
    %v1743 = vlaneseq
    %v1744 = vshrl.u32 %v1743, 7
    %v1745 = vsub.s32 0, %v1744
    %v1746 = vrot.slane %v1741, %v1745
    %v1748 = vadd.f32 %v1738, %v1746
    %v1749 = vadd.f32 %v1739, %v1746
    %v1750 = vadd.f32 %v1740, %v1746
    %v1751 = vmax.f32 %v1748, 0.0
    %v1752 = vmax.f32 %v1749, 0.0
    %v1753 = vmax.f32 %v1750, 0.0
    %v1754 = vld [vmem:[#allocation14] sm:$0xff]
    %v1755 = vld [vmem:[#allocation14 + $0x8] sm:$0xff]
    %v1756 = vld [vmem:[#allocation14 + $0x10] sm:$0xf]
    %vm1757 = vcmask 195584
    %v1759 = vsel %vm1757, %v1754, 0
    %v1762 = vsel %vm1757, %v1755, 0
    %v1765 = vsel %vm1757, %v1756, 0
    %1767 = vmatprep.subr.mxu0 0.0
    %1768 = vmatpush1.msra.mxu0 0.0
    %1769 = vmatprep.subr.mxu0 0.0
    %1770 = vmatpush1.msra.mxu0 0.0
    %1771 = vmatprep.subr.mxu0 0.0
    %1772 = vmatpush1.msra.mxu0 0.0
    %1773 = vmatprep.subr.mxu0 0.0
    %1774 = vmatpush1.msra.mxu0 0.0
    %1775 = vmatprep.subr.mxu0 0.0
    %1776 = vmatpush1.msra.mxu0 0.0
    %1777 = vmatprep.subr.mxu0 0.0
    %1778 = vmatpush1.msra.mxu0 0.0
    %1779 = vmatprep.subr.mxu0 0.0
    %1780 = vmatpush1.msra.mxu0 0.0
    %1781 = vmatprep.subr.mxu0 0.0
    %1782 = vmatpush1.msra.mxu0 0.0
    %1783 = vmatprep.subr.mxu0 0.0
    %1784 = vmatpush1.msra.mxu0 0.0
    %1785 = vmatprep.subr.mxu0 0.0
    %1786 = vmatpush1.msra.mxu0 0.0
    %1787 = vmatprep.subr.mxu0 0.0
    %1788 = vmatpush1.msra.mxu0 0.0
    %1789 = vmatprep.subr.mxu0 0.0
    %1790 = vmatpush1.msra.mxu0 0.0
    %1791 = vmatprep.subr.mxu0 0.0
    %1792 = vmatpush1.msra.mxu0 0.0
    %1793 = vmatprep.subr.mxu0 0.0
    %1794 = vmatpush1.msra.mxu0 %v1753
    %1795 = vmatprep.subr.mxu0 0.0
    %1796 = vmatpush1.msra.mxu0 %v1752
    %1797 = vmatprep.subr.mxu0 0.0
    %1798 = vmatpush1.msra.mxu0 %v1751
    %1799 = vmatprep.subr.mxu0 0.0
    %1800 = vmatpush2.msra.mxu0 0.0
    %1801 = vmatprep.subr.mxu0 0.0
    %1802 = vmatpush2.msra.mxu0 0.0
    %1803 = vmatprep.subr.mxu0 0.0
    %1804 = vmatpush2.msra.mxu0 0.0
    %1805 = vmatprep.subr.mxu0 0.0
    %1806 = vmatpush2.msra.mxu0 0.0
    %1807 = vmatprep.subr.mxu0 0.0
    %1808 = vmatpush2.msra.mxu0 0.0
    %1809 = vmatprep.subr.mxu0 0.0
    %1810 = vmatpush2.msra.mxu0 0.0
    %1811 = vmatprep.subr.mxu0 0.0
    %1812 = vmatpush2.msra.mxu0 0.0
    %1813 = vmatprep.subr.mxu0 0.0
    %1814 = vmatpush2.msra.mxu0 0.0
    %1815 = vmatprep.subr.mxu0 0.0
    %1816 = vmatpush2.msra.mxu0 0.0
    %1817 = vmatprep.subr.mxu0 0.0
    %1818 = vmatpush2.msra.mxu0 0.0
    %1819 = vmatprep.subr.mxu0 0.0
    %1820 = vmatpush2.msra.mxu0 0.0
    %1821 = vmatprep.subr.mxu0 0.0
    %1822 = vmatpush2.msra.mxu0 0.0
    %1823 = vmatprep.subr.mxu0 0.0
    %1824 = vmatpush2.msra.mxu0 0.0
    %1825 = vmatprep.subr.mxu0 0.0
    %1826 = vmatpush2.msra.mxu0 0.0
    %1827 = vmatprep.subr.mxu0 0.0
    %1828 = vmatpush2.msra.mxu0 0.0
    %1829 = vmatprep.subr.mxu0 0.0
    %1830 = vmatpush2.msra.mxu0 0.0
    %1831 = vmatprep.mubr.f32.mxu0 0.0
    %1832 = vmatmul.mubr.f32.gmra.mxu0 %v1759
    %v1833 = vpop.f32.mrf.mxu0
    %v1834 = vadd.f32 0.0, %v1833
    %v1835 = vpop.f32.mrf.mxu0
    %1836 = vmatprep.mubr.f32.mxu0 0.0
    %1837 = vmatmul.mubr.f32.gmra.mxu0 %v1762
    %v1838 = vpop.f32.mrf.mxu0
    %v1839 = vadd.f32 0.0, %v1838
    %v1840 = vpop.f32.mrf.mxu0
    %1841 = vmatprep.mubr.f32.mxu0 0.0
    %1842 = vmatmul.mubr.f32.gmra.mxu0 %v1765
    %v1843 = vpop.f32.mrf.mxu0
    %v1844 = vadd.f32 0.0, %v1843
    %v1845 = vpop.f32.mrf.mxu0
    %1846 = vdwg.mxu0
    %v1847 = vld [vmem:[#allocation16] sm:$0xff]
    %v1848 = vld [vmem:[#allocation16 + $0x8] sm:$0xff]
    %v1849 = vld [vmem:[#allocation16 + $0x10] sm:$0xff]
    %v1850 = vld [vmem:[#allocation16 + $0x18] sm:$0xff]
    %v1851 = vld [vmem:[#allocation16 + $0x20] sm:$0xff]
    %v1852 = vld [vmem:[#allocation16 + $0x28] sm:$0xff]
    %v1853 = vld [vmem:[#allocation16 + $0x30] sm:$0xff]
    %v1854 = vld [vmem:[#allocation16 + $0x38] sm:$0xff]
    %v1855 = vld [vmem:[#allocation16 + $0x40] sm:$0xff]
    %v1856 = vld [vmem:[#allocation16 + $0x48] sm:$0xff]
    %v1857 = vld [vmem:[#allocation16 + $0x50] sm:$0xff]
    %v1858 = vld [vmem:[#allocation16 + $0x58] sm:$0xff]
    %v1859 = vld [vmem:[#allocation16 + $0x60] sm:$0xff]
    %v1860 = vld [vmem:[#allocation16 + $0x68] sm:$0xff]
    %v1861 = vld [vmem:[#allocation16 + $0x70] sm:$0xff]
    %v1862 = vld [vmem:[#allocation16 + $0x78] sm:$0xff]
    %v1863 = vld [vmem:[#allocation16 + $0x80] sm:$0xff]
    %v1864 = vld [vmem:[#allocation16 + $0x88] sm:$0xff]
    %v1865 = vld [vmem:[#allocation16 + $0x90] sm:$0xff]
    %v1866 = vld [vmem:[#allocation16 + $0x98] sm:$0xff]
    %v1867 = vld [vmem:[#allocation16 + $0xa0] sm:$0xff]
    %v1868 = vld [vmem:[#allocation16 + $0xa8] sm:$0xff]
    %v1869 = vld [vmem:[#allocation16 + $0xb0] sm:$0xff]
    %v1870 = vld [vmem:[#allocation16 + $0xb8] sm:$0xff]
    %s1871 = scalar_lea.vmem [#allocation14], 24
    %v1872 = vld [vmem:[%s1871] sm:$0xff]
    %v1873 = vld [vmem:[%s1871 + $0x8] sm:$0xff]
    %v1874 = vld [vmem:[%s1871 + $0x10] sm:$0xf]
    %v1876 = vsel %vm1757, %v1872, 0
    %v1879 = vsel %vm1757, %v1873, 0
    %v1882 = vsel %vm1757, %v1874, 0
    %1884 = vmatprep.subr.mxu0 0.0
    %1885 = vmatpush1.msra.mxu0 0.0
    %1886 = vmatprep.subr.mxu0 0.0
    %1887 = vmatpush1.msra.mxu0 0.0
    %1888 = vmatprep.subr.mxu0 0.0
    %1889 = vmatpush1.msra.mxu0 0.0
    %1890 = vmatprep.subr.mxu0 0.0
    %1891 = vmatpush1.msra.mxu0 0.0
    %1892 = vmatprep.subr.mxu0 0.0
    %1893 = vmatpush1.msra.mxu0 0.0
    %1894 = vmatprep.subr.mxu0 0.0
    %1895 = vmatpush1.msra.mxu0 0.0
    %1896 = vmatprep.subr.mxu0 0.0
    %1897 = vmatpush1.msra.mxu0 0.0
    %1898 = vmatprep.subr.mxu0 0.0
    %1899 = vmatpush1.msra.mxu0 0.0
    %1900 = vmatprep.subr.mxu0 0.0
    %1901 = vmatpush1.msra.mxu0 0.0
    %1902 = vmatprep.subr.mxu0 0.0
    %1903 = vmatpush1.msra.mxu0 0.0
    %1904 = vmatprep.subr.mxu0 0.0
    %1905 = vmatpush1.msra.mxu0 0.0
    %1906 = vmatprep.subr.mxu0 0.0
    %1907 = vmatpush1.msra.mxu0 0.0
    %1908 = vmatprep.subr.mxu0 0.0
    %1909 = vmatpush1.msra.mxu0 0.0
    %1910 = vmatprep.subr.mxu0 0.0
    %1911 = vmatpush1.msra.mxu0 %v1753
    %1912 = vmatprep.subr.mxu0 0.0
    %1913 = vmatpush1.msra.mxu0 %v1752
    %1914 = vmatprep.subr.mxu0 0.0
    %1915 = vmatpush1.msra.mxu0 %v1751
    %1916 = vmatprep.subr.mxu0 0.0
    %1917 = vmatpush2.msra.mxu0 0.0
    %1918 = vmatprep.subr.mxu0 0.0
    %1919 = vmatpush2.msra.mxu0 0.0
    %1920 = vmatprep.subr.mxu0 0.0
    %1921 = vmatpush2.msra.mxu0 0.0
    %1922 = vmatprep.subr.mxu0 0.0
    %1923 = vmatpush2.msra.mxu0 0.0
    %1924 = vmatprep.subr.mxu0 0.0
    %1925 = vmatpush2.msra.mxu0 0.0
    %1926 = vmatprep.subr.mxu0 0.0
    %1927 = vmatpush2.msra.mxu0 0.0
    %1928 = vmatprep.subr.mxu0 0.0
    %1929 = vmatpush2.msra.mxu0 0.0
    %1930 = vmatprep.subr.mxu0 0.0
    %1931 = vmatpush2.msra.mxu0 0.0
    %1932 = vmatprep.subr.mxu0 0.0
    %1933 = vmatpush2.msra.mxu0 0.0
    %1934 = vmatprep.subr.mxu0 0.0
    %1935 = vmatpush2.msra.mxu0 0.0
    %1936 = vmatprep.subr.mxu0 0.0
    %1937 = vmatpush2.msra.mxu0 0.0
    %1938 = vmatprep.subr.mxu0 0.0
    %1939 = vmatpush2.msra.mxu0 0.0
    %1940 = vmatprep.subr.mxu0 0.0
    %1941 = vmatpush2.msra.mxu0 0.0
    %1942 = vmatprep.subr.mxu0 0.0
    %1943 = vmatpush2.msra.mxu0 0.0
    %1944 = vmatprep.subr.mxu0 0.0
    %1945 = vmatpush2.msra.mxu0 0.0
    %1946 = vmatprep.subr.mxu0 0.0
    %1947 = vmatpush2.msra.mxu0 0.0
    %1948 = vmatprep.mubr.f32.mxu0 0.0
    %1949 = vmatmul.mubr.f32.gmra.mxu0 %v1876
    %v1950 = vpop.f32.mrf.mxu0
    %v1951 = vadd.f32 0.0, %v1950
    %v1952 = vpop.f32.mrf.mxu0
    %1953 = vmatprep.mubr.f32.mxu0 0.0
    %1954 = vmatmul.mubr.f32.gmra.mxu0 %v1879
    %v1955 = vpop.f32.mrf.mxu0
    %v1956 = vadd.f32 0.0, %v1955
    %v1957 = vpop.f32.mrf.mxu0
    %1958 = vmatprep.mubr.f32.mxu0 0.0
    %1959 = vmatmul.mubr.f32.gmra.mxu0 %v1882
    %v1960 = vpop.f32.mrf.mxu0
    %v1961 = vadd.f32 0.0, %v1960
    %v1962 = vpop.f32.mrf.mxu0
    %1963 = vdwg.mxu0
    %s1964 = scalar_lea.vmem [#allocation16], 192
    %v1965 = vld [vmem:[%s1964] sm:$0xff]
    %v1966 = vld [vmem:[%s1964 + $0x8] sm:$0xff]
    %v1967 = vld [vmem:[%s1964 + $0x10] sm:$0xff]
    %v1968 = vld [vmem:[%s1964 + $0x18] sm:$0xff]
    %v1969 = vld [vmem:[%s1964 + $0x20] sm:$0xff]
    %v1970 = vld [vmem:[%s1964 + $0x28] sm:$0xff]
    %v1971 = vld [vmem:[%s1964 + $0x30] sm:$0xff]
    %v1972 = vld [vmem:[%s1964 + $0x38] sm:$0xff]
    %v1973 = vld [vmem:[%s1964 + $0x40] sm:$0xff]
    %v1974 = vld [vmem:[%s1964 + $0x48] sm:$0xff]
    %v1975 = vld [vmem:[%s1964 + $0x50] sm:$0xff]
    %v1976 = vld [vmem:[%s1964 + $0x58] sm:$0xff]
    %v1977 = vld [vmem:[%s1964 + $0x60] sm:$0xff]
    %v1978 = vld [vmem:[%s1964 + $0x68] sm:$0xff]
    %v1979 = vld [vmem:[%s1964 + $0x70] sm:$0xff]
    %v1980 = vld [vmem:[%s1964 + $0x78] sm:$0xff]
    %v1981 = vld [vmem:[%s1964 + $0x80] sm:$0xff]
    %v1982 = vld [vmem:[%s1964 + $0x88] sm:$0xff]
    %v1983 = vld [vmem:[%s1964 + $0x90] sm:$0xff]
    %v1984 = vld [vmem:[%s1964 + $0x98] sm:$0xff]
    %v1985 = vld [vmem:[%s1964 + $0xa0] sm:$0xff]
    %v1986 = vld [vmem:[%s1964 + $0xa8] sm:$0xff]
    %v1987 = vld [vmem:[%s1964 + $0xb0] sm:$0xff]
    %v1988 = vld [vmem:[%s1964 + $0xb8] sm:$0xff]
    %vm1989 = vcmask 785408
    %v1991 = vsel %vm1989, %v1951, 0
    %v1994 = vsel %vm1989, %v1956, 0
    %v1997 = vsel %vm1989, %v1961, 0
    %1999 = vmatprep.subr.mxu0 0.0
    %2000 = vmatpush1.msra.mxu0 0.0
    %2001 = vmatprep.subr.mxu0 0.0
    %2002 = vmatpush1.msra.mxu0 0.0
    %2003 = vmatprep.subr.mxu0 0.0
    %2004 = vmatpush1.msra.mxu0 0.0
    %2005 = vmatprep.subr.mxu0 0.0
    %2006 = vmatpush1.msra.mxu0 0.0
    %2007 = vmatprep.subr.mxu0 %v1988
    %2008 = vmatpush1.msra.mxu0 %v1987
    %2009 = vmatprep.subr.mxu0 %v1986
    %2010 = vmatpush1.msra.mxu0 %v1985
    %2011 = vmatprep.subr.mxu0 %v1984
    %2012 = vmatpush1.msra.mxu0 %v1983
    %2013 = vmatprep.subr.mxu0 %v1982
    %2014 = vmatpush1.msra.mxu0 %v1981
    %2015 = vmatprep.subr.mxu0 %v1980
    %2016 = vmatpush1.msra.mxu0 %v1979
    %2017 = vmatprep.subr.mxu0 %v1978
    %2018 = vmatpush1.msra.mxu0 %v1977
    %2019 = vmatprep.subr.mxu0 %v1976
    %2020 = vmatpush1.msra.mxu0 %v1975
    %2021 = vmatprep.subr.mxu0 %v1974
    %2022 = vmatpush1.msra.mxu0 %v1973
    %2023 = vmatprep.subr.mxu0 %v1972
    %2024 = vmatpush1.msra.mxu0 %v1971
    %2025 = vmatprep.subr.mxu0 %v1970
    %2026 = vmatpush1.msra.mxu0 %v1969
    %2027 = vmatprep.subr.mxu0 %v1968
    %2028 = vmatpush1.msra.mxu0 %v1967
    %2029 = vmatprep.subr.mxu0 %v1966
    %2030 = vmatpush1.msra.mxu0 %v1965
    %2031 = vmatprep.subr.mxu0 0.0
    %2032 = vmatpush2.msra.mxu0 0.0
    %2033 = vmatprep.subr.mxu0 0.0
    %2034 = vmatpush2.msra.mxu0 0.0
    %2035 = vmatprep.subr.mxu0 0.0
    %2036 = vmatpush2.msra.mxu0 0.0
    %2037 = vmatprep.subr.mxu0 0.0
    %2038 = vmatpush2.msra.mxu0 0.0
    %2039 = vmatprep.subr.mxu0 0.0
    %2040 = vmatpush2.msra.mxu0 0.0
    %2041 = vmatprep.subr.mxu0 0.0
    %2042 = vmatpush2.msra.mxu0 0.0
    %2043 = vmatprep.subr.mxu0 0.0
    %2044 = vmatpush2.msra.mxu0 0.0
    %2045 = vmatprep.subr.mxu0 0.0
    %2046 = vmatpush2.msra.mxu0 0.0
    %2047 = vmatprep.subr.mxu0 0.0
    %2048 = vmatpush2.msra.mxu0 0.0
    %2049 = vmatprep.subr.mxu0 0.0
    %2050 = vmatpush2.msra.mxu0 0.0
    %2051 = vmatprep.subr.mxu0 0.0
    %2052 = vmatpush2.msra.mxu0 0.0
    %2053 = vmatprep.subr.mxu0 0.0
    %2054 = vmatpush2.msra.mxu0 0.0
    %2055 = vmatprep.subr.mxu0 0.0
    %2056 = vmatpush2.msra.mxu0 0.0
    %2057 = vmatprep.subr.mxu0 0.0
    %2058 = vmatpush2.msra.mxu0 0.0
    %2059 = vmatprep.subr.mxu0 0.0
    %2060 = vmatpush2.msra.mxu0 0.0
    %2061 = vmatprep.subr.mxu0 0.0
    %2062 = vmatpush2.msra.mxu0 0.0
    %2063 = vmatprep.mubr.f32.mxu0 0.0
    %2064 = vmatmul.mubr.f32.gmra.mxu0 %v1991
    %v2065 = vpop.f32.mrf.mxu0
    %v2066 = vadd.f32 0.0, %v2065
    %v2067 = vpop.f32.mrf.mxu0
    %v2068 = vadd.f32 0.0, %v2067
    %2069 = vmatprep.mubr.f32.mxu0 0.0
    %2070 = vmatmul.mubr.f32.gmra.mxu0 %v1994
    %v2071 = vpop.f32.mrf.mxu0
    %v2072 = vadd.f32 0.0, %v2071
    %v2073 = vpop.f32.mrf.mxu0
    %v2074 = vadd.f32 0.0, %v2073
    %2075 = vmatprep.mubr.f32.mxu0 0.0
    %2076 = vmatmul.mubr.f32.gmra.mxu0 %v1997
    %v2077 = vpop.f32.mrf.mxu0
    %v2078 = vadd.f32 0.0, %v2077
    %v2079 = vpop.f32.mrf.mxu0
    %v2080 = vadd.f32 0.0, %v2079
    %2081 = vdwg.mxu0
    %v2083 = vsel %vm1989, %v1834, 0
    %v2086 = vsel %vm1989, %v1839, 0
    %v2089 = vsel %vm1989, %v1844, 0
    %2091 = vmatprep.subr.mxu0 0.0
    %2092 = vmatpush1.msra.mxu0 0.0
    %2093 = vmatprep.subr.mxu0 0.0
    %2094 = vmatpush1.msra.mxu0 0.0
    %2095 = vmatprep.subr.mxu0 0.0
    %2096 = vmatpush1.msra.mxu0 0.0
    %2097 = vmatprep.subr.mxu0 0.0
    %2098 = vmatpush1.msra.mxu0 0.0
    %2099 = vmatprep.subr.mxu0 %v1870
    %2100 = vmatpush1.msra.mxu0 %v1869
    %2101 = vmatprep.subr.mxu0 %v1868
    %2102 = vmatpush1.msra.mxu0 %v1867
    %2103 = vmatprep.subr.mxu0 %v1866
    %2104 = vmatpush1.msra.mxu0 %v1865
    %2105 = vmatprep.subr.mxu0 %v1864
    %2106 = vmatpush1.msra.mxu0 %v1863
    %2107 = vmatprep.subr.mxu0 %v1862
    %2108 = vmatpush1.msra.mxu0 %v1861
    %2109 = vmatprep.subr.mxu0 %v1860
    %2110 = vmatpush1.msra.mxu0 %v1859
    %2111 = vmatprep.subr.mxu0 %v1858
    %2112 = vmatpush1.msra.mxu0 %v1857
    %2113 = vmatprep.subr.mxu0 %v1856
    %2114 = vmatpush1.msra.mxu0 %v1855
    %2115 = vmatprep.subr.mxu0 %v1854
    %2116 = vmatpush1.msra.mxu0 %v1853
    %2117 = vmatprep.subr.mxu0 %v1852
    %2118 = vmatpush1.msra.mxu0 %v1851
    %2119 = vmatprep.subr.mxu0 %v1850
    %2120 = vmatpush1.msra.mxu0 %v1849
    %2121 = vmatprep.subr.mxu0 %v1848
    %2122 = vmatpush1.msra.mxu0 %v1847
    %2123 = vmatprep.subr.mxu0 0.0
    %2124 = vmatpush2.msra.mxu0 0.0
    %2125 = vmatprep.subr.mxu0 0.0
    %2126 = vmatpush2.msra.mxu0 0.0
    %2127 = vmatprep.subr.mxu0 0.0
    %2128 = vmatpush2.msra.mxu0 0.0
    %2129 = vmatprep.subr.mxu0 0.0
    %2130 = vmatpush2.msra.mxu0 0.0
    %2131 = vmatprep.subr.mxu0 0.0
    %2132 = vmatpush2.msra.mxu0 0.0
    %2133 = vmatprep.subr.mxu0 0.0
    %2134 = vmatpush2.msra.mxu0 0.0
    %2135 = vmatprep.subr.mxu0 0.0
    %2136 = vmatpush2.msra.mxu0 0.0
    %2137 = vmatprep.subr.mxu0 0.0
    %2138 = vmatpush2.msra.mxu0 0.0
    %2139 = vmatprep.subr.mxu0 0.0
    %2140 = vmatpush2.msra.mxu0 0.0
    %2141 = vmatprep.subr.mxu0 0.0
    %2142 = vmatpush2.msra.mxu0 0.0
    %2143 = vmatprep.subr.mxu0 0.0
    %2144 = vmatpush2.msra.mxu0 0.0
    %2145 = vmatprep.subr.mxu0 0.0
    %2146 = vmatpush2.msra.mxu0 0.0
    %2147 = vmatprep.subr.mxu0 0.0
    %2148 = vmatpush2.msra.mxu0 0.0
    %2149 = vmatprep.subr.mxu0 0.0
    %2150 = vmatpush2.msra.mxu0 0.0
    %2151 = vmatprep.subr.mxu0 0.0
    %2152 = vmatpush2.msra.mxu0 0.0
    %2153 = vmatprep.subr.mxu0 0.0
    %2154 = vmatpush2.msra.mxu0 0.0
    %2155 = vmatprep.mubr.f32.mxu0 0.0
    %2156 = vmatmul.mubr.f32.gmra.mxu0 %v2083
    %v2157 = vpop.f32.mrf.mxu0
    %v2158 = vadd.f32 %v2066, %v2157
    %v2159 = vpop.f32.mrf.mxu0
    %v2160 = vadd.f32 %v2068, %v2159
    %2161 = vmatprep.mubr.f32.mxu0 0.0
    %2162 = vmatmul.mubr.f32.gmra.mxu0 %v2086
    %v2163 = vpop.f32.mrf.mxu0
    %v2164 = vadd.f32 %v2072, %v2163
    %v2165 = vpop.f32.mrf.mxu0
    %v2166 = vadd.f32 %v2074, %v2165
    %2167 = vmatprep.mubr.f32.mxu0 0.0
    %2168 = vmatmul.mubr.f32.gmra.mxu0 %v2089
    %v2169 = vpop.f32.mrf.mxu0
    %v2170 = vadd.f32 %v2078, %v2169
    %v2171 = vpop.f32.mrf.mxu0
    %v2172 = vadd.f32 %v2080, %v2171
    %2173 = vdwg.mxu0
    %s2174 = scalar_lea.vmem [#allocation14], 48
    %v2175 = vld [vmem:[%s2174] sm:$0xff]
    %v2176 = vld [vmem:[%s2174 + $0x8] sm:$0xff]
    %v2177 = vld [vmem:[%s2174 + $0x10] sm:$0xf]
    %v2179 = vsel %vm1757, %v2175, 0
    %v2182 = vsel %vm1757, %v2176, 0
    %v2185 = vsel %vm1757, %v2177, 0
    %2187 = vmatprep.subr.mxu0 0.0
    %2188 = vmatpush1.msra.mxu0 0.0
    %2189 = vmatprep.subr.mxu0 0.0
    %2190 = vmatpush1.msra.mxu0 0.0
    %2191 = vmatprep.subr.mxu0 0.0
    %2192 = vmatpush1.msra.mxu0 0.0
    %2193 = vmatprep.subr.mxu0 0.0
    %2194 = vmatpush1.msra.mxu0 0.0
    %2195 = vmatprep.subr.mxu0 0.0
    %2196 = vmatpush1.msra.mxu0 0.0
    %2197 = vmatprep.subr.mxu0 0.0
    %2198 = vmatpush1.msra.mxu0 0.0
    %2199 = vmatprep.subr.mxu0 0.0
    %2200 = vmatpush1.msra.mxu0 0.0
    %2201 = vmatprep.subr.mxu0 0.0
    %2202 = vmatpush1.msra.mxu0 0.0
    %2203 = vmatprep.subr.mxu0 0.0
    %2204 = vmatpush1.msra.mxu0 0.0
    %2205 = vmatprep.subr.mxu0 0.0
    %2206 = vmatpush1.msra.mxu0 0.0
    %2207 = vmatprep.subr.mxu0 0.0
    %2208 = vmatpush1.msra.mxu0 0.0
    %2209 = vmatprep.subr.mxu0 0.0
    %2210 = vmatpush1.msra.mxu0 0.0
    %2211 = vmatprep.subr.mxu0 0.0
    %2212 = vmatpush1.msra.mxu0 0.0
    %2213 = vmatprep.subr.mxu0 0.0
    %2214 = vmatpush1.msra.mxu0 %v1753
    %2215 = vmatprep.subr.mxu0 0.0
    %2216 = vmatpush1.msra.mxu0 %v1752
    %2217 = vmatprep.subr.mxu0 0.0
    %2218 = vmatpush1.msra.mxu0 %v1751
    %2219 = vmatprep.subr.mxu0 0.0
    %2220 = vmatpush2.msra.mxu0 0.0
    %2221 = vmatprep.subr.mxu0 0.0
    %2222 = vmatpush2.msra.mxu0 0.0
    %2223 = vmatprep.subr.mxu0 0.0
    %2224 = vmatpush2.msra.mxu0 0.0
    %2225 = vmatprep.subr.mxu0 0.0
    %2226 = vmatpush2.msra.mxu0 0.0
    %2227 = vmatprep.subr.mxu0 0.0
    %2228 = vmatpush2.msra.mxu0 0.0
    %2229 = vmatprep.subr.mxu0 0.0
    %2230 = vmatpush2.msra.mxu0 0.0
    %2231 = vmatprep.subr.mxu0 0.0
    %2232 = vmatpush2.msra.mxu0 0.0
    %2233 = vmatprep.subr.mxu0 0.0
    %2234 = vmatpush2.msra.mxu0 0.0
    %2235 = vmatprep.subr.mxu0 0.0
    %2236 = vmatpush2.msra.mxu0 0.0
    %2237 = vmatprep.subr.mxu0 0.0
    %2238 = vmatpush2.msra.mxu0 0.0
    %2239 = vmatprep.subr.mxu0 0.0
    %2240 = vmatpush2.msra.mxu0 0.0
    %2241 = vmatprep.subr.mxu0 0.0
    %2242 = vmatpush2.msra.mxu0 0.0
    %2243 = vmatprep.subr.mxu0 0.0
    %2244 = vmatpush2.msra.mxu0 0.0
    %2245 = vmatprep.subr.mxu0 0.0
    %2246 = vmatpush2.msra.mxu0 0.0
    %2247 = vmatprep.subr.mxu0 0.0
    %2248 = vmatpush2.msra.mxu0 0.0
    %2249 = vmatprep.subr.mxu0 0.0
    %2250 = vmatpush2.msra.mxu0 0.0
    %2251 = vmatprep.mubr.f32.mxu0 0.0
    %2252 = vmatmul.mubr.f32.gmra.mxu0 %v2179
    %v2253 = vpop.f32.mrf.mxu0
    %v2254 = vadd.f32 0.0, %v2253
    %v2255 = vpop.f32.mrf.mxu0
    %2256 = vmatprep.mubr.f32.mxu0 0.0
    %2257 = vmatmul.mubr.f32.gmra.mxu0 %v2182
    %v2258 = vpop.f32.mrf.mxu0
    %v2259 = vadd.f32 0.0, %v2258
    %v2260 = vpop.f32.mrf.mxu0
    %2261 = vmatprep.mubr.f32.mxu0 0.0
    %2262 = vmatmul.mubr.f32.gmra.mxu0 %v2185
    %v2263 = vpop.f32.mrf.mxu0
    %v2264 = vadd.f32 0.0, %v2263
    %v2265 = vpop.f32.mrf.mxu0
    %2266 = vdwg.mxu0
    %s2267 = scalar_lea.vmem [#allocation16], 384
    %v2268 = vld [vmem:[%s2267] sm:$0xff]
    %v2269 = vld [vmem:[%s2267 + $0x8] sm:$0xff]
    %v2270 = vld [vmem:[%s2267 + $0x10] sm:$0xff]
    %v2271 = vld [vmem:[%s2267 + $0x18] sm:$0xff]
    %v2272 = vld [vmem:[%s2267 + $0x20] sm:$0xff]
    %v2273 = vld [vmem:[%s2267 + $0x28] sm:$0xff]
    %v2274 = vld [vmem:[%s2267 + $0x30] sm:$0xff]
    %v2275 = vld [vmem:[%s2267 + $0x38] sm:$0xff]
    %v2276 = vld [vmem:[%s2267 + $0x40] sm:$0xff]
    %v2277 = vld [vmem:[%s2267 + $0x48] sm:$0xff]
    %v2278 = vld [vmem:[%s2267 + $0x50] sm:$0xff]
    %v2279 = vld [vmem:[%s2267 + $0x58] sm:$0xff]
    %v2280 = vld [vmem:[%s2267 + $0x60] sm:$0xff]
    %v2281 = vld [vmem:[%s2267 + $0x68] sm:$0xff]
    %v2282 = vld [vmem:[%s2267 + $0x70] sm:$0xff]
    %v2283 = vld [vmem:[%s2267 + $0x78] sm:$0xff]
    %v2284 = vld [vmem:[%s2267 + $0x80] sm:$0xff]
    %v2285 = vld [vmem:[%s2267 + $0x88] sm:$0xff]
    %v2286 = vld [vmem:[%s2267 + $0x90] sm:$0xff]
    %v2287 = vld [vmem:[%s2267 + $0x98] sm:$0xff]
    %v2288 = vld [vmem:[%s2267 + $0xa0] sm:$0xff]
    %v2289 = vld [vmem:[%s2267 + $0xa8] sm:$0xff]
    %v2290 = vld [vmem:[%s2267 + $0xb0] sm:$0xff]
    %v2291 = vld [vmem:[%s2267 + $0xb8] sm:$0xff]
    %v2293 = vsel %vm1989, %v2254, 0
    %v2296 = vsel %vm1989, %v2259, 0
    %v2299 = vsel %vm1989, %v2264, 0
    %2301 = vmatprep.subr.mxu0 0.0
    %2302 = vmatpush1.msra.mxu0 0.0
    %2303 = vmatprep.subr.mxu0 0.0
    %2304 = vmatpush1.msra.mxu0 0.0
    %2305 = vmatprep.subr.mxu0 0.0
    %2306 = vmatpush1.msra.mxu0 0.0
    %2307 = vmatprep.subr.mxu0 0.0
    %2308 = vmatpush1.msra.mxu0 0.0
    %2309 = vmatprep.subr.mxu0 %v2291
    %2310 = vmatpush1.msra.mxu0 %v2290
    %2311 = vmatprep.subr.mxu0 %v2289
    %2312 = vmatpush1.msra.mxu0 %v2288
    %2313 = vmatprep.subr.mxu0 %v2287
    %2314 = vmatpush1.msra.mxu0 %v2286
    %2315 = vmatprep.subr.mxu0 %v2285
    %2316 = vmatpush1.msra.mxu0 %v2284
    %2317 = vmatprep.subr.mxu0 %v2283
    %2318 = vmatpush1.msra.mxu0 %v2282
    %2319 = vmatprep.subr.mxu0 %v2281
    %2320 = vmatpush1.msra.mxu0 %v2280
    %2321 = vmatprep.subr.mxu0 %v2279
    %2322 = vmatpush1.msra.mxu0 %v2278
    %2323 = vmatprep.subr.mxu0 %v2277
    %2324 = vmatpush1.msra.mxu0 %v2276
    %2325 = vmatprep.subr.mxu0 %v2275
    %2326 = vmatpush1.msra.mxu0 %v2274
    %2327 = vmatprep.subr.mxu0 %v2273
    %2328 = vmatpush1.msra.mxu0 %v2272
    %2329 = vmatprep.subr.mxu0 %v2271
    %2330 = vmatpush1.msra.mxu0 %v2270
    %2331 = vmatprep.subr.mxu0 %v2269
    %2332 = vmatpush1.msra.mxu0 %v2268
    %2333 = vmatprep.subr.mxu0 0.0
    %2334 = vmatpush2.msra.mxu0 0.0
    %2335 = vmatprep.subr.mxu0 0.0
    %2336 = vmatpush2.msra.mxu0 0.0
    %2337 = vmatprep.subr.mxu0 0.0
    %2338 = vmatpush2.msra.mxu0 0.0
    %2339 = vmatprep.subr.mxu0 0.0
    %2340 = vmatpush2.msra.mxu0 0.0
    %2341 = vmatprep.subr.mxu0 0.0
    %2342 = vmatpush2.msra.mxu0 0.0
    %2343 = vmatprep.subr.mxu0 0.0
    %2344 = vmatpush2.msra.mxu0 0.0
    %2345 = vmatprep.subr.mxu0 0.0
    %2346 = vmatpush2.msra.mxu0 0.0
    %2347 = vmatprep.subr.mxu0 0.0
    %2348 = vmatpush2.msra.mxu0 0.0
    %2349 = vmatprep.subr.mxu0 0.0
    %2350 = vmatpush2.msra.mxu0 0.0
    %2351 = vmatprep.subr.mxu0 0.0
    %2352 = vmatpush2.msra.mxu0 0.0
    %2353 = vmatprep.subr.mxu0 0.0
    %2354 = vmatpush2.msra.mxu0 0.0
    %2355 = vmatprep.subr.mxu0 0.0
    %2356 = vmatpush2.msra.mxu0 0.0
    %2357 = vmatprep.subr.mxu0 0.0
    %2358 = vmatpush2.msra.mxu0 0.0
    %2359 = vmatprep.subr.mxu0 0.0
    %2360 = vmatpush2.msra.mxu0 0.0
    %2361 = vmatprep.subr.mxu0 0.0
    %2362 = vmatpush2.msra.mxu0 0.0
    %2363 = vmatprep.subr.mxu0 0.0
    %2364 = vmatpush2.msra.mxu0 0.0
    %2365 = vmatprep.mubr.f32.mxu0 0.0
    %2366 = vmatmul.mubr.f32.gmra.mxu0 %v2293
    %v2367 = vpop.f32.mrf.mxu0
    %v2368 = vadd.f32 0.0, %v2367
    %v2369 = vpop.f32.mrf.mxu0
    %v2370 = vadd.f32 0.0, %v2369
    %2371 = vmatprep.mubr.f32.mxu0 0.0
    %2372 = vmatmul.mubr.f32.gmra.mxu0 %v2296
    %v2373 = vpop.f32.mrf.mxu0
    %v2374 = vadd.f32 0.0, %v2373
    %v2375 = vpop.f32.mrf.mxu0
    %v2376 = vadd.f32 0.0, %v2375
    %2377 = vmatprep.mubr.f32.mxu0 0.0
    %2378 = vmatmul.mubr.f32.gmra.mxu0 %v2299
    %v2379 = vpop.f32.mrf.mxu0
    %v2380 = vadd.f32 0.0, %v2379
    %v2381 = vpop.f32.mrf.mxu0
    %v2382 = vadd.f32 0.0, %v2381
    %2383 = vdwg.mxu0
    %v2384 = vadd.f32 %v2158, %v2368
    %v2385 = vadd.f32 %v2160, %v2370
    %v2386 = vadd.f32 %v2164, %v2374
    %v2387 = vadd.f32 %v2166, %v2376
    %v2388 = vadd.f32 %v2170, %v2380
    %v2389 = vadd.f32 %v2172, %v2382
    %v2390 = vld [vmem:[%s9] sm:$0x3]
    %v2392 = vlaneseq
    %v2393 = vshrl.u32 %v2392, 7
    %v2394 = vsub.s32 0, %v2393
    %v2395 = vrot.slane %v2390, %v2394
    %v2396 = vlaneseq
    %v2397 = vshrl.u32 %v2396, 7
    %v2398 = vsub.s32 1, %v2397
    %v2399 = vrot.slane %v2390, %v2398
    %v2402 = vadd.f32 %v2384, %v2395
    %v2403 = vadd.f32 %v2385, %v2399
    %v2404 = vadd.f32 %v2386, %v2395
    %v2405 = vadd.f32 %v2387, %v2399
    %v2406 = vadd.f32 %v2388, %v2395
    %v2407 = vadd.f32 %v2389, %v2399
    %v2408 = vld [vmem:[#allocation17] sm:$0xff]
    %vm2409 = vcmask 162816
    %v2411 = vsel %vm2409, %v2408, 0
    %v2414 = vsel %vm536, %v2406, 0
    %v2417 = vsel %vm536, %v2407, 0
    %2419 = vmatprep.subr.mxu0 0.0
    %2420 = vmatpush1.msra.mxu0 0.0
    %2421 = vmatprep.subr.mxu0 0.0
    %2422 = vmatpush1.msra.mxu0 0.0
    %2423 = vmatprep.subr.mxu0 0.0
    %2424 = vmatpush1.msra.mxu0 0.0
    %2425 = vmatprep.subr.mxu0 0.0
    %2426 = vmatpush1.msra.mxu0 0.0
    %2427 = vmatprep.subr.mxu0 0.0
    %2428 = vmatpush1.msra.mxu0 0.0
    %2429 = vmatprep.subr.mxu0 0.0
    %2430 = vmatpush1.msra.mxu0 0.0
    %2431 = vmatprep.subr.mxu0 0.0
    %2432 = vmatpush1.msra.mxu0 0.0
    %2433 = vmatprep.subr.mxu0 0.0
    %2434 = vmatpush1.msra.mxu0 0.0
    %2435 = vmatprep.subr.mxu0 0.0
    %2436 = vmatpush1.msra.mxu0 0.0
    %2437 = vmatprep.subr.mxu0 0.0
    %2438 = vmatpush1.msra.mxu0 0.0
    %2439 = vmatprep.subr.mxu0 0.0
    %2440 = vmatpush1.msra.mxu0 0.0
    %2441 = vmatprep.subr.mxu0 0.0
    %2442 = vmatpush1.msra.mxu0 0.0
    %2443 = vmatprep.subr.mxu0 0.0
    %2444 = vmatpush1.msra.mxu0 0.0
    %2445 = vmatprep.subr.mxu0 %v2417
    %2446 = vmatpush1.msra.mxu0 %v2414
    %2447 = vmatprep.subr.mxu0 %v2405
    %2448 = vmatpush1.msra.mxu0 %v2404
    %2449 = vmatprep.subr.mxu0 %v2403
    %2450 = vmatpush1.msra.mxu0 %v2402
    %2451 = vmatprep.subr.mxu0 0.0
    %2452 = vmatpush2.msra.mxu0 0.0
    %2453 = vmatprep.subr.mxu0 0.0
    %2454 = vmatpush2.msra.mxu0 0.0
    %2455 = vmatprep.subr.mxu0 0.0
    %2456 = vmatpush2.msra.mxu0 0.0
    %2457 = vmatprep.subr.mxu0 0.0
    %2458 = vmatpush2.msra.mxu0 0.0
    %2459 = vmatprep.subr.mxu0 0.0
    %2460 = vmatpush2.msra.mxu0 0.0
    %2461 = vmatprep.subr.mxu0 0.0
    %2462 = vmatpush2.msra.mxu0 0.0
    %2463 = vmatprep.subr.mxu0 0.0
    %2464 = vmatpush2.msra.mxu0 0.0
    %2465 = vmatprep.subr.mxu0 0.0
    %2466 = vmatpush2.msra.mxu0 0.0
    %2467 = vmatprep.subr.mxu0 0.0
    %2468 = vmatpush2.msra.mxu0 0.0
    %2469 = vmatprep.subr.mxu0 0.0
    %2470 = vmatpush2.msra.mxu0 0.0
    %2471 = vmatprep.subr.mxu0 0.0
    %2472 = vmatpush2.msra.mxu0 0.0
    %2473 = vmatprep.subr.mxu0 0.0
    %2474 = vmatpush2.msra.mxu0 0.0
    %2475 = vmatprep.subr.mxu0 0.0
    %2476 = vmatpush2.msra.mxu0 0.0
    %2477 = vmatprep.subr.mxu0 0.0
    %2478 = vmatpush2.msra.mxu0 0.0
    %2479 = vmatprep.subr.mxu0 0.0
    %2480 = vmatpush2.msra.mxu0 0.0
    %2481 = vmatprep.subr.mxu0 0.0
    %2482 = vmatpush2.msra.mxu0 0.0
    %2483 = vmatprep.mubr.f32.mxu0 0.0
    %2484 = vmatmul.mubr.f32.gmra.mxu0 %v2411
    %v2485 = vpop.f32.mrf.mxu0
    %v2486 = vadd.f32 0.0, %v2485
    %v2487 = vpop.f32.mrf.mxu0
    %v2488 = vadd.f32 0.0, %v2487
    %2489 = vdwg.mxu0
    %v2490 = vld [vmem:[#allocation19] sm:$0xff]
    %v2491 = vld [vmem:[#allocation19 + $0x8] sm:$0xff]
    %v2492 = vld [vmem:[#allocation19 + $0x10] sm:$0xff]
    %v2493 = vld [vmem:[#allocation19 + $0x18] sm:$0xff]
    %v2494 = vld [vmem:[#allocation19 + $0x20] sm:$0xff]
    %v2495 = vld [vmem:[#allocation19 + $0x28] sm:$0xff]
    %v2496 = vld [vmem:[#allocation19 + $0x30] sm:$0xff]
    %v2497 = vld [vmem:[#allocation19 + $0x38] sm:$0xff]
    %v2498 = vld [vmem:[#allocation19 + $0x40] sm:$0xff]
    %v2499 = vld [vmem:[#allocation19 + $0x48] sm:$0xff]
    %v2500 = vld [vmem:[#allocation19 + $0x50] sm:$0xff]
    %v2501 = vld [vmem:[#allocation19 + $0x58] sm:$0xff]
    %v2502 = vld [vmem:[#allocation19 + $0x60] sm:$0xff]
    %v2503 = vld [vmem:[#allocation19 + $0x68] sm:$0xff]
    %v2504 = vld [vmem:[#allocation19 + $0x70] sm:$0xff]
    %v2505 = vld [vmem:[#allocation19 + $0x78] sm:$0xff]
    %v2506 = vld [vmem:[#allocation19 + $0x80] sm:$0xff]
    %v2507 = vld [vmem:[#allocation19 + $0x88] sm:$0xff]
    %v2508 = vld [vmem:[#allocation19 + $0x90] sm:$0xff]
    %v2509 = vld [vmem:[#allocation19 + $0x98] sm:$0xff]
    %s2510 = scalar_lea.vmem [#allocation17], 8
    %v2511 = vld [vmem:[%s2510] sm:$0xff]
    %v2513 = vsel %vm2409, %v2511, 0
    %2515 = vmatprep.subr.mxu0 0.0
    %2516 = vmatpush1.msra.mxu0 0.0
    %2517 = vmatprep.subr.mxu0 0.0
    %2518 = vmatpush1.msra.mxu0 0.0
    %2519 = vmatprep.subr.mxu0 0.0
    %2520 = vmatpush1.msra.mxu0 0.0
    %2521 = vmatprep.subr.mxu0 0.0
    %2522 = vmatpush1.msra.mxu0 0.0
    %2523 = vmatprep.subr.mxu0 0.0
    %2524 = vmatpush1.msra.mxu0 0.0
    %2525 = vmatprep.subr.mxu0 0.0
    %2526 = vmatpush1.msra.mxu0 0.0
    %2527 = vmatprep.subr.mxu0 0.0
    %2528 = vmatpush1.msra.mxu0 0.0
    %2529 = vmatprep.subr.mxu0 0.0
    %2530 = vmatpush1.msra.mxu0 0.0
    %2531 = vmatprep.subr.mxu0 0.0
    %2532 = vmatpush1.msra.mxu0 0.0
    %2533 = vmatprep.subr.mxu0 0.0
    %2534 = vmatpush1.msra.mxu0 0.0
    %2535 = vmatprep.subr.mxu0 0.0
    %2536 = vmatpush1.msra.mxu0 0.0
    %2537 = vmatprep.subr.mxu0 0.0
    %2538 = vmatpush1.msra.mxu0 0.0
    %2539 = vmatprep.subr.mxu0 0.0
    %2540 = vmatpush1.msra.mxu0 0.0
    %2541 = vmatprep.subr.mxu0 %v2417
    %2542 = vmatpush1.msra.mxu0 %v2414
    %2543 = vmatprep.subr.mxu0 %v2405
    %2544 = vmatpush1.msra.mxu0 %v2404
    %2545 = vmatprep.subr.mxu0 %v2403
    %2546 = vmatpush1.msra.mxu0 %v2402
    %2547 = vmatprep.subr.mxu0 0.0
    %2548 = vmatpush2.msra.mxu0 0.0
    %2549 = vmatprep.subr.mxu0 0.0
    %2550 = vmatpush2.msra.mxu0 0.0
    %2551 = vmatprep.subr.mxu0 0.0
    %2552 = vmatpush2.msra.mxu0 0.0
    %2553 = vmatprep.subr.mxu0 0.0
    %2554 = vmatpush2.msra.mxu0 0.0
    %2555 = vmatprep.subr.mxu0 0.0
    %2556 = vmatpush2.msra.mxu0 0.0
    %2557 = vmatprep.subr.mxu0 0.0
    %2558 = vmatpush2.msra.mxu0 0.0
    %2559 = vmatprep.subr.mxu0 0.0
    %2560 = vmatpush2.msra.mxu0 0.0
    %2561 = vmatprep.subr.mxu0 0.0
    %2562 = vmatpush2.msra.mxu0 0.0
    %2563 = vmatprep.subr.mxu0 0.0
    %2564 = vmatpush2.msra.mxu0 0.0
    %2565 = vmatprep.subr.mxu0 0.0
    %2566 = vmatpush2.msra.mxu0 0.0
    %2567 = vmatprep.subr.mxu0 0.0
    %2568 = vmatpush2.msra.mxu0 0.0
    %2569 = vmatprep.subr.mxu0 0.0
    %2570 = vmatpush2.msra.mxu0 0.0
    %2571 = vmatprep.subr.mxu0 0.0
    %2572 = vmatpush2.msra.mxu0 0.0
    %2573 = vmatprep.subr.mxu0 0.0
    %2574 = vmatpush2.msra.mxu0 0.0
    %2575 = vmatprep.subr.mxu0 0.0
    %2576 = vmatpush2.msra.mxu0 0.0
    %2577 = vmatprep.subr.mxu0 0.0
    %2578 = vmatpush2.msra.mxu0 0.0
    %2579 = vmatprep.mubr.f32.mxu0 0.0
    %2580 = vmatmul.mubr.f32.gmra.mxu0 %v2513
    %v2581 = vpop.f32.mrf.mxu0
    %v2582 = vadd.f32 0.0, %v2581
    %v2583 = vpop.f32.mrf.mxu0
    %v2584 = vadd.f32 0.0, %v2583
    %2585 = vdwg.mxu0
    %s2586 = scalar_lea.vmem [#allocation19], 160
    %v2587 = vld [vmem:[%s2586] sm:$0xff]
    %v2588 = vld [vmem:[%s2586 + $0x8] sm:$0xff]
    %v2589 = vld [vmem:[%s2586 + $0x10] sm:$0xff]
    %v2590 = vld [vmem:[%s2586 + $0x18] sm:$0xff]
    %v2591 = vld [vmem:[%s2586 + $0x20] sm:$0xff]
    %v2592 = vld [vmem:[%s2586 + $0x28] sm:$0xff]
    %v2593 = vld [vmem:[%s2586 + $0x30] sm:$0xff]
    %v2594 = vld [vmem:[%s2586 + $0x38] sm:$0xff]
    %v2595 = vld [vmem:[%s2586 + $0x40] sm:$0xff]
    %v2596 = vld [vmem:[%s2586 + $0x48] sm:$0xff]
    %v2597 = vld [vmem:[%s2586 + $0x50] sm:$0xff]
    %v2598 = vld [vmem:[%s2586 + $0x58] sm:$0xff]
    %v2599 = vld [vmem:[%s2586 + $0x60] sm:$0xff]
    %v2600 = vld [vmem:[%s2586 + $0x68] sm:$0xff]
    %v2601 = vld [vmem:[%s2586 + $0x70] sm:$0xff]
    %v2602 = vld [vmem:[%s2586 + $0x78] sm:$0xff]
    %v2603 = vld [vmem:[%s2586 + $0x80] sm:$0xff]
    %v2604 = vld [vmem:[%s2586 + $0x88] sm:$0xff]
    %v2605 = vld [vmem:[%s2586 + $0x90] sm:$0xff]
    %v2606 = vld [vmem:[%s2586 + $0x98] sm:$0xff]
    %vm2607 = vcmask 261120
    %v2609 = vsel %vm2607, %v2584, 0
    %2611 = vmatprep.subr.mxu0 0.0
    %2612 = vmatpush1.msra.mxu0 %v2602
    %2613 = vmatprep.subr.mxu0 0.0
    %2614 = vmatpush1.msra.mxu0 %v2601
    %2615 = vmatprep.subr.mxu0 0.0
    %2616 = vmatpush1.msra.mxu0 %v2600
    %2617 = vmatprep.subr.mxu0 0.0
    %2618 = vmatpush1.msra.mxu0 %v2599
    %2619 = vmatprep.subr.mxu0 0.0
    %2620 = vmatpush1.msra.mxu0 %v2598
    %2621 = vmatprep.subr.mxu0 0.0
    %2622 = vmatpush1.msra.mxu0 %v2597
    %2623 = vmatprep.subr.mxu0 0.0
    %2624 = vmatpush1.msra.mxu0 %v2596
    %2625 = vmatprep.subr.mxu0 0.0
    %2626 = vmatpush1.msra.mxu0 %v2595
    %2627 = vmatprep.subr.mxu0 0.0
    %2628 = vmatpush1.msra.mxu0 %v2594
    %2629 = vmatprep.subr.mxu0 0.0
    %2630 = vmatpush1.msra.mxu0 %v2593
    %2631 = vmatprep.subr.mxu0 0.0
    %2632 = vmatpush1.msra.mxu0 %v2592
    %2633 = vmatprep.subr.mxu0 0.0
    %2634 = vmatpush1.msra.mxu0 %v2591
    %2635 = vmatprep.subr.mxu0 0.0
    %2636 = vmatpush1.msra.mxu0 %v2590
    %2637 = vmatprep.subr.mxu0 0.0
    %2638 = vmatpush1.msra.mxu0 %v2589
    %2639 = vmatprep.subr.mxu0 0.0
    %2640 = vmatpush1.msra.mxu0 %v2588
    %2641 = vmatprep.subr.mxu0 0.0
    %2642 = vmatpush1.msra.mxu0 %v2587
    %2643 = vmatprep.subr.mxu0 0.0
    %2644 = vmatpush2.msra.mxu0 0.0
    %2645 = vmatprep.subr.mxu0 0.0
    %2646 = vmatpush2.msra.mxu0 0.0
    %2647 = vmatprep.subr.mxu0 0.0
    %2648 = vmatpush2.msra.mxu0 0.0
    %2649 = vmatprep.subr.mxu0 0.0
    %2650 = vmatpush2.msra.mxu0 0.0
    %2651 = vmatprep.subr.mxu0 0.0
    %2652 = vmatpush2.msra.mxu0 0.0
    %2653 = vmatprep.subr.mxu0 0.0
    %2654 = vmatpush2.msra.mxu0 0.0
    %2655 = vmatprep.subr.mxu0 0.0
    %2656 = vmatpush2.msra.mxu0 0.0
    %2657 = vmatprep.subr.mxu0 0.0
    %2658 = vmatpush2.msra.mxu0 0.0
    %2659 = vmatprep.subr.mxu0 0.0
    %2660 = vmatpush2.msra.mxu0 0.0
    %2661 = vmatprep.subr.mxu0 0.0
    %2662 = vmatpush2.msra.mxu0 0.0
    %2663 = vmatprep.subr.mxu0 0.0
    %2664 = vmatpush2.msra.mxu0 0.0
    %2665 = vmatprep.subr.mxu0 0.0
    %2666 = vmatpush2.msra.mxu0 0.0
    %2667 = vmatprep.subr.mxu0 0.0
    %2668 = vmatpush2.msra.mxu0 %v2606
    %2669 = vmatprep.subr.mxu0 0.0
    %2670 = vmatpush2.msra.mxu0 %v2605
    %2671 = vmatprep.subr.mxu0 0.0
    %2672 = vmatpush2.msra.mxu0 %v2604
    %2673 = vmatprep.subr.mxu0 0.0
    %2674 = vmatpush2.msra.mxu0 %v2603
    %2675 = vmatprep.mubr.f32.mxu0 %v2609
    %2676 = vmatmul.mubr.f32.gmra.mxu0 %v2582
    %v2677 = vpop.f32.mrf.mxu0
    %v2678 = vadd.f32 0.0, %v2677
    %v2679 = vpop.f32.mrf.mxu0
    %2680 = vdwg.mxu0
    %v2682 = vsel %vm2607, %v2488, 0
    %2684 = vmatprep.subr.mxu0 0.0
    %2685 = vmatpush1.msra.mxu0 %v2505
    %2686 = vmatprep.subr.mxu0 0.0
    %2687 = vmatpush1.msra.mxu0 %v2504
    %2688 = vmatprep.subr.mxu0 0.0
    %2689 = vmatpush1.msra.mxu0 %v2503
    %2690 = vmatprep.subr.mxu0 0.0
    %2691 = vmatpush1.msra.mxu0 %v2502
    %2692 = vmatprep.subr.mxu0 0.0
    %2693 = vmatpush1.msra.mxu0 %v2501
    %2694 = vmatprep.subr.mxu0 0.0
    %2695 = vmatpush1.msra.mxu0 %v2500
    %2696 = vmatprep.subr.mxu0 0.0
    %2697 = vmatpush1.msra.mxu0 %v2499
    %2698 = vmatprep.subr.mxu0 0.0
    %2699 = vmatpush1.msra.mxu0 %v2498
    %2700 = vmatprep.subr.mxu0 0.0
    %2701 = vmatpush1.msra.mxu0 %v2497
    %2702 = vmatprep.subr.mxu0 0.0
    %2703 = vmatpush1.msra.mxu0 %v2496
    %2704 = vmatprep.subr.mxu0 0.0
    %2705 = vmatpush1.msra.mxu0 %v2495
    %2706 = vmatprep.subr.mxu0 0.0
    %2707 = vmatpush1.msra.mxu0 %v2494
    %2708 = vmatprep.subr.mxu0 0.0
    %2709 = vmatpush1.msra.mxu0 %v2493
    %2710 = vmatprep.subr.mxu0 0.0
    %2711 = vmatpush1.msra.mxu0 %v2492
    %2712 = vmatprep.subr.mxu0 0.0
    %2713 = vmatpush1.msra.mxu0 %v2491
    %2714 = vmatprep.subr.mxu0 0.0
    %2715 = vmatpush1.msra.mxu0 %v2490
    %2716 = vmatprep.subr.mxu0 0.0
    %2717 = vmatpush2.msra.mxu0 0.0
    %2718 = vmatprep.subr.mxu0 0.0
    %2719 = vmatpush2.msra.mxu0 0.0
    %2720 = vmatprep.subr.mxu0 0.0
    %2721 = vmatpush2.msra.mxu0 0.0
    %2722 = vmatprep.subr.mxu0 0.0
    %2723 = vmatpush2.msra.mxu0 0.0
    %2724 = vmatprep.subr.mxu0 0.0
    %2725 = vmatpush2.msra.mxu0 0.0
    %2726 = vmatprep.subr.mxu0 0.0
    %2727 = vmatpush2.msra.mxu0 0.0
    %2728 = vmatprep.subr.mxu0 0.0
    %2729 = vmatpush2.msra.mxu0 0.0
    %2730 = vmatprep.subr.mxu0 0.0
    %2731 = vmatpush2.msra.mxu0 0.0
    %2732 = vmatprep.subr.mxu0 0.0
    %2733 = vmatpush2.msra.mxu0 0.0
    %2734 = vmatprep.subr.mxu0 0.0
    %2735 = vmatpush2.msra.mxu0 0.0
    %2736 = vmatprep.subr.mxu0 0.0
    %2737 = vmatpush2.msra.mxu0 0.0
    %2738 = vmatprep.subr.mxu0 0.0
    %2739 = vmatpush2.msra.mxu0 0.0
    %2740 = vmatprep.subr.mxu0 0.0
    %2741 = vmatpush2.msra.mxu0 %v2509
    %2742 = vmatprep.subr.mxu0 0.0
    %2743 = vmatpush2.msra.mxu0 %v2508
    %2744 = vmatprep.subr.mxu0 0.0
    %2745 = vmatpush2.msra.mxu0 %v2507
    %2746 = vmatprep.subr.mxu0 0.0
    %2747 = vmatpush2.msra.mxu0 %v2506
    %2748 = vmatprep.mubr.f32.mxu0 %v2682
    %2749 = vmatmul.mubr.f32.gmra.mxu0 %v2486
    %v2750 = vpop.f32.mrf.mxu0
    %v2751 = vadd.f32 %v2678, %v2750
    %v2752 = vpop.f32.mrf.mxu0
    %2753 = vdwg.mxu0
    %s2754 = scalar_lea.vmem [#allocation17], 16
    %v2755 = vld [vmem:[%s2754] sm:$0xff]
    %v2757 = vsel %vm2409, %v2755, 0
    %2759 = vmatprep.subr.mxu0 0.0
    %2760 = vmatpush1.msra.mxu0 0.0
    %2761 = vmatprep.subr.mxu0 0.0
    %2762 = vmatpush1.msra.mxu0 0.0
    %2763 = vmatprep.subr.mxu0 0.0
    %2764 = vmatpush1.msra.mxu0 0.0
    %2765 = vmatprep.subr.mxu0 0.0
    %2766 = vmatpush1.msra.mxu0 0.0
    %2767 = vmatprep.subr.mxu0 0.0
    %2768 = vmatpush1.msra.mxu0 0.0
    %2769 = vmatprep.subr.mxu0 0.0
    %2770 = vmatpush1.msra.mxu0 0.0
    %2771 = vmatprep.subr.mxu0 0.0
    %2772 = vmatpush1.msra.mxu0 0.0
    %2773 = vmatprep.subr.mxu0 0.0
    %2774 = vmatpush1.msra.mxu0 0.0
    %2775 = vmatprep.subr.mxu0 0.0
    %2776 = vmatpush1.msra.mxu0 0.0
    %2777 = vmatprep.subr.mxu0 0.0
    %2778 = vmatpush1.msra.mxu0 0.0
    %2779 = vmatprep.subr.mxu0 0.0
    %2780 = vmatpush1.msra.mxu0 0.0
    %2781 = vmatprep.subr.mxu0 0.0
    %2782 = vmatpush1.msra.mxu0 0.0
    %2783 = vmatprep.subr.mxu0 0.0
    %2784 = vmatpush1.msra.mxu0 0.0
    %2785 = vmatprep.subr.mxu0 %v2417
    %2786 = vmatpush1.msra.mxu0 %v2414
    %2787 = vmatprep.subr.mxu0 %v2405
    %2788 = vmatpush1.msra.mxu0 %v2404
    %2789 = vmatprep.subr.mxu0 %v2403
    %2790 = vmatpush1.msra.mxu0 %v2402
    %2791 = vmatprep.subr.mxu0 0.0
    %2792 = vmatpush2.msra.mxu0 0.0
    %2793 = vmatprep.subr.mxu0 0.0
    %2794 = vmatpush2.msra.mxu0 0.0
    %2795 = vmatprep.subr.mxu0 0.0
    %2796 = vmatpush2.msra.mxu0 0.0
    %2797 = vmatprep.subr.mxu0 0.0
    %2798 = vmatpush2.msra.mxu0 0.0
    %2799 = vmatprep.subr.mxu0 0.0
    %2800 = vmatpush2.msra.mxu0 0.0
    %2801 = vmatprep.subr.mxu0 0.0
    %2802 = vmatpush2.msra.mxu0 0.0
    %2803 = vmatprep.subr.mxu0 0.0
    %2804 = vmatpush2.msra.mxu0 0.0
    %2805 = vmatprep.subr.mxu0 0.0
    %2806 = vmatpush2.msra.mxu0 0.0
    %2807 = vmatprep.subr.mxu0 0.0
    %2808 = vmatpush2.msra.mxu0 0.0
    %2809 = vmatprep.subr.mxu0 0.0
    %2810 = vmatpush2.msra.mxu0 0.0
    %2811 = vmatprep.subr.mxu0 0.0
    %2812 = vmatpush2.msra.mxu0 0.0
    %2813 = vmatprep.subr.mxu0 0.0
    %2814 = vmatpush2.msra.mxu0 0.0
    %2815 = vmatprep.subr.mxu0 0.0
    %2816 = vmatpush2.msra.mxu0 0.0
    %2817 = vmatprep.subr.mxu0 0.0
    %2818 = vmatpush2.msra.mxu0 0.0
    %2819 = vmatprep.subr.mxu0 0.0
    %2820 = vmatpush2.msra.mxu0 0.0
    %2821 = vmatprep.subr.mxu0 0.0
    %2822 = vmatpush2.msra.mxu0 0.0
    %2823 = vmatprep.mubr.f32.mxu0 0.0
    %2824 = vmatmul.mubr.f32.gmra.mxu0 %v2757
    %v2825 = vpop.f32.mrf.mxu0
    %v2826 = vadd.f32 0.0, %v2825
    %v2827 = vpop.f32.mrf.mxu0
    %v2828 = vadd.f32 0.0, %v2827
    %2829 = vdwg.mxu0
    %s2830 = scalar_lea.vmem [#allocation19], 320
    %v2831 = vld [vmem:[%s2830] sm:$0xff]
    %v2832 = vld [vmem:[%s2830 + $0x8] sm:$0xff]
    %v2833 = vld [vmem:[%s2830 + $0x10] sm:$0xff]
    %v2834 = vld [vmem:[%s2830 + $0x18] sm:$0xff]
    %v2835 = vld [vmem:[%s2830 + $0x20] sm:$0xff]
    %v2836 = vld [vmem:[%s2830 + $0x28] sm:$0xff]
    %v2837 = vld [vmem:[%s2830 + $0x30] sm:$0xff]
    %v2838 = vld [vmem:[%s2830 + $0x38] sm:$0xff]
    %v2839 = vld [vmem:[%s2830 + $0x40] sm:$0xff]
    %v2840 = vld [vmem:[%s2830 + $0x48] sm:$0xff]
    %v2841 = vld [vmem:[%s2830 + $0x50] sm:$0xff]
    %v2842 = vld [vmem:[%s2830 + $0x58] sm:$0xff]
    %v2843 = vld [vmem:[%s2830 + $0x60] sm:$0xff]
    %v2844 = vld [vmem:[%s2830 + $0x68] sm:$0xff]
    %v2845 = vld [vmem:[%s2830 + $0x70] sm:$0xff]
    %v2846 = vld [vmem:[%s2830 + $0x78] sm:$0xff]
    %v2847 = vld [vmem:[%s2830 + $0x80] sm:$0xff]
    %v2848 = vld [vmem:[%s2830 + $0x88] sm:$0xff]
    %v2849 = vld [vmem:[%s2830 + $0x90] sm:$0xff]
    %v2850 = vld [vmem:[%s2830 + $0x98] sm:$0xff]
    %v2852 = vsel %vm2607, %v2828, 0
    %2854 = vmatprep.subr.mxu0 0.0
    %2855 = vmatpush1.msra.mxu0 %v2846
    %2856 = vmatprep.subr.mxu0 0.0
    %2857 = vmatpush1.msra.mxu0 %v2845
    %2858 = vmatprep.subr.mxu0 0.0
    %2859 = vmatpush1.msra.mxu0 %v2844
    %2860 = vmatprep.subr.mxu0 0.0
    %2861 = vmatpush1.msra.mxu0 %v2843
    %2862 = vmatprep.subr.mxu0 0.0
    %2863 = vmatpush1.msra.mxu0 %v2842
    %2864 = vmatprep.subr.mxu0 0.0
    %2865 = vmatpush1.msra.mxu0 %v2841
    %2866 = vmatprep.subr.mxu0 0.0
    %2867 = vmatpush1.msra.mxu0 %v2840
    %2868 = vmatprep.subr.mxu0 0.0
    %2869 = vmatpush1.msra.mxu0 %v2839
    %2870 = vmatprep.subr.mxu0 0.0
    %2871 = vmatpush1.msra.mxu0 %v2838
    %2872 = vmatprep.subr.mxu0 0.0
    %2873 = vmatpush1.msra.mxu0 %v2837
    %2874 = vmatprep.subr.mxu0 0.0
    %2875 = vmatpush1.msra.mxu0 %v2836
    %2876 = vmatprep.subr.mxu0 0.0
    %2877 = vmatpush1.msra.mxu0 %v2835
    %2878 = vmatprep.subr.mxu0 0.0
    %2879 = vmatpush1.msra.mxu0 %v2834
    %2880 = vmatprep.subr.mxu0 0.0
    %2881 = vmatpush1.msra.mxu0 %v2833
    %2882 = vmatprep.subr.mxu0 0.0
    %2883 = vmatpush1.msra.mxu0 %v2832
    %2884 = vmatprep.subr.mxu0 0.0
    %2885 = vmatpush1.msra.mxu0 %v2831
    %2886 = vmatprep.subr.mxu0 0.0
    %2887 = vmatpush2.msra.mxu0 0.0
    %2888 = vmatprep.subr.mxu0 0.0
    %2889 = vmatpush2.msra.mxu0 0.0
    %2890 = vmatprep.subr.mxu0 0.0
    %2891 = vmatpush2.msra.mxu0 0.0
    %2892 = vmatprep.subr.mxu0 0.0
    %2893 = vmatpush2.msra.mxu0 0.0
    %2894 = vmatprep.subr.mxu0 0.0
    %2895 = vmatpush2.msra.mxu0 0.0
    %2896 = vmatprep.subr.mxu0 0.0
    %2897 = vmatpush2.msra.mxu0 0.0
    %2898 = vmatprep.subr.mxu0 0.0
    %2899 = vmatpush2.msra.mxu0 0.0
    %2900 = vmatprep.subr.mxu0 0.0
    %2901 = vmatpush2.msra.mxu0 0.0
    %2902 = vmatprep.subr.mxu0 0.0
    %2903 = vmatpush2.msra.mxu0 0.0
    %2904 = vmatprep.subr.mxu0 0.0
    %2905 = vmatpush2.msra.mxu0 0.0
    %2906 = vmatprep.subr.mxu0 0.0
    %2907 = vmatpush2.msra.mxu0 0.0
    %2908 = vmatprep.subr.mxu0 0.0
    %2909 = vmatpush2.msra.mxu0 0.0
    %2910 = vmatprep.subr.mxu0 0.0
    %2911 = vmatpush2.msra.mxu0 %v2850
    %2912 = vmatprep.subr.mxu0 0.0
    %2913 = vmatpush2.msra.mxu0 %v2849
    %2914 = vmatprep.subr.mxu0 0.0
    %2915 = vmatpush2.msra.mxu0 %v2848
    %2916 = vmatprep.subr.mxu0 0.0
    %2917 = vmatpush2.msra.mxu0 %v2847
    %2918 = vmatprep.mubr.f32.mxu0 %v2852
    %2919 = vmatmul.mubr.f32.gmra.mxu0 %v2826
    %v2920 = vpop.f32.mrf.mxu0
    %v2921 = vadd.f32 0.0, %v2920
    %v2922 = vpop.f32.mrf.mxu0
    %2923 = vdwg.mxu0
    %v2924 = vadd.f32 %v2751, %v2921
    %v2925 = vld [vmem:[%s12] sm:$0x1]
    %v2927 = vlaneseq
    %v2928 = vshrl.u32 %v2927, 7
    %v2929 = vsub.s32 0, %v2928
    %v2930 = vrot.slane %v2925, %v2929
    %v2932 = vadd.f32 %v2924, %v2930
    %v2933 = vmax.f32 %v2932, 0.0
    %v2934 = vld [vmem:[%s13] sm:$0x3]
    %vm2935 = vcmask 64512
    %v2937 = vsel %vm2935, %v2934, 0
    %2939 = vmatprep.subr.mxu0 0.0
    %2940 = vmatpush1.msra.mxu0 0.0
    %2941 = vmatprep.subr.mxu0 0.0
    %2942 = vmatpush1.msra.mxu0 0.0
    %2943 = vmatprep.subr.mxu0 0.0
    %2944 = vmatpush1.msra.mxu0 0.0
    %2945 = vmatprep.subr.mxu0 0.0
    %2946 = vmatpush1.msra.mxu0 0.0
    %2947 = vmatprep.subr.mxu0 0.0
    %2948 = vmatpush1.msra.mxu0 0.0
    %2949 = vmatprep.subr.mxu0 0.0
    %2950 = vmatpush1.msra.mxu0 0.0
    %2951 = vmatprep.subr.mxu0 0.0
    %2952 = vmatpush1.msra.mxu0 0.0
    %2953 = vmatprep.subr.mxu0 0.0
    %2954 = vmatpush1.msra.mxu0 0.0
    %2955 = vmatprep.subr.mxu0 0.0
    %2956 = vmatpush1.msra.mxu0 0.0
    %2957 = vmatprep.subr.mxu0 0.0
    %2958 = vmatpush1.msra.mxu0 0.0
    %2959 = vmatprep.subr.mxu0 0.0
    %2960 = vmatpush1.msra.mxu0 0.0
    %2961 = vmatprep.subr.mxu0 0.0
    %2962 = vmatpush1.msra.mxu0 0.0
    %2963 = vmatprep.subr.mxu0 0.0
    %2964 = vmatpush1.msra.mxu0 0.0
    %2965 = vmatprep.subr.mxu0 0.0
    %2966 = vmatpush1.msra.mxu0 0.0
    %2967 = vmatprep.subr.mxu0 0.0
    %2968 = vmatpush1.msra.mxu0 0.0
    %2969 = vmatprep.subr.mxu0 0.0
    %2970 = vmatpush1.msra.mxu0 %v2933
    %2971 = vmatprep.subr.mxu0 0.0
    %2972 = vmatpush2.msra.mxu0 0.0
    %2973 = vmatprep.subr.mxu0 0.0
    %2974 = vmatpush2.msra.mxu0 0.0
    %2975 = vmatprep.subr.mxu0 0.0
    %2976 = vmatpush2.msra.mxu0 0.0
    %2977 = vmatprep.subr.mxu0 0.0
    %2978 = vmatpush2.msra.mxu0 0.0
    %2979 = vmatprep.subr.mxu0 0.0
    %2980 = vmatpush2.msra.mxu0 0.0
    %2981 = vmatprep.subr.mxu0 0.0
    %2982 = vmatpush2.msra.mxu0 0.0
    %2983 = vmatprep.subr.mxu0 0.0
    %2984 = vmatpush2.msra.mxu0 0.0
    %2985 = vmatprep.subr.mxu0 0.0
    %2986 = vmatpush2.msra.mxu0 0.0
    %2987 = vmatprep.subr.mxu0 0.0
    %2988 = vmatpush2.msra.mxu0 0.0
    %2989 = vmatprep.subr.mxu0 0.0
    %2990 = vmatpush2.msra.mxu0 0.0
    %2991 = vmatprep.subr.mxu0 0.0
    %2992 = vmatpush2.msra.mxu0 0.0
    %2993 = vmatprep.subr.mxu0 0.0
    %2994 = vmatpush2.msra.mxu0 0.0
    %2995 = vmatprep.subr.mxu0 0.0
    %2996 = vmatpush2.msra.mxu0 0.0
    %2997 = vmatprep.subr.mxu0 0.0
    %2998 = vmatpush2.msra.mxu0 0.0
    %2999 = vmatprep.subr.mxu0 0.0
    %3000 = vmatpush2.msra.mxu0 0.0
    %3001 = vmatprep.subr.mxu0 0.0
    %3002 = vmatpush2.msra.mxu0 0.0
    %3003 = vmatprep.mubr.f32.mxu0 0.0
    %3004 = vmatmul.mubr.f32.gmra.mxu0 %v2937
    %v3005 = vpop.f32.mrf.mxu0
    %v3006 = vadd.f32 0.0, %v3005
    %v3007 = vpop.f32.mrf.mxu0
    %3008 = vdwg.mxu0
    %v3009 = vld [vmem:[#allocation20] sm:$0xff]
    %v3010 = vld [vmem:[#allocation20 + $0x8] sm:$0xff]
    %v3011 = vld [vmem:[#allocation20 + $0x10] sm:$0xff]
    %v3012 = vld [vmem:[#allocation20 + $0x18] sm:$0xff]
    %v3013 = vld [vmem:[#allocation20 + $0x20] sm:$0xff]
    %v3014 = vld [vmem:[#allocation20 + $0x28] sm:$0xff]
    %v3015 = vld [vmem:[#allocation20 + $0x30] sm:$0xff]
    %v3016 = vld [vmem:[#allocation20 + $0x38] sm:$0xff]
    %v3017 = vld [vmem:[#allocation20 + $0x40] sm:$0xff]
    %v3018 = vld [vmem:[#allocation20 + $0x48] sm:$0xff]
    %v3019 = vld [vmem:[#allocation20 + $0x50] sm:$0xff]
    %v3020 = vld [vmem:[#allocation20 + $0x58] sm:$0xff]
    %v3021 = vld [vmem:[#allocation20 + $0x60] sm:$0xff]
    %v3022 = vld [vmem:[#allocation20 + $0x68] sm:$0xff]
    %v3023 = vld [vmem:[#allocation20 + $0x70] sm:$0xff]
    %v3024 = vld [vmem:[#allocation20 + $0x78] sm:$0xff]
    %v3025 = vld [vmem:[#allocation20 + $0x80] sm:$0xff]
    %v3026 = vld [vmem:[#allocation20 + $0x88] sm:$0xff]
    %v3027 = vld [vmem:[#allocation20 + $0x90] sm:$0xff]
    %v3028 = vld [vmem:[#allocation20 + $0x98] sm:$0xff]
    %v3029 = vld [vmem:[#allocation20 + $0xa0] sm:$0xff]
    %v3030 = vld [vmem:[#allocation20 + $0xa8] sm:$0xff]
    %v3031 = vld [vmem:[#allocation20 + $0xb0] sm:$0xff]
    %v3032 = vld [vmem:[#allocation20 + $0xb8] sm:$0xff]
    %v3033 = vld [vmem:[#allocation20 + $0xc0] sm:$0xff]
    %v3034 = vld [vmem:[#allocation20 + $0xc8] sm:$0xff]
    %v3035 = vld [vmem:[#allocation20 + $0xd0] sm:$0xff]
    %v3036 = vld [vmem:[#allocation20 + $0xd8] sm:$0xff]
    %v3037 = vld [vmem:[#allocation20 + $0xe0] sm:$0xff]
    %v3038 = vld [vmem:[#allocation20 + $0xe8] sm:$0xff]
    %v3039 = vld [vmem:[#allocation20 + $0xf0] sm:$0xff]
    %v3040 = vld [vmem:[#allocation20 + $0xf8] sm:$0xff]
    %s3041 = scalar_lea.vmem %s13, 2
    %v3042 = vld [vmem:[%s3041] sm:$0x3]
    %v3044 = vsel %vm2935, %v3042, 0
    %3046 = vmatprep.subr.mxu0 0.0
    %3047 = vmatpush1.msra.mxu0 0.0
    %3048 = vmatprep.subr.mxu0 0.0
    %3049 = vmatpush1.msra.mxu0 0.0
    %3050 = vmatprep.subr.mxu0 0.0
    %3051 = vmatpush1.msra.mxu0 0.0
    %3052 = vmatprep.subr.mxu0 0.0
    %3053 = vmatpush1.msra.mxu0 0.0
    %3054 = vmatprep.subr.mxu0 0.0
    %3055 = vmatpush1.msra.mxu0 0.0
    %3056 = vmatprep.subr.mxu0 0.0
    %3057 = vmatpush1.msra.mxu0 0.0
    %3058 = vmatprep.subr.mxu0 0.0
    %3059 = vmatpush1.msra.mxu0 0.0
    %3060 = vmatprep.subr.mxu0 0.0
    %3061 = vmatpush1.msra.mxu0 0.0
    %3062 = vmatprep.subr.mxu0 0.0
    %3063 = vmatpush1.msra.mxu0 0.0
    %3064 = vmatprep.subr.mxu0 0.0
    %3065 = vmatpush1.msra.mxu0 0.0
    %3066 = vmatprep.subr.mxu0 0.0
    %3067 = vmatpush1.msra.mxu0 0.0
    %3068 = vmatprep.subr.mxu0 0.0
    %3069 = vmatpush1.msra.mxu0 0.0
    %3070 = vmatprep.subr.mxu0 0.0
    %3071 = vmatpush1.msra.mxu0 0.0
    %3072 = vmatprep.subr.mxu0 0.0
    %3073 = vmatpush1.msra.mxu0 0.0
    %3074 = vmatprep.subr.mxu0 0.0
    %3075 = vmatpush1.msra.mxu0 0.0
    %3076 = vmatprep.subr.mxu0 0.0
    %3077 = vmatpush1.msra.mxu0 %v2933
    %3078 = vmatprep.subr.mxu0 0.0
    %3079 = vmatpush2.msra.mxu0 0.0
    %3080 = vmatprep.subr.mxu0 0.0
    %3081 = vmatpush2.msra.mxu0 0.0
    %3082 = vmatprep.subr.mxu0 0.0
    %3083 = vmatpush2.msra.mxu0 0.0
    %3084 = vmatprep.subr.mxu0 0.0
    %3085 = vmatpush2.msra.mxu0 0.0
    %3086 = vmatprep.subr.mxu0 0.0
    %3087 = vmatpush2.msra.mxu0 0.0
    %3088 = vmatprep.subr.mxu0 0.0
    %3089 = vmatpush2.msra.mxu0 0.0
    %3090 = vmatprep.subr.mxu0 0.0
    %3091 = vmatpush2.msra.mxu0 0.0
    %3092 = vmatprep.subr.mxu0 0.0
    %3093 = vmatpush2.msra.mxu0 0.0
    %3094 = vmatprep.subr.mxu0 0.0
    %3095 = vmatpush2.msra.mxu0 0.0
    %3096 = vmatprep.subr.mxu0 0.0
    %3097 = vmatpush2.msra.mxu0 0.0
    %3098 = vmatprep.subr.mxu0 0.0
    %3099 = vmatpush2.msra.mxu0 0.0
    %3100 = vmatprep.subr.mxu0 0.0
    %3101 = vmatpush2.msra.mxu0 0.0
    %3102 = vmatprep.subr.mxu0 0.0
    %3103 = vmatpush2.msra.mxu0 0.0
    %3104 = vmatprep.subr.mxu0 0.0
    %3105 = vmatpush2.msra.mxu0 0.0
    %3106 = vmatprep.subr.mxu0 0.0
    %3107 = vmatpush2.msra.mxu0 0.0
    %3108 = vmatprep.subr.mxu0 0.0
    %3109 = vmatpush2.msra.mxu0 0.0
    %3110 = vmatprep.mubr.f32.mxu0 0.0
    %3111 = vmatmul.mubr.f32.gmra.mxu0 %v3044
    %v3112 = vpop.f32.mrf.mxu0
    %v3113 = vadd.f32 0.0, %v3112
    %v3114 = vpop.f32.mrf.mxu0
    %3115 = vdwg.mxu0
    %s3116 = scalar_lea.vmem [#allocation20], 256
    %v3117 = vld [vmem:[%s3116] sm:$0xff]
    %v3118 = vld [vmem:[%s3116 + $0x8] sm:$0xff]
    %v3119 = vld [vmem:[%s3116 + $0x10] sm:$0xff]
    %v3120 = vld [vmem:[%s3116 + $0x18] sm:$0xff]
    %v3121 = vld [vmem:[%s3116 + $0x20] sm:$0xff]
    %v3122 = vld [vmem:[%s3116 + $0x28] sm:$0xff]
    %v3123 = vld [vmem:[%s3116 + $0x30] sm:$0xff]
    %v3124 = vld [vmem:[%s3116 + $0x38] sm:$0xff]
    %v3125 = vld [vmem:[%s3116 + $0x40] sm:$0xff]
    %v3126 = vld [vmem:[%s3116 + $0x48] sm:$0xff]
    %v3127 = vld [vmem:[%s3116 + $0x50] sm:$0xff]
    %v3128 = vld [vmem:[%s3116 + $0x58] sm:$0xff]
    %v3129 = vld [vmem:[%s3116 + $0x60] sm:$0xff]
    %v3130 = vld [vmem:[%s3116 + $0x68] sm:$0xff]
    %v3131 = vld [vmem:[%s3116 + $0x70] sm:$0xff]
    %v3132 = vld [vmem:[%s3116 + $0x78] sm:$0xff]
    %v3133 = vld [vmem:[%s3116 + $0x80] sm:$0xff]
    %v3134 = vld [vmem:[%s3116 + $0x88] sm:$0xff]
    %v3135 = vld [vmem:[%s3116 + $0x90] sm:$0xff]
    %v3136 = vld [vmem:[%s3116 + $0x98] sm:$0xff]
    %v3137 = vld [vmem:[%s3116 + $0xa0] sm:$0xff]
    %v3138 = vld [vmem:[%s3116 + $0xa8] sm:$0xff]
    %v3139 = vld [vmem:[%s3116 + $0xb0] sm:$0xff]
    %v3140 = vld [vmem:[%s3116 + $0xb8] sm:$0xff]
    %v3141 = vld [vmem:[%s3116 + $0xc0] sm:$0xff]
    %v3142 = vld [vmem:[%s3116 + $0xc8] sm:$0xff]
    %v3143 = vld [vmem:[%s3116 + $0xd0] sm:$0xff]
    %v3144 = vld [vmem:[%s3116 + $0xd8] sm:$0xff]
    %v3145 = vld [vmem:[%s3116 + $0xe0] sm:$0xff]
    %v3146 = vld [vmem:[%s3116 + $0xe8] sm:$0xff]
    %v3147 = vld [vmem:[%s3116 + $0xf0] sm:$0xff]
    %v3148 = vld [vmem:[%s3116 + $0xf8] sm:$0xff]
    %vm3149 = vcmask 523264
    %v3151 = vsel %vm3149, %v3113, 0
    %3153 = vmatprep.subr.mxu0 0.0
    %3154 = vmatpush1.msra.mxu0 0.0
    %3155 = vmatprep.subr.mxu0 0.0
    %3156 = vmatpush1.msra.mxu0 0.0
    %3157 = vmatprep.subr.mxu0 0.0
    %3158 = vmatpush1.msra.mxu0 0.0
    %3159 = vmatprep.subr.mxu0 0.0
    %3160 = vmatpush1.msra.mxu0 0.0
    %3161 = vmatprep.subr.mxu0 0.0
    %3162 = vmatpush1.msra.mxu0 0.0
    %3163 = vmatprep.subr.mxu0 0.0
    %3164 = vmatpush1.msra.mxu0 0.0
    %3165 = vmatprep.subr.mxu0 0.0
    %3166 = vmatpush1.msra.mxu0 0.0
    %3167 = vmatprep.subr.mxu0 0.0
    %3168 = vmatpush1.msra.mxu0 0.0
    %3169 = vmatprep.subr.mxu0 %v3146
    %3170 = vmatpush1.msra.mxu0 %v3145
    %3171 = vmatprep.subr.mxu0 %v3142
    %3172 = vmatpush1.msra.mxu0 %v3141
    %3173 = vmatprep.subr.mxu0 %v3138
    %3174 = vmatpush1.msra.mxu0 %v3137
    %3175 = vmatprep.subr.mxu0 %v3134
    %3176 = vmatpush1.msra.mxu0 %v3133
    %3177 = vmatprep.subr.mxu0 %v3130
    %3178 = vmatpush1.msra.mxu0 %v3129
    %3179 = vmatprep.subr.mxu0 %v3126
    %3180 = vmatpush1.msra.mxu0 %v3125
    %3181 = vmatprep.subr.mxu0 %v3122
    %3182 = vmatpush1.msra.mxu0 %v3121
    %3183 = vmatprep.subr.mxu0 %v3118
    %3184 = vmatpush1.msra.mxu0 %v3117
    %3185 = vmatprep.subr.mxu0 0.0
    %3186 = vmatpush2.msra.mxu0 0.0
    %3187 = vmatprep.subr.mxu0 0.0
    %3188 = vmatpush2.msra.mxu0 0.0
    %3189 = vmatprep.subr.mxu0 0.0
    %3190 = vmatpush2.msra.mxu0 0.0
    %3191 = vmatprep.subr.mxu0 0.0
    %3192 = vmatpush2.msra.mxu0 0.0
    %3193 = vmatprep.subr.mxu0 0.0
    %3194 = vmatpush2.msra.mxu0 0.0
    %3195 = vmatprep.subr.mxu0 0.0
    %3196 = vmatpush2.msra.mxu0 0.0
    %3197 = vmatprep.subr.mxu0 0.0
    %3198 = vmatpush2.msra.mxu0 0.0
    %3199 = vmatprep.subr.mxu0 0.0
    %3200 = vmatpush2.msra.mxu0 0.0
    %3201 = vmatprep.subr.mxu0 0.0
    %3202 = vmatpush2.msra.mxu0 0.0
    %3203 = vmatprep.subr.mxu0 0.0
    %3204 = vmatpush2.msra.mxu0 0.0
    %3205 = vmatprep.subr.mxu0 0.0
    %3206 = vmatpush2.msra.mxu0 0.0
    %3207 = vmatprep.subr.mxu0 0.0
    %3208 = vmatpush2.msra.mxu0 0.0
    %3209 = vmatprep.subr.mxu0 0.0
    %3210 = vmatpush2.msra.mxu0 0.0
    %3211 = vmatprep.subr.mxu0 0.0
    %3212 = vmatpush2.msra.mxu0 0.0
    %3213 = vmatprep.subr.mxu0 0.0
    %3214 = vmatpush2.msra.mxu0 0.0
    %3215 = vmatprep.subr.mxu0 0.0
    %3216 = vmatpush2.msra.mxu0 0.0
    %3217 = vmatprep.mubr.f32.mxu0 0.0
    %3218 = vmatmul.mubr.f32.gmra.mxu0 %v3151
    %v3219 = vpop.f32.mrf.mxu0
    %v3220 = vadd.f32 0.0, %v3219
    %v3221 = vpop.f32.mrf.mxu0
    %v3222 = vadd.f32 0.0, %v3221
    %3223 = vdwg.mxu0
    %3224 = vmatprep.subr.mxu0 0.0
    %3225 = vmatpush1.msra.mxu0 0.0
    %3226 = vmatprep.subr.mxu0 0.0
    %3227 = vmatpush1.msra.mxu0 0.0
    %3228 = vmatprep.subr.mxu0 0.0
    %3229 = vmatpush1.msra.mxu0 0.0
    %3230 = vmatprep.subr.mxu0 0.0
    %3231 = vmatpush1.msra.mxu0 0.0
    %3232 = vmatprep.subr.mxu0 0.0
    %3233 = vmatpush1.msra.mxu0 0.0
    %3234 = vmatprep.subr.mxu0 0.0
    %3235 = vmatpush1.msra.mxu0 0.0
    %3236 = vmatprep.subr.mxu0 0.0
    %3237 = vmatpush1.msra.mxu0 0.0
    %3238 = vmatprep.subr.mxu0 0.0
    %3239 = vmatpush1.msra.mxu0 0.0
    %3240 = vmatprep.subr.mxu0 %v3148
    %3241 = vmatpush1.msra.mxu0 %v3147
    %3242 = vmatprep.subr.mxu0 %v3144
    %3243 = vmatpush1.msra.mxu0 %v3143
    %3244 = vmatprep.subr.mxu0 %v3140
    %3245 = vmatpush1.msra.mxu0 %v3139
    %3246 = vmatprep.subr.mxu0 %v3136
    %3247 = vmatpush1.msra.mxu0 %v3135
    %3248 = vmatprep.subr.mxu0 %v3132
    %3249 = vmatpush1.msra.mxu0 %v3131
    %3250 = vmatprep.subr.mxu0 %v3128
    %3251 = vmatpush1.msra.mxu0 %v3127
    %3252 = vmatprep.subr.mxu0 %v3124
    %3253 = vmatpush1.msra.mxu0 %v3123
    %3254 = vmatprep.subr.mxu0 %v3120
    %3255 = vmatpush1.msra.mxu0 %v3119
    %3256 = vmatprep.subr.mxu0 0.0
    %3257 = vmatpush2.msra.mxu0 0.0
    %3258 = vmatprep.subr.mxu0 0.0
    %3259 = vmatpush2.msra.mxu0 0.0
    %3260 = vmatprep.subr.mxu0 0.0
    %3261 = vmatpush2.msra.mxu0 0.0
    %3262 = vmatprep.subr.mxu0 0.0
    %3263 = vmatpush2.msra.mxu0 0.0
    %3264 = vmatprep.subr.mxu0 0.0
    %3265 = vmatpush2.msra.mxu0 0.0
    %3266 = vmatprep.subr.mxu0 0.0
    %3267 = vmatpush2.msra.mxu0 0.0
    %3268 = vmatprep.subr.mxu0 0.0
    %3269 = vmatpush2.msra.mxu0 0.0
    %3270 = vmatprep.subr.mxu0 0.0
    %3271 = vmatpush2.msra.mxu0 0.0
    %3272 = vmatprep.subr.mxu0 0.0
    %3273 = vmatpush2.msra.mxu0 0.0
    %3274 = vmatprep.subr.mxu0 0.0
    %3275 = vmatpush2.msra.mxu0 0.0
    %3276 = vmatprep.subr.mxu0 0.0
    %3277 = vmatpush2.msra.mxu0 0.0
    %3278 = vmatprep.subr.mxu0 0.0
    %3279 = vmatpush2.msra.mxu0 0.0
    %3280 = vmatprep.subr.mxu0 0.0
    %3281 = vmatpush2.msra.mxu0 0.0
    %3282 = vmatprep.subr.mxu0 0.0
    %3283 = vmatpush2.msra.mxu0 0.0
    %3284 = vmatprep.subr.mxu0 0.0
    %3285 = vmatpush2.msra.mxu0 0.0
    %3286 = vmatprep.subr.mxu0 0.0
    %3287 = vmatpush2.msra.mxu0 0.0
    %3288 = vmatprep.mubr.f32.mxu0 0.0
    %3289 = vmatmul.mubr.f32.gmra.mxu0 %v3151
    %v3290 = vpop.f32.mrf.mxu0
    %v3291 = vadd.f32 0.0, %v3290
    %v3292 = vpop.f32.mrf.mxu0
    %v3293 = vadd.f32 0.0, %v3292
    %3294 = vdwg.mxu0
    %v3296 = vsel %vm3149, %v3006, 0
    %3298 = vmatprep.subr.mxu0 0.0
    %3299 = vmatpush1.msra.mxu0 0.0
    %3300 = vmatprep.subr.mxu0 0.0
    %3301 = vmatpush1.msra.mxu0 0.0
    %3302 = vmatprep.subr.mxu0 0.0
    %3303 = vmatpush1.msra.mxu0 0.0
    %3304 = vmatprep.subr.mxu0 0.0
    %3305 = vmatpush1.msra.mxu0 0.0
    %3306 = vmatprep.subr.mxu0 0.0
    %3307 = vmatpush1.msra.mxu0 0.0
    %3308 = vmatprep.subr.mxu0 0.0
    %3309 = vmatpush1.msra.mxu0 0.0
    %3310 = vmatprep.subr.mxu0 0.0
    %3311 = vmatpush1.msra.mxu0 0.0
    %3312 = vmatprep.subr.mxu0 0.0
    %3313 = vmatpush1.msra.mxu0 0.0
    %3314 = vmatprep.subr.mxu0 %v3038
    %3315 = vmatpush1.msra.mxu0 %v3037
    %3316 = vmatprep.subr.mxu0 %v3034
    %3317 = vmatpush1.msra.mxu0 %v3033
    %3318 = vmatprep.subr.mxu0 %v3030
    %3319 = vmatpush1.msra.mxu0 %v3029
    %3320 = vmatprep.subr.mxu0 %v3026
    %3321 = vmatpush1.msra.mxu0 %v3025
    %3322 = vmatprep.subr.mxu0 %v3022
    %3323 = vmatpush1.msra.mxu0 %v3021
    %3324 = vmatprep.subr.mxu0 %v3018
    %3325 = vmatpush1.msra.mxu0 %v3017
    %3326 = vmatprep.subr.mxu0 %v3014
    %3327 = vmatpush1.msra.mxu0 %v3013
    %3328 = vmatprep.subr.mxu0 %v3010
    %3329 = vmatpush1.msra.mxu0 %v3009
    %3330 = vmatprep.subr.mxu0 0.0
    %3331 = vmatpush2.msra.mxu0 0.0
    %3332 = vmatprep.subr.mxu0 0.0
    %3333 = vmatpush2.msra.mxu0 0.0
    %3334 = vmatprep.subr.mxu0 0.0
    %3335 = vmatpush2.msra.mxu0 0.0
    %3336 = vmatprep.subr.mxu0 0.0
    %3337 = vmatpush2.msra.mxu0 0.0
    %3338 = vmatprep.subr.mxu0 0.0
    %3339 = vmatpush2.msra.mxu0 0.0
    %3340 = vmatprep.subr.mxu0 0.0
    %3341 = vmatpush2.msra.mxu0 0.0
    %3342 = vmatprep.subr.mxu0 0.0
    %3343 = vmatpush2.msra.mxu0 0.0
    %3344 = vmatprep.subr.mxu0 0.0
    %3345 = vmatpush2.msra.mxu0 0.0
    %3346 = vmatprep.subr.mxu0 0.0
    %3347 = vmatpush2.msra.mxu0 0.0
    %3348 = vmatprep.subr.mxu0 0.0
    %3349 = vmatpush2.msra.mxu0 0.0
    %3350 = vmatprep.subr.mxu0 0.0
    %3351 = vmatpush2.msra.mxu0 0.0
    %3352 = vmatprep.subr.mxu0 0.0
    %3353 = vmatpush2.msra.mxu0 0.0
    %3354 = vmatprep.subr.mxu0 0.0
    %3355 = vmatpush2.msra.mxu0 0.0
    %3356 = vmatprep.subr.mxu0 0.0
    %3357 = vmatpush2.msra.mxu0 0.0
    %3358 = vmatprep.subr.mxu0 0.0
    %3359 = vmatpush2.msra.mxu0 0.0
    %3360 = vmatprep.subr.mxu0 0.0
    %3361 = vmatpush2.msra.mxu0 0.0
    %3362 = vmatprep.mubr.f32.mxu0 0.0
    %3363 = vmatmul.mubr.f32.gmra.mxu0 %v3296
    %v3364 = vpop.f32.mrf.mxu0
    %v3365 = vadd.f32 %v3220, %v3364
    %v3366 = vpop.f32.mrf.mxu0
    %v3367 = vadd.f32 %v3222, %v3366
    %3368 = vdwg.mxu0
    %3369 = vmatprep.subr.mxu0 0.0
    %3370 = vmatpush1.msra.mxu0 0.0
    %3371 = vmatprep.subr.mxu0 0.0
    %3372 = vmatpush1.msra.mxu0 0.0
    %3373 = vmatprep.subr.mxu0 0.0
    %3374 = vmatpush1.msra.mxu0 0.0
    %3375 = vmatprep.subr.mxu0 0.0
    %3376 = vmatpush1.msra.mxu0 0.0
    %3377 = vmatprep.subr.mxu0 0.0
    %3378 = vmatpush1.msra.mxu0 0.0
    %3379 = vmatprep.subr.mxu0 0.0
    %3380 = vmatpush1.msra.mxu0 0.0
    %3381 = vmatprep.subr.mxu0 0.0
    %3382 = vmatpush1.msra.mxu0 0.0
    %3383 = vmatprep.subr.mxu0 0.0
    %3384 = vmatpush1.msra.mxu0 0.0
    %3385 = vmatprep.subr.mxu0 %v3040
    %3386 = vmatpush1.msra.mxu0 %v3039
    %3387 = vmatprep.subr.mxu0 %v3036
    %3388 = vmatpush1.msra.mxu0 %v3035
    %3389 = vmatprep.subr.mxu0 %v3032
    %3390 = vmatpush1.msra.mxu0 %v3031
    %3391 = vmatprep.subr.mxu0 %v3028
    %3392 = vmatpush1.msra.mxu0 %v3027
    %3393 = vmatprep.subr.mxu0 %v3024
    %3394 = vmatpush1.msra.mxu0 %v3023
    %3395 = vmatprep.subr.mxu0 %v3020
    %3396 = vmatpush1.msra.mxu0 %v3019
    %3397 = vmatprep.subr.mxu0 %v3016
    %3398 = vmatpush1.msra.mxu0 %v3015
    %3399 = vmatprep.subr.mxu0 %v3012
    %3400 = vmatpush1.msra.mxu0 %v3011
    %3401 = vmatprep.subr.mxu0 0.0
    %3402 = vmatpush2.msra.mxu0 0.0
    %3403 = vmatprep.subr.mxu0 0.0
    %3404 = vmatpush2.msra.mxu0 0.0
    %3405 = vmatprep.subr.mxu0 0.0
    %3406 = vmatpush2.msra.mxu0 0.0
    %3407 = vmatprep.subr.mxu0 0.0
    %3408 = vmatpush2.msra.mxu0 0.0
    %3409 = vmatprep.subr.mxu0 0.0
    %3410 = vmatpush2.msra.mxu0 0.0
    %3411 = vmatprep.subr.mxu0 0.0
    %3412 = vmatpush2.msra.mxu0 0.0
    %3413 = vmatprep.subr.mxu0 0.0
    %3414 = vmatpush2.msra.mxu0 0.0
    %3415 = vmatprep.subr.mxu0 0.0
    %3416 = vmatpush2.msra.mxu0 0.0
    %3417 = vmatprep.subr.mxu0 0.0
    %3418 = vmatpush2.msra.mxu0 0.0
    %3419 = vmatprep.subr.mxu0 0.0
    %3420 = vmatpush2.msra.mxu0 0.0
    %3421 = vmatprep.subr.mxu0 0.0
    %3422 = vmatpush2.msra.mxu0 0.0
    %3423 = vmatprep.subr.mxu0 0.0
    %3424 = vmatpush2.msra.mxu0 0.0
    %3425 = vmatprep.subr.mxu0 0.0
    %3426 = vmatpush2.msra.mxu0 0.0
    %3427 = vmatprep.subr.mxu0 0.0
    %3428 = vmatpush2.msra.mxu0 0.0
    %3429 = vmatprep.subr.mxu0 0.0
    %3430 = vmatpush2.msra.mxu0 0.0
    %3431 = vmatprep.subr.mxu0 0.0
    %3432 = vmatpush2.msra.mxu0 0.0
    %3433 = vmatprep.mubr.f32.mxu0 0.0
    %3434 = vmatmul.mubr.f32.gmra.mxu0 %v3296
    %v3435 = vpop.f32.mrf.mxu0
    %v3436 = vadd.f32 %v3291, %v3435
    %v3437 = vpop.f32.mrf.mxu0
    %v3438 = vadd.f32 %v3293, %v3437
    %3439 = vdwg.mxu0
    %s3440 = scalar_lea.vmem %s13, 4
    %v3441 = vld [vmem:[%s3440] sm:$0x3]
    %v3443 = vsel %vm2935, %v3441, 0
    %3445 = vmatprep.subr.mxu0 0.0
    %3446 = vmatpush1.msra.mxu0 0.0
    %3447 = vmatprep.subr.mxu0 0.0
    %3448 = vmatpush1.msra.mxu0 0.0
    %3449 = vmatprep.subr.mxu0 0.0
    %3450 = vmatpush1.msra.mxu0 0.0
    %3451 = vmatprep.subr.mxu0 0.0
    %3452 = vmatpush1.msra.mxu0 0.0
    %3453 = vmatprep.subr.mxu0 0.0
    %3454 = vmatpush1.msra.mxu0 0.0
    %3455 = vmatprep.subr.mxu0 0.0
    %3456 = vmatpush1.msra.mxu0 0.0
    %3457 = vmatprep.subr.mxu0 0.0
    %3458 = vmatpush1.msra.mxu0 0.0
    %3459 = vmatprep.subr.mxu0 0.0
    %3460 = vmatpush1.msra.mxu0 0.0
    %3461 = vmatprep.subr.mxu0 0.0
    %3462 = vmatpush1.msra.mxu0 0.0
    %3463 = vmatprep.subr.mxu0 0.0
    %3464 = vmatpush1.msra.mxu0 0.0
    %3465 = vmatprep.subr.mxu0 0.0
    %3466 = vmatpush1.msra.mxu0 0.0
    %3467 = vmatprep.subr.mxu0 0.0
    %3468 = vmatpush1.msra.mxu0 0.0
    %3469 = vmatprep.subr.mxu0 0.0
    %3470 = vmatpush1.msra.mxu0 0.0
    %3471 = vmatprep.subr.mxu0 0.0
    %3472 = vmatpush1.msra.mxu0 0.0
    %3473 = vmatprep.subr.mxu0 0.0
    %3474 = vmatpush1.msra.mxu0 0.0
    %3475 = vmatprep.subr.mxu0 0.0
    %3476 = vmatpush1.msra.mxu0 %v2933
    %3477 = vmatprep.subr.mxu0 0.0
    %3478 = vmatpush2.msra.mxu0 0.0
    %3479 = vmatprep.subr.mxu0 0.0
    %3480 = vmatpush2.msra.mxu0 0.0
    %3481 = vmatprep.subr.mxu0 0.0
    %3482 = vmatpush2.msra.mxu0 0.0
    %3483 = vmatprep.subr.mxu0 0.0
    %3484 = vmatpush2.msra.mxu0 0.0
    %3485 = vmatprep.subr.mxu0 0.0
    %3486 = vmatpush2.msra.mxu0 0.0
    %3487 = vmatprep.subr.mxu0 0.0
    %3488 = vmatpush2.msra.mxu0 0.0
    %3489 = vmatprep.subr.mxu0 0.0
    %3490 = vmatpush2.msra.mxu0 0.0
    %3491 = vmatprep.subr.mxu0 0.0
    %3492 = vmatpush2.msra.mxu0 0.0
    %3493 = vmatprep.subr.mxu0 0.0
    %3494 = vmatpush2.msra.mxu0 0.0
    %3495 = vmatprep.subr.mxu0 0.0
    %3496 = vmatpush2.msra.mxu0 0.0
    %3497 = vmatprep.subr.mxu0 0.0
    %3498 = vmatpush2.msra.mxu0 0.0
    %3499 = vmatprep.subr.mxu0 0.0
    %3500 = vmatpush2.msra.mxu0 0.0
    %3501 = vmatprep.subr.mxu0 0.0
    %3502 = vmatpush2.msra.mxu0 0.0
    %3503 = vmatprep.subr.mxu0 0.0
    %3504 = vmatpush2.msra.mxu0 0.0
    %3505 = vmatprep.subr.mxu0 0.0
    %3506 = vmatpush2.msra.mxu0 0.0
    %3507 = vmatprep.subr.mxu0 0.0
    %3508 = vmatpush2.msra.mxu0 0.0
    %3509 = vmatprep.mubr.f32.mxu0 0.0
    %3510 = vmatmul.mubr.f32.gmra.mxu0 %v3443
    %v3511 = vpop.f32.mrf.mxu0
    %v3512 = vadd.f32 0.0, %v3511
    %v3513 = vpop.f32.mrf.mxu0
    %3514 = vdwg.mxu0
    %s3515 = scalar_lea.vmem [#allocation20], 512
    %v3516 = vld [vmem:[%s3515] sm:$0xff]
    %v3517 = vld [vmem:[%s3515 + $0x8] sm:$0xff]
    %v3518 = vld [vmem:[%s3515 + $0x10] sm:$0xff]
    %v3519 = vld [vmem:[%s3515 + $0x18] sm:$0xff]
    %v3520 = vld [vmem:[%s3515 + $0x20] sm:$0xff]
    %v3521 = vld [vmem:[%s3515 + $0x28] sm:$0xff]
    %v3522 = vld [vmem:[%s3515 + $0x30] sm:$0xff]
    %v3523 = vld [vmem:[%s3515 + $0x38] sm:$0xff]
    %v3524 = vld [vmem:[%s3515 + $0x40] sm:$0xff]
    %v3525 = vld [vmem:[%s3515 + $0x48] sm:$0xff]
    %v3526 = vld [vmem:[%s3515 + $0x50] sm:$0xff]
    %v3527 = vld [vmem:[%s3515 + $0x58] sm:$0xff]
    %v3528 = vld [vmem:[%s3515 + $0x60] sm:$0xff]
    %v3529 = vld [vmem:[%s3515 + $0x68] sm:$0xff]
    %v3530 = vld [vmem:[%s3515 + $0x70] sm:$0xff]
    %v3531 = vld [vmem:[%s3515 + $0x78] sm:$0xff]
    %v3532 = vld [vmem:[%s3515 + $0x80] sm:$0xff]
    %v3533 = vld [vmem:[%s3515 + $0x88] sm:$0xff]
    %v3534 = vld [vmem:[%s3515 + $0x90] sm:$0xff]
    %v3535 = vld [vmem:[%s3515 + $0x98] sm:$0xff]
    %v3536 = vld [vmem:[%s3515 + $0xa0] sm:$0xff]
    %v3537 = vld [vmem:[%s3515 + $0xa8] sm:$0xff]
    %v3538 = vld [vmem:[%s3515 + $0xb0] sm:$0xff]
    %v3539 = vld [vmem:[%s3515 + $0xb8] sm:$0xff]
    %v3540 = vld [vmem:[%s3515 + $0xc0] sm:$0xff]
    %v3541 = vld [vmem:[%s3515 + $0xc8] sm:$0xff]
    %v3542 = vld [vmem:[%s3515 + $0xd0] sm:$0xff]
    %v3543 = vld [vmem:[%s3515 + $0xd8] sm:$0xff]
    %v3544 = vld [vmem:[%s3515 + $0xe0] sm:$0xff]
    %v3545 = vld [vmem:[%s3515 + $0xe8] sm:$0xff]
    %v3546 = vld [vmem:[%s3515 + $0xf0] sm:$0xff]
    %v3547 = vld [vmem:[%s3515 + $0xf8] sm:$0xff]
    %v3549 = vsel %vm3149, %v3512, 0
    %3551 = vmatprep.subr.mxu0 0.0
    %3552 = vmatpush1.msra.mxu0 0.0
    %3553 = vmatprep.subr.mxu0 0.0
    %3554 = vmatpush1.msra.mxu0 0.0
    %3555 = vmatprep.subr.mxu0 0.0
    %3556 = vmatpush1.msra.mxu0 0.0
    %3557 = vmatprep.subr.mxu0 0.0
    %3558 = vmatpush1.msra.mxu0 0.0
    %3559 = vmatprep.subr.mxu0 0.0
    %3560 = vmatpush1.msra.mxu0 0.0
    %3561 = vmatprep.subr.mxu0 0.0
    %3562 = vmatpush1.msra.mxu0 0.0
    %3563 = vmatprep.subr.mxu0 0.0
    %3564 = vmatpush1.msra.mxu0 0.0
    %3565 = vmatprep.subr.mxu0 0.0
    %3566 = vmatpush1.msra.mxu0 0.0
    %3567 = vmatprep.subr.mxu0 %v3545
    %3568 = vmatpush1.msra.mxu0 %v3544
    %3569 = vmatprep.subr.mxu0 %v3541
    %3570 = vmatpush1.msra.mxu0 %v3540
    %3571 = vmatprep.subr.mxu0 %v3537
    %3572 = vmatpush1.msra.mxu0 %v3536
    %3573 = vmatprep.subr.mxu0 %v3533
    %3574 = vmatpush1.msra.mxu0 %v3532
    %3575 = vmatprep.subr.mxu0 %v3529
    %3576 = vmatpush1.msra.mxu0 %v3528
    %3577 = vmatprep.subr.mxu0 %v3525
    %3578 = vmatpush1.msra.mxu0 %v3524
    %3579 = vmatprep.subr.mxu0 %v3521
    %3580 = vmatpush1.msra.mxu0 %v3520
    %3581 = vmatprep.subr.mxu0 %v3517
    %3582 = vmatpush1.msra.mxu0 %v3516
    %3583 = vmatprep.subr.mxu0 0.0
    %3584 = vmatpush2.msra.mxu0 0.0
    %3585 = vmatprep.subr.mxu0 0.0
    %3586 = vmatpush2.msra.mxu0 0.0
    %3587 = vmatprep.subr.mxu0 0.0
    %3588 = vmatpush2.msra.mxu0 0.0
    %3589 = vmatprep.subr.mxu0 0.0
    %3590 = vmatpush2.msra.mxu0 0.0
    %3591 = vmatprep.subr.mxu0 0.0
    %3592 = vmatpush2.msra.mxu0 0.0
    %3593 = vmatprep.subr.mxu0 0.0
    %3594 = vmatpush2.msra.mxu0 0.0
    %3595 = vmatprep.subr.mxu0 0.0
    %3596 = vmatpush2.msra.mxu0 0.0
    %3597 = vmatprep.subr.mxu0 0.0
    %3598 = vmatpush2.msra.mxu0 0.0
    %3599 = vmatprep.subr.mxu0 0.0
    %3600 = vmatpush2.msra.mxu0 0.0
    %3601 = vmatprep.subr.mxu0 0.0
    %3602 = vmatpush2.msra.mxu0 0.0
    %3603 = vmatprep.subr.mxu0 0.0
    %3604 = vmatpush2.msra.mxu0 0.0
    %3605 = vmatprep.subr.mxu0 0.0
    %3606 = vmatpush2.msra.mxu0 0.0
    %3607 = vmatprep.subr.mxu0 0.0
    %3608 = vmatpush2.msra.mxu0 0.0
    %3609 = vmatprep.subr.mxu0 0.0
    %3610 = vmatpush2.msra.mxu0 0.0
    %3611 = vmatprep.subr.mxu0 0.0
    %3612 = vmatpush2.msra.mxu0 0.0
    %3613 = vmatprep.subr.mxu0 0.0
    %3614 = vmatpush2.msra.mxu0 0.0
    %3615 = vmatprep.mubr.f32.mxu0 0.0
    %3616 = vmatmul.mubr.f32.gmra.mxu0 %v3549
    %v3617 = vpop.f32.mrf.mxu0
    %v3618 = vadd.f32 0.0, %v3617
    %v3619 = vpop.f32.mrf.mxu0
    %v3620 = vadd.f32 0.0, %v3619
    %3621 = vdwg.mxu0
    %3622 = vmatprep.subr.mxu0 0.0
    %3623 = vmatpush1.msra.mxu0 0.0
    %3624 = vmatprep.subr.mxu0 0.0
    %3625 = vmatpush1.msra.mxu0 0.0
    %3626 = vmatprep.subr.mxu0 0.0
    %3627 = vmatpush1.msra.mxu0 0.0
    %3628 = vmatprep.subr.mxu0 0.0
    %3629 = vmatpush1.msra.mxu0 0.0
    %3630 = vmatprep.subr.mxu0 0.0
    %3631 = vmatpush1.msra.mxu0 0.0
    %3632 = vmatprep.subr.mxu0 0.0
    %3633 = vmatpush1.msra.mxu0 0.0
    %3634 = vmatprep.subr.mxu0 0.0
    %3635 = vmatpush1.msra.mxu0 0.0
    %3636 = vmatprep.subr.mxu0 0.0
    %3637 = vmatpush1.msra.mxu0 0.0
    %3638 = vmatprep.subr.mxu0 %v3547
    %3639 = vmatpush1.msra.mxu0 %v3546
    %3640 = vmatprep.subr.mxu0 %v3543
    %3641 = vmatpush1.msra.mxu0 %v3542
    %3642 = vmatprep.subr.mxu0 %v3539
    %3643 = vmatpush1.msra.mxu0 %v3538
    %3644 = vmatprep.subr.mxu0 %v3535
    %3645 = vmatpush1.msra.mxu0 %v3534
    %3646 = vmatprep.subr.mxu0 %v3531
    %3647 = vmatpush1.msra.mxu0 %v3530
    %3648 = vmatprep.subr.mxu0 %v3527
    %3649 = vmatpush1.msra.mxu0 %v3526
    %3650 = vmatprep.subr.mxu0 %v3523
    %3651 = vmatpush1.msra.mxu0 %v3522
    %3652 = vmatprep.subr.mxu0 %v3519
    %3653 = vmatpush1.msra.mxu0 %v3518
    %3654 = vmatprep.subr.mxu0 0.0
    %3655 = vmatpush2.msra.mxu0 0.0
    %3656 = vmatprep.subr.mxu0 0.0
    %3657 = vmatpush2.msra.mxu0 0.0
    %3658 = vmatprep.subr.mxu0 0.0
    %3659 = vmatpush2.msra.mxu0 0.0
    %3660 = vmatprep.subr.mxu0 0.0
    %3661 = vmatpush2.msra.mxu0 0.0
    %3662 = vmatprep.subr.mxu0 0.0
    %3663 = vmatpush2.msra.mxu0 0.0
    %3664 = vmatprep.subr.mxu0 0.0
    %3665 = vmatpush2.msra.mxu0 0.0
    %3666 = vmatprep.subr.mxu0 0.0
    %3667 = vmatpush2.msra.mxu0 0.0
    %3668 = vmatprep.subr.mxu0 0.0
    %3669 = vmatpush2.msra.mxu0 0.0
    %3670 = vmatprep.subr.mxu0 0.0
    %3671 = vmatpush2.msra.mxu0 0.0
    %3672 = vmatprep.subr.mxu0 0.0
    %3673 = vmatpush2.msra.mxu0 0.0
    %3674 = vmatprep.subr.mxu0 0.0
    %3675 = vmatpush2.msra.mxu0 0.0
    %3676 = vmatprep.subr.mxu0 0.0
    %3677 = vmatpush2.msra.mxu0 0.0
    %3678 = vmatprep.subr.mxu0 0.0
    %3679 = vmatpush2.msra.mxu0 0.0
    %3680 = vmatprep.subr.mxu0 0.0
    %3681 = vmatpush2.msra.mxu0 0.0
    %3682 = vmatprep.subr.mxu0 0.0
    %3683 = vmatpush2.msra.mxu0 0.0
    %3684 = vmatprep.subr.mxu0 0.0
    %3685 = vmatpush2.msra.mxu0 0.0
    %3686 = vmatprep.mubr.f32.mxu0 0.0
    %3687 = vmatmul.mubr.f32.gmra.mxu0 %v3549
    %v3688 = vpop.f32.mrf.mxu0
    %v3689 = vadd.f32 0.0, %v3688
    %v3690 = vpop.f32.mrf.mxu0
    %v3691 = vadd.f32 0.0, %v3690
    %3692 = vdwg.mxu0
    %v3693 = vadd.f32 %v3365, %v3618
    %v3694 = vadd.f32 %v3367, %v3620
    %v3695 = vadd.f32 %v3436, %v3689
    %v3696 = vadd.f32 %v3438, %v3691
    %s3697 = scalar_lea.vmem %s13, 6
    %v3698 = vld [vmem:[%s3697] sm:$0x3]
    %v3700 = vsel %vm2935, %v3698, 0
    %3702 = vmatprep.subr.mxu0 0.0
    %3703 = vmatpush1.msra.mxu0 0.0
    %3704 = vmatprep.subr.mxu0 0.0
    %3705 = vmatpush1.msra.mxu0 0.0
    %3706 = vmatprep.subr.mxu0 0.0
    %3707 = vmatpush1.msra.mxu0 0.0
    %3708 = vmatprep.subr.mxu0 0.0
    %3709 = vmatpush1.msra.mxu0 0.0
    %3710 = vmatprep.subr.mxu0 0.0
    %3711 = vmatpush1.msra.mxu0 0.0
    %3712 = vmatprep.subr.mxu0 0.0
    %3713 = vmatpush1.msra.mxu0 0.0
    %3714 = vmatprep.subr.mxu0 0.0
    %3715 = vmatpush1.msra.mxu0 0.0
    %3716 = vmatprep.subr.mxu0 0.0
    %3717 = vmatpush1.msra.mxu0 0.0
    %3718 = vmatprep.subr.mxu0 0.0
    %3719 = vmatpush1.msra.mxu0 0.0
    %3720 = vmatprep.subr.mxu0 0.0
    %3721 = vmatpush1.msra.mxu0 0.0
    %3722 = vmatprep.subr.mxu0 0.0
    %3723 = vmatpush1.msra.mxu0 0.0
    %3724 = vmatprep.subr.mxu0 0.0
    %3725 = vmatpush1.msra.mxu0 0.0
    %3726 = vmatprep.subr.mxu0 0.0
    %3727 = vmatpush1.msra.mxu0 0.0
    %3728 = vmatprep.subr.mxu0 0.0
    %3729 = vmatpush1.msra.mxu0 0.0
    %3730 = vmatprep.subr.mxu0 0.0
    %3731 = vmatpush1.msra.mxu0 0.0
    %3732 = vmatprep.subr.mxu0 0.0
    %3733 = vmatpush1.msra.mxu0 %v2933
    %3734 = vmatprep.subr.mxu0 0.0
    %3735 = vmatpush2.msra.mxu0 0.0
    %3736 = vmatprep.subr.mxu0 0.0
    %3737 = vmatpush2.msra.mxu0 0.0
    %3738 = vmatprep.subr.mxu0 0.0
    %3739 = vmatpush2.msra.mxu0 0.0
    %3740 = vmatprep.subr.mxu0 0.0
    %3741 = vmatpush2.msra.mxu0 0.0
    %3742 = vmatprep.subr.mxu0 0.0
    %3743 = vmatpush2.msra.mxu0 0.0
    %3744 = vmatprep.subr.mxu0 0.0
    %3745 = vmatpush2.msra.mxu0 0.0
    %3746 = vmatprep.subr.mxu0 0.0
    %3747 = vmatpush2.msra.mxu0 0.0
    %3748 = vmatprep.subr.mxu0 0.0
    %3749 = vmatpush2.msra.mxu0 0.0
    %3750 = vmatprep.subr.mxu0 0.0
    %3751 = vmatpush2.msra.mxu0 0.0
    %3752 = vmatprep.subr.mxu0 0.0
    %3753 = vmatpush2.msra.mxu0 0.0
    %3754 = vmatprep.subr.mxu0 0.0
    %3755 = vmatpush2.msra.mxu0 0.0
    %3756 = vmatprep.subr.mxu0 0.0
    %3757 = vmatpush2.msra.mxu0 0.0
    %3758 = vmatprep.subr.mxu0 0.0
    %3759 = vmatpush2.msra.mxu0 0.0
    %3760 = vmatprep.subr.mxu0 0.0
    %3761 = vmatpush2.msra.mxu0 0.0
    %3762 = vmatprep.subr.mxu0 0.0
    %3763 = vmatpush2.msra.mxu0 0.0
    %3764 = vmatprep.subr.mxu0 0.0
    %3765 = vmatpush2.msra.mxu0 0.0
    %3766 = vmatprep.mubr.f32.mxu0 0.0
    %3767 = vmatmul.mubr.f32.gmra.mxu0 %v3700
    %v3768 = vpop.f32.mrf.mxu0
    %v3769 = vadd.f32 0.0, %v3768
    %v3770 = vpop.f32.mrf.mxu0
    %3771 = vdwg.mxu0
    %s3772 = scalar_lea.vmem [#allocation20], 768
    %v3773 = vld [vmem:[%s3772] sm:$0xff]
    %v3774 = vld [vmem:[%s3772 + $0x8] sm:$0xff]
    %v3775 = vld [vmem:[%s3772 + $0x10] sm:$0xff]
    %v3776 = vld [vmem:[%s3772 + $0x18] sm:$0xff]
    %v3777 = vld [vmem:[%s3772 + $0x20] sm:$0xff]
    %v3778 = vld [vmem:[%s3772 + $0x28] sm:$0xff]
    %v3779 = vld [vmem:[%s3772 + $0x30] sm:$0xff]
    %v3780 = vld [vmem:[%s3772 + $0x38] sm:$0xff]
    %v3781 = vld [vmem:[%s3772 + $0x40] sm:$0xff]
    %v3782 = vld [vmem:[%s3772 + $0x48] sm:$0xff]
    %v3783 = vld [vmem:[%s3772 + $0x50] sm:$0xff]
    %v3784 = vld [vmem:[%s3772 + $0x58] sm:$0xff]
    %v3785 = vld [vmem:[%s3772 + $0x60] sm:$0xff]
    %v3786 = vld [vmem:[%s3772 + $0x68] sm:$0xff]
    %v3787 = vld [vmem:[%s3772 + $0x70] sm:$0xff]
    %v3788 = vld [vmem:[%s3772 + $0x78] sm:$0xff]
    %v3789 = vld [vmem:[%s3772 + $0x80] sm:$0xff]
    %v3790 = vld [vmem:[%s3772 + $0x88] sm:$0xff]
    %v3791 = vld [vmem:[%s3772 + $0x90] sm:$0xff]
    %v3792 = vld [vmem:[%s3772 + $0x98] sm:$0xff]
    %v3793 = vld [vmem:[%s3772 + $0xa0] sm:$0xff]
    %v3794 = vld [vmem:[%s3772 + $0xa8] sm:$0xff]
    %v3795 = vld [vmem:[%s3772 + $0xb0] sm:$0xff]
    %v3796 = vld [vmem:[%s3772 + $0xb8] sm:$0xff]
    %v3797 = vld [vmem:[%s3772 + $0xc0] sm:$0xff]
    %v3798 = vld [vmem:[%s3772 + $0xc8] sm:$0xff]
    %v3799 = vld [vmem:[%s3772 + $0xd0] sm:$0xff]
    %v3800 = vld [vmem:[%s3772 + $0xd8] sm:$0xff]
    %v3801 = vld [vmem:[%s3772 + $0xe0] sm:$0xff]
    %v3802 = vld [vmem:[%s3772 + $0xe8] sm:$0xff]
    %v3803 = vld [vmem:[%s3772 + $0xf0] sm:$0xff]
    %v3804 = vld [vmem:[%s3772 + $0xf8] sm:$0xff]
    %v3806 = vsel %vm3149, %v3769, 0
    %3808 = vmatprep.subr.mxu0 0.0
    %3809 = vmatpush1.msra.mxu0 0.0
    %3810 = vmatprep.subr.mxu0 0.0
    %3811 = vmatpush1.msra.mxu0 0.0
    %3812 = vmatprep.subr.mxu0 0.0
    %3813 = vmatpush1.msra.mxu0 0.0
    %3814 = vmatprep.subr.mxu0 0.0
    %3815 = vmatpush1.msra.mxu0 0.0
    %3816 = vmatprep.subr.mxu0 0.0
    %3817 = vmatpush1.msra.mxu0 0.0
    %3818 = vmatprep.subr.mxu0 0.0
    %3819 = vmatpush1.msra.mxu0 0.0
    %3820 = vmatprep.subr.mxu0 0.0
    %3821 = vmatpush1.msra.mxu0 0.0
    %3822 = vmatprep.subr.mxu0 0.0
    %3823 = vmatpush1.msra.mxu0 0.0
    %3824 = vmatprep.subr.mxu0 %v3802
    %3825 = vmatpush1.msra.mxu0 %v3801
    %3826 = vmatprep.subr.mxu0 %v3798
    %3827 = vmatpush1.msra.mxu0 %v3797
    %3828 = vmatprep.subr.mxu0 %v3794
    %3829 = vmatpush1.msra.mxu0 %v3793
    %3830 = vmatprep.subr.mxu0 %v3790
    %3831 = vmatpush1.msra.mxu0 %v3789
    %3832 = vmatprep.subr.mxu0 %v3786
    %3833 = vmatpush1.msra.mxu0 %v3785
    %3834 = vmatprep.subr.mxu0 %v3782
    %3835 = vmatpush1.msra.mxu0 %v3781
    %3836 = vmatprep.subr.mxu0 %v3778
    %3837 = vmatpush1.msra.mxu0 %v3777
    %3838 = vmatprep.subr.mxu0 %v3774
    %3839 = vmatpush1.msra.mxu0 %v3773
    %3840 = vmatprep.subr.mxu0 0.0
    %3841 = vmatpush2.msra.mxu0 0.0
    %3842 = vmatprep.subr.mxu0 0.0
    %3843 = vmatpush2.msra.mxu0 0.0
    %3844 = vmatprep.subr.mxu0 0.0
    %3845 = vmatpush2.msra.mxu0 0.0
    %3846 = vmatprep.subr.mxu0 0.0
    %3847 = vmatpush2.msra.mxu0 0.0
    %3848 = vmatprep.subr.mxu0 0.0
    %3849 = vmatpush2.msra.mxu0 0.0
    %3850 = vmatprep.subr.mxu0 0.0
    %3851 = vmatpush2.msra.mxu0 0.0
    %3852 = vmatprep.subr.mxu0 0.0
    %3853 = vmatpush2.msra.mxu0 0.0
    %3854 = vmatprep.subr.mxu0 0.0
    %3855 = vmatpush2.msra.mxu0 0.0
    %3856 = vmatprep.subr.mxu0 0.0
    %3857 = vmatpush2.msra.mxu0 0.0
    %3858 = vmatprep.subr.mxu0 0.0
    %3859 = vmatpush2.msra.mxu0 0.0
    %3860 = vmatprep.subr.mxu0 0.0
    %3861 = vmatpush2.msra.mxu0 0.0
    %3862 = vmatprep.subr.mxu0 0.0
    %3863 = vmatpush2.msra.mxu0 0.0
    %3864 = vmatprep.subr.mxu0 0.0
    %3865 = vmatpush2.msra.mxu0 0.0
    %3866 = vmatprep.subr.mxu0 0.0
    %3867 = vmatpush2.msra.mxu0 0.0
    %3868 = vmatprep.subr.mxu0 0.0
    %3869 = vmatpush2.msra.mxu0 0.0
    %3870 = vmatprep.subr.mxu0 0.0
    %3871 = vmatpush2.msra.mxu0 0.0
    %3872 = vmatprep.mubr.f32.mxu0 0.0
    %3873 = vmatmul.mubr.f32.gmra.mxu0 %v3806
    %v3874 = vpop.f32.mrf.mxu0
    %v3875 = vadd.f32 0.0, %v3874
    %v3876 = vpop.f32.mrf.mxu0
    %v3877 = vadd.f32 0.0, %v3876
    %3878 = vdwg.mxu0
    %3879 = vmatprep.subr.mxu0 0.0
    %3880 = vmatpush1.msra.mxu0 0.0
    %3881 = vmatprep.subr.mxu0 0.0
    %3882 = vmatpush1.msra.mxu0 0.0
    %3883 = vmatprep.subr.mxu0 0.0
    %3884 = vmatpush1.msra.mxu0 0.0
    %3885 = vmatprep.subr.mxu0 0.0
    %3886 = vmatpush1.msra.mxu0 0.0
    %3887 = vmatprep.subr.mxu0 0.0
    %3888 = vmatpush1.msra.mxu0 0.0
    %3889 = vmatprep.subr.mxu0 0.0
    %3890 = vmatpush1.msra.mxu0 0.0
    %3891 = vmatprep.subr.mxu0 0.0
    %3892 = vmatpush1.msra.mxu0 0.0
    %3893 = vmatprep.subr.mxu0 0.0
    %3894 = vmatpush1.msra.mxu0 0.0
    %3895 = vmatprep.subr.mxu0 %v3804
    %3896 = vmatpush1.msra.mxu0 %v3803
    %3897 = vmatprep.subr.mxu0 %v3800
    %3898 = vmatpush1.msra.mxu0 %v3799
    %3899 = vmatprep.subr.mxu0 %v3796
    %3900 = vmatpush1.msra.mxu0 %v3795
    %3901 = vmatprep.subr.mxu0 %v3792
    %3902 = vmatpush1.msra.mxu0 %v3791
    %3903 = vmatprep.subr.mxu0 %v3788
    %3904 = vmatpush1.msra.mxu0 %v3787
    %3905 = vmatprep.subr.mxu0 %v3784
    %3906 = vmatpush1.msra.mxu0 %v3783
    %3907 = vmatprep.subr.mxu0 %v3780
    %3908 = vmatpush1.msra.mxu0 %v3779
    %3909 = vmatprep.subr.mxu0 %v3776
    %3910 = vmatpush1.msra.mxu0 %v3775
    %3911 = vmatprep.subr.mxu0 0.0
    %3912 = vmatpush2.msra.mxu0 0.0
    %3913 = vmatprep.subr.mxu0 0.0
    %3914 = vmatpush2.msra.mxu0 0.0
    %3915 = vmatprep.subr.mxu0 0.0
    %3916 = vmatpush2.msra.mxu0 0.0
    %3917 = vmatprep.subr.mxu0 0.0
    %3918 = vmatpush2.msra.mxu0 0.0
    %3919 = vmatprep.subr.mxu0 0.0
    %3920 = vmatpush2.msra.mxu0 0.0
    %3921 = vmatprep.subr.mxu0 0.0
    %3922 = vmatpush2.msra.mxu0 0.0
    %3923 = vmatprep.subr.mxu0 0.0
    %3924 = vmatpush2.msra.mxu0 0.0
    %3925 = vmatprep.subr.mxu0 0.0
    %3926 = vmatpush2.msra.mxu0 0.0
    %3927 = vmatprep.subr.mxu0 0.0
    %3928 = vmatpush2.msra.mxu0 0.0
    %3929 = vmatprep.subr.mxu0 0.0
    %3930 = vmatpush2.msra.mxu0 0.0
    %3931 = vmatprep.subr.mxu0 0.0
    %3932 = vmatpush2.msra.mxu0 0.0
    %3933 = vmatprep.subr.mxu0 0.0
    %3934 = vmatpush2.msra.mxu0 0.0
    %3935 = vmatprep.subr.mxu0 0.0
    %3936 = vmatpush2.msra.mxu0 0.0
    %3937 = vmatprep.subr.mxu0 0.0
    %3938 = vmatpush2.msra.mxu0 0.0
    %3939 = vmatprep.subr.mxu0 0.0
    %3940 = vmatpush2.msra.mxu0 0.0
    %3941 = vmatprep.subr.mxu0 0.0
    %3942 = vmatpush2.msra.mxu0 0.0
    %3943 = vmatprep.mubr.f32.mxu0 0.0
    %3944 = vmatmul.mubr.f32.gmra.mxu0 %v3806
    %v3945 = vpop.f32.mrf.mxu0
    %v3946 = vadd.f32 0.0, %v3945
    %v3947 = vpop.f32.mrf.mxu0
    %v3948 = vadd.f32 0.0, %v3947
    %3949 = vdwg.mxu0
    %v3950 = vadd.f32 %v3693, %v3875
    %v3951 = vadd.f32 %v3694, %v3877
    %v3952 = vadd.f32 %v3695, %v3946
    %v3953 = vadd.f32 %v3696, %v3948
    %v3954 = vld [vmem:[%s15] sm:$0xf]
    %v3956 = vlaneseq
    %v3957 = vshrl.u32 %v3956, 7
    %v3958 = vsub.s32 0, %v3957
    %v3959 = vrot.slane %v3954, %v3958
    %v3960 = vlaneseq
    %v3961 = vshrl.u32 %v3960, 7
    %v3962 = vsub.s32 1, %v3961
    %v3963 = vrot.slane %v3954, %v3962
    %v3964 = vlaneseq
    %v3965 = vshrl.u32 %v3964, 7
    %v3966 = vsub.s32 2, %v3965
    %v3967 = vrot.slane %v3954, %v3966
    %v3968 = vlaneseq
    %v3969 = vshrl.u32 %v3968, 7
    %v3970 = vsub.s32 3, %v3969
    %v3971 = vrot.slane %v3954, %v3970
    %v3976 = vadd.f32 %v3950, %v3959
    %v3977 = vadd.f32 %v3951, %v3963
    %v3978 = vadd.f32 %v3952, %v3967
    %v3979 = vadd.f32 %v3953, %v3971
    %v3980 = vmax.f32 %v3976, 0.0
    %v3981 = vmax.f32 %v3977, 0.0
    %v3982 = vmax.f32 %v3978, 0.0
    %v3983 = vmax.f32 %v3979, 0.0
    %v3984 = vld [vmem:[#allocation22] sm:$0xff]
    %v3985 = vld [vmem:[#allocation22 + $0x8] sm:$0xff]
    %v3986 = vld [vmem:[#allocation22 + $0x10] sm:$0xff]
    %v3987 = vld [vmem:[#allocation22 + $0x18] sm:$0xff]
    %v3988 = vld [vmem:[#allocation22 + $0x20] sm:$0xff]
    %v3989 = vld [vmem:[#allocation22 + $0x28] sm:$0xff]
    %v3990 = vld [vmem:[#allocation22 + $0x30] sm:$0xff]
    %v3991 = vld [vmem:[#allocation22 + $0x38] sm:$0xff]
    %v3992 = vld [vmem:[#allocation22 + $0x40] sm:$0xff]
    %v3993 = vld [vmem:[#allocation22 + $0x48] sm:$0xff]
    %v3994 = vld [vmem:[#allocation22 + $0x50] sm:$0xff]
    %v3995 = vld [vmem:[#allocation22 + $0x58] sm:$0xff]
    %v3996 = vld [vmem:[#allocation22 + $0x60] sm:$0xff]
    %v3997 = vld [vmem:[#allocation22 + $0x68] sm:$0xff]
    %v3998 = vld [vmem:[#allocation22 + $0x70] sm:$0xff]
    %v3999 = vld [vmem:[#allocation22 + $0x78] sm:$0xff]
    %v4000 = vld [vmem:[#allocation22 + $0x80] sm:$0xff]
    %v4001 = vld [vmem:[#allocation22 + $0x88] sm:$0xff]
    %v4002 = vld [vmem:[#allocation22 + $0x90] sm:$0xff]
    %v4003 = vld [vmem:[#allocation22 + $0x98] sm:$0xff]
    %v4004 = vld [vmem:[#allocation22 + $0xa0] sm:$0xff]
    %v4005 = vld [vmem:[#allocation22 + $0xa8] sm:$0xff]
    %v4006 = vld [vmem:[#allocation22 + $0xb0] sm:$0xff]
    %v4007 = vld [vmem:[#allocation22 + $0xb8] sm:$0xff]
    %v4008 = vld [vmem:[#allocation22 + $0xc0] sm:$0xff]
    %v4009 = vld [vmem:[#allocation22 + $0xc8] sm:$0xff]
    %v4010 = vld [vmem:[#allocation22 + $0xd0] sm:$0xff]
    %v4011 = vld [vmem:[#allocation22 + $0xd8] sm:$0xff]
    %v4012 = vld [vmem:[#allocation22 + $0xe0] sm:$0xff]
    %v4013 = vld [vmem:[#allocation22 + $0xe8] sm:$0xff]
    %v4014 = vld [vmem:[#allocation22 + $0xf0] sm:$0xff]
    %v4015 = vld [vmem:[#allocation22 + $0xf8] sm:$0xff]
    %v4016 = vld [vmem:[#allocation22 + $0x100] sm:$0xff]
    %v4017 = vld [vmem:[#allocation22 + $0x108] sm:$0xff]
    %v4018 = vld [vmem:[#allocation22 + $0x110] sm:$0xff]
    %v4019 = vld [vmem:[#allocation22 + $0x118] sm:$0xff]
    %v4020 = vld [vmem:[#allocation22 + $0x120] sm:$0xff]
    %v4021 = vld [vmem:[#allocation22 + $0x128] sm:$0xff]
    %v4022 = vld [vmem:[#allocation22 + $0x130] sm:$0xff]
    %v4023 = vld [vmem:[#allocation22 + $0x138] sm:$0xff]
    %v4024 = vld [vmem:[#allocation22 + $0x140] sm:$0xff]
    %v4025 = vld [vmem:[#allocation22 + $0x148] sm:$0xff]
    %v4026 = vld [vmem:[#allocation22 + $0x150] sm:$0xff]
    %v4027 = vld [vmem:[#allocation22 + $0x158] sm:$0xff]
    %v4028 = vld [vmem:[#allocation22 + $0x160] sm:$0xff]
    %v4029 = vld [vmem:[#allocation22 + $0x168] sm:$0xff]
    %v4030 = vld [vmem:[#allocation22 + $0x170] sm:$0xff]
    %v4031 = vld [vmem:[#allocation22 + $0x178] sm:$0xff]
    %v4032 = vld [vmem:[#allocation22 + $0x180] sm:$0xff]
    %v4033 = vld [vmem:[#allocation22 + $0x188] sm:$0xff]
    %v4034 = vld [vmem:[#allocation22 + $0x190] sm:$0xff]
    %v4035 = vld [vmem:[#allocation22 + $0x198] sm:$0xff]
    %v4036 = vld [vmem:[#allocation22 + $0x1a0] sm:$0xff]
    %v4037 = vld [vmem:[#allocation22 + $0x1a8] sm:$0xff]
    %v4038 = vld [vmem:[#allocation22 + $0x1b0] sm:$0xff]
    %v4039 = vld [vmem:[#allocation22 + $0x1b8] sm:$0xff]
    %v4040 = vld [vmem:[#allocation22 + $0x1c0] sm:$0xff]
    %v4041 = vld [vmem:[#allocation22 + $0x1c8] sm:$0xff]
    %v4042 = vld [vmem:[#allocation22 + $0x1d0] sm:$0xff]
    %v4043 = vld [vmem:[#allocation22 + $0x1d8] sm:$0xff]
    %v4044 = vld [vmem:[#allocation22 + $0x1e0] sm:$0xff]
    %v4045 = vld [vmem:[#allocation22 + $0x1e8] sm:$0xff]
    %v4046 = vld [vmem:[#allocation22 + $0x1f0] sm:$0xff]
    %v4047 = vld [vmem:[#allocation22 + $0x1f8] sm:$0xff]
    %v4048 = vld [vmem:[%s17] sm:$0x1]
    %v4050 = vlaneseq
    %v4051 = vshrl.u32 %v4050, 7
    %v4052 = vsub.s32 0, %v4051
    %v4053 = vrot.slane %v4048, %v4052
    %4055 = vmatprep.subr.mxu0 0.0
    %4056 = vmatpush1.msra.mxu0 %v3999
    %4057 = vmatprep.subr.mxu0 0.0
    %4058 = vmatpush1.msra.mxu0 %v3998
    %4059 = vmatprep.subr.mxu0 0.0
    %4060 = vmatpush1.msra.mxu0 %v3997
    %4061 = vmatprep.subr.mxu0 0.0
    %4062 = vmatpush1.msra.mxu0 %v3996
    %4063 = vmatprep.subr.mxu0 0.0
    %4064 = vmatpush1.msra.mxu0 %v3995
    %4065 = vmatprep.subr.mxu0 0.0
    %4066 = vmatpush1.msra.mxu0 %v3994
    %4067 = vmatprep.subr.mxu0 0.0
    %4068 = vmatpush1.msra.mxu0 %v3993
    %4069 = vmatprep.subr.mxu0 0.0
    %4070 = vmatpush1.msra.mxu0 %v3992
    %4071 = vmatprep.subr.mxu0 0.0
    %4072 = vmatpush1.msra.mxu0 %v3991
    %4073 = vmatprep.subr.mxu0 0.0
    %4074 = vmatpush1.msra.mxu0 %v3990
    %4075 = vmatprep.subr.mxu0 0.0
    %4076 = vmatpush1.msra.mxu0 %v3989
    %4077 = vmatprep.subr.mxu0 0.0
    %4078 = vmatpush1.msra.mxu0 %v3988
    %4079 = vmatprep.subr.mxu0 0.0
    %4080 = vmatpush1.msra.mxu0 %v3987
    %4081 = vmatprep.subr.mxu0 0.0
    %4082 = vmatpush1.msra.mxu0 %v3986
    %4083 = vmatprep.subr.mxu0 0.0
    %4084 = vmatpush1.msra.mxu0 %v3985
    %4085 = vmatprep.subr.mxu0 0.0
    %4086 = vmatpush1.msra.mxu0 %v3984
    %4087 = vmatprep.subr.mxu0 0.0
    %4088 = vmatpush2.msra.mxu0 %v4015
    %4089 = vmatprep.subr.mxu0 0.0
    %4090 = vmatpush2.msra.mxu0 %v4014
    %4091 = vmatprep.subr.mxu0 0.0
    %4092 = vmatpush2.msra.mxu0 %v4013
    %4093 = vmatprep.subr.mxu0 0.0
    %4094 = vmatpush2.msra.mxu0 %v4012
    %4095 = vmatprep.subr.mxu0 0.0
    %4096 = vmatpush2.msra.mxu0 %v4011
    %4097 = vmatprep.subr.mxu0 0.0
    %4098 = vmatpush2.msra.mxu0 %v4010
    %4099 = vmatprep.subr.mxu0 0.0
    %4100 = vmatpush2.msra.mxu0 %v4009
    %4101 = vmatprep.subr.mxu0 0.0
    %4102 = vmatpush2.msra.mxu0 %v4008
    %4103 = vmatprep.subr.mxu0 0.0
    %4104 = vmatpush2.msra.mxu0 %v4007
    %4105 = vmatprep.subr.mxu0 0.0
    %4106 = vmatpush2.msra.mxu0 %v4006
    %4107 = vmatprep.subr.mxu0 0.0
    %4108 = vmatpush2.msra.mxu0 %v4005
    %4109 = vmatprep.subr.mxu0 0.0
    %4110 = vmatpush2.msra.mxu0 %v4004
    %4111 = vmatprep.subr.mxu0 0.0
    %4112 = vmatpush2.msra.mxu0 %v4003
    %4113 = vmatprep.subr.mxu0 0.0
    %4114 = vmatpush2.msra.mxu0 %v4002
    %4115 = vmatprep.subr.mxu0 0.0
    %4116 = vmatpush2.msra.mxu0 %v4001
    %4117 = vmatprep.subr.mxu0 0.0
    %4118 = vmatpush2.msra.mxu0 %v4000
    %4119 = vmatprep.mubr.f32.mxu0 %v3981
    %4120 = vmatmul.mubr.f32.gmra.mxu0 %v3980
    %v4121 = vpop.f32.mrf.mxu0
    %v4122 = vadd.f32 %v4053, %v4121
    %v4123 = vpop.f32.mrf.mxu0
    %4124 = vdwg.mxu0
    %4125 = vmatprep.subr.mxu0 0.0
    %4126 = vmatpush1.msra.mxu0 %v4031
    %4127 = vmatprep.subr.mxu0 0.0
    %4128 = vmatpush1.msra.mxu0 %v4030
    %4129 = vmatprep.subr.mxu0 0.0
    %4130 = vmatpush1.msra.mxu0 %v4029
    %4131 = vmatprep.subr.mxu0 0.0
    %4132 = vmatpush1.msra.mxu0 %v4028
    %4133 = vmatprep.subr.mxu0 0.0
    %4134 = vmatpush1.msra.mxu0 %v4027
    %4135 = vmatprep.subr.mxu0 0.0
    %4136 = vmatpush1.msra.mxu0 %v4026
    %4137 = vmatprep.subr.mxu0 0.0
    %4138 = vmatpush1.msra.mxu0 %v4025
    %4139 = vmatprep.subr.mxu0 0.0
    %4140 = vmatpush1.msra.mxu0 %v4024
    %4141 = vmatprep.subr.mxu0 0.0
    %4142 = vmatpush1.msra.mxu0 %v4023
    %4143 = vmatprep.subr.mxu0 0.0
    %4144 = vmatpush1.msra.mxu0 %v4022
    %4145 = vmatprep.subr.mxu0 0.0
    %4146 = vmatpush1.msra.mxu0 %v4021
    %4147 = vmatprep.subr.mxu0 0.0
    %4148 = vmatpush1.msra.mxu0 %v4020
    %4149 = vmatprep.subr.mxu0 0.0
    %4150 = vmatpush1.msra.mxu0 %v4019
    %4151 = vmatprep.subr.mxu0 0.0
    %4152 = vmatpush1.msra.mxu0 %v4018
    %4153 = vmatprep.subr.mxu0 0.0
    %4154 = vmatpush1.msra.mxu0 %v4017
    %4155 = vmatprep.subr.mxu0 0.0
    %4156 = vmatpush1.msra.mxu0 %v4016
    %4157 = vmatprep.subr.mxu0 0.0
    %4158 = vmatpush2.msra.mxu0 %v4047
    %4159 = vmatprep.subr.mxu0 0.0
    %4160 = vmatpush2.msra.mxu0 %v4046
    %4161 = vmatprep.subr.mxu0 0.0
    %4162 = vmatpush2.msra.mxu0 %v4045
    %4163 = vmatprep.subr.mxu0 0.0
    %4164 = vmatpush2.msra.mxu0 %v4044
    %4165 = vmatprep.subr.mxu0 0.0
    %4166 = vmatpush2.msra.mxu0 %v4043
    %4167 = vmatprep.subr.mxu0 0.0
    %4168 = vmatpush2.msra.mxu0 %v4042
    %4169 = vmatprep.subr.mxu0 0.0
    %4170 = vmatpush2.msra.mxu0 %v4041
    %4171 = vmatprep.subr.mxu0 0.0
    %4172 = vmatpush2.msra.mxu0 %v4040
    %4173 = vmatprep.subr.mxu0 0.0
    %4174 = vmatpush2.msra.mxu0 %v4039
    %4175 = vmatprep.subr.mxu0 0.0
    %4176 = vmatpush2.msra.mxu0 %v4038
    %4177 = vmatprep.subr.mxu0 0.0
    %4178 = vmatpush2.msra.mxu0 %v4037
    %4179 = vmatprep.subr.mxu0 0.0
    %4180 = vmatpush2.msra.mxu0 %v4036
    %4181 = vmatprep.subr.mxu0 0.0
    %4182 = vmatpush2.msra.mxu0 %v4035
    %4183 = vmatprep.subr.mxu0 0.0
    %4184 = vmatpush2.msra.mxu0 %v4034
    %4185 = vmatprep.subr.mxu0 0.0
    %4186 = vmatpush2.msra.mxu0 %v4033
    %4187 = vmatprep.subr.mxu0 0.0
    %4188 = vmatpush2.msra.mxu0 %v4032
    %4189 = vmatprep.mubr.f32.mxu0 %v3983
    %4190 = vmatmul.mubr.f32.gmra.mxu0 %v3982
    %v4191 = vpop.f32.mrf.mxu0
    %v4192 = vadd.f32 %v4122, %v4191
    %v4193 = vpop.f32.mrf.mxu0
    %4194 = vdwg.mxu0
    %4195 = vst [vmem:[#allocation23] sm:$0x3] %v4192
    // Predicated region
    $region126: #{network_forward.1} parent=1 // pred_check
      _
    $region127: #{network_forward.1} parent=1 // pred_check_branch
      %4197 = sbr.rel (0) target = $region129
    $region128: #{network_forward.1} parent=1 // pred_region
      %s4199 = ssub.s32 32, 32
      %4200 = vsyncadd [#allocation4], %s4199
      %s4202 = sshll.u32 [#allocation23], 4
      %s4203 = int_to_ptr.vmem [resolvable:$true] %s4202
      %4205 = dma.vmem_to_hbm [thread:$0]  %s4203, 32, %s18, [#allocation4]
    $region129: #{network_forward.1} parent=1 // pred_fallthru
      _
    // Predicated region
    $region130: #{network_forward.1} parent=1 // pred_check
      _
    $region131: #{network_forward.1} parent=1 // pred_check_branch
      %4207 = sbr.rel (0) target = $region133
    $region132: #{network_forward.1} parent=1 // pred_region
      %4208 = dma.done [#allocation4], 32
    $region133: #{network_forward.1} parent=1 // pred_fallthru
      _
    %4209 = vsyncpa [#allocation3], 1
    %4210 = vsyncpa [#allocation6], 1
    %4211 = vsyncpa [#allocation9], 1
    %4212 = vsyncpa [#allocation12], 1
    %4213 = vsyncpa [#allocation15], 1
    %4214 = vsyncpa [#allocation18], 1
    %4215 = vsyncpa [#allocation21], 1
    %4216 = vsyncpa [#allocation4], 1

</llo_original>
